<compile_context>
chip_gen: v5e
topology: v5e:2x2
jax: 0.10.0
libtpu: 0.0.40
codegen_flags: <defaults>
</compile_context>

<pallas_src>
import math

import jax
import jax.numpy as jnp
from jax import lax
from jax.experimental import pallas as pl
from jax.experimental.pallas import tpu as pltpu

# MXU operand dtype: bf16 is MXU-native on every TPU generation; accumulation
# stays f32 via preferred_element_type.  Flip to jnp.float32 for bit-tighter
# parity with the reference at the cost of multi-pass f32 matmuls.
MXU_DTYPE = jnp.bfloat16


def _mm(a, b):
    return jnp.dot(a.astype(MXU_DTYPE), b.astype(MXU_DTYPE),
                   preferred_element_type=jnp.float32)


def _ceil_to(x, m):
    return -(-x // m) * m


# ----------------------------------------------------------------------------
# Parameter construction (deterministic, PyTorch-Linear-like uniform init)
# ----------------------------------------------------------------------------
def init_mlp(key, in_dim, widths, layernorm):
    dims = [in_dim] + list(widths)
    Ws, bs = [], []
    for i in range(len(dims) - 1):
        key, kw, kb = jax.random.split(key, 3)
        bound = 1.0 / math.sqrt(dims[i])
        Ws.append(jax.random.uniform(kw, (dims[i], dims[i + 1]), jnp.float32,
                                     -bound, bound))
        bs.append(jax.random.uniform(kb, (1, dims[i + 1]), jnp.float32,
                                     -bound, bound))
    mlp = {"Ws": Ws, "bs": bs, "layernorm": layernorm}
    if layernorm:
        mlp["gamma"] = jnp.ones((1, dims[-1]), jnp.float32)
        mlp["beta"] = jnp.zeros((1, dims[-1]), jnp.float32)
    return mlp, key


def init_graphnet(key, cfg):
    latent = cfg["latent_size"]
    nlayers = cfg["num_mlp_layers"]
    enc_widths = [latent] * nlayers + [latent]
    blk_widths = [latent] * nlayers + [latent]
    dec_widths = [latent] * nlayers + [cfg["output_dim"]]

    params = {}
    params["enc_node"], key = init_mlp(key, cfg["node_input_dim"], enc_widths, True)
    params["enc_edge"] = []
    for d in cfg["edge_input_dims"]:
        m, key = init_mlp(key, d, enc_widths, True)
        params["enc_edge"].append(m)

    params["blocks"] = []
    for _ in range(cfg["num_mp_steps"]):
        node_in = latent + cfg["num_edge_sets"] * latent
        edge_in = 2 * latent + latent
        node_mlp, key = init_mlp(key, node_in, blk_widths, True)
        edge_mlps = []
        for _ in range(cfg["num_edge_sets"]):
            m, key = init_mlp(key, edge_in, blk_widths, True)
            edge_mlps.append(m)
        params["blocks"].append({"node": node_mlp, "edge": edge_mlps})

    params["dec"], key = init_mlp(key, latent, dec_widths, False)
    return params, key


# ----------------------------------------------------------------------------
# Slab builder: packs weights / vectors into lane-dense VMEM slabs and returns
# static-slice metadata (row, rows, cols) consumed by the kernel closure.
# ----------------------------------------------------------------------------
class _SlabBuilder:
    def __init__(self, lanes):
        self.lanes = lanes
        self._w_parts, self._w_rows = [], 0
        self._v_parts, self._v_rows = [], 0

    def add_w(self, w):
        in_d, out_d = w.shape
        rows = _ceil_to(in_d, 8)
        blk = jnp.zeros((rows, self.lanes), jnp.float32).at[:in_d, :out_d].set(w)
        meta = (self._w_rows, rows, out_d)
        self._w_parts.append(blk)
        self._w_rows += rows
        return meta

    def add_v(self, v):
        v = jnp.reshape(v, (-1,))
        d = v.shape[0]
        row = jnp.zeros((1, self.lanes), jnp.float32).at[0, :d].set(v)
        meta = (self._v_rows, d)
        self._v_parts.append(row)
        self._v_rows += 1
        return meta

    def finalize(self):
        w_slab = jnp.concatenate(self._w_parts, axis=0).astype(MXU_DTYPE)
        v_slab = jnp.concatenate(self._v_parts, axis=0)
        pad = _ceil_to(v_slab.shape[0], 8) - v_slab.shape[0]
        if pad:
            v_slab = jnp.concatenate(
                [v_slab, jnp.zeros((pad, self.lanes), jnp.float32)], axis=0)
        return w_slab, v_slab


# ----------------------------------------------------------------------------
# Full model forward: one fused Pallas kernel.
# ----------------------------------------------------------------------------
def graphnet_forward(params, node_feats, edges):
    """edges: list of (features [E,D], senders [E], receivers [E])."""
    num_nodes = node_feats.shape[0]
    K = len(edges)
    L = params["enc_node"]["Ws"][-1].shape[1]          # latent size
    out_dim = params["dec"]["Ws"][-1].shape[1]

    lanes = _ceil_to(max(128, 2 * K * L, out_dim), 128)
    sb = _SlabBuilder(lanes)

    def plan_mlp(mlp):
        return {
            "Ws": [sb.add_w(w) for w in mlp["Ws"]],
            "bs": [sb.add_v(b) for b in mlp["bs"]],
            "ln": ((sb.add_v(mlp["gamma"]), sb.add_v(mlp["beta"]))
                   if mlp["layernorm"] else None),
        }

    enc_node_plan = plan_mlp(params["enc_node"])
    enc_edge_plans = [plan_mlp(m) for m in params["enc_edge"]]

    block_plans = []
    for bp in params["blocks"]:
        # Pack send/recv row-slices of every edge MLP's first layer into one
        # lane-dense RHS: a single nf @ W_pack yields every partial.
        w_sr = jnp.concatenate(
            [jnp.concatenate([m["Ws"][0][0:L], m["Ws"][0][L:2 * L]], axis=1)
             for m in bp["edge"]], axis=1)                       # [L, 2K*L]
        w_sr_meta = sb.add_w(w_sr)

        eplans = []
        for m in bp["edge"]:
            eplans.append({
                "w_ef": sb.add_w(m["Ws"][0][2 * L:3 * L]),       # [L, L]
                "Ws": [sb.add_w(w) for w in m["Ws"][1:]],
                "bs": [sb.add_v(b) for b in m["bs"]],
                "ln": (sb.add_v(m["gamma"]), sb.add_v(m["beta"])),
            })

        nm = bp["node"]
        wn1 = nm["Ws"][0]                                        # [(1+K)L, L]
        nplan = {
            "w_node": sb.add_w(wn1[0:L]),
            "w_seg": [sb.add_w(wn1[(1 + i) * L:(2 + i) * L]) for i in range(K)],
            "Ws": [sb.add_w(w) for w in nm["Ws"][1:]],
            "bs": [sb.add_v(b) for b in nm["bs"]],
            "ln": (sb.add_v(nm["gamma"]), sb.add_v(nm["beta"])),
        }
        block_plans.append({"w_sr": w_sr_meta, "edges": eplans, "node": nplan})

    dec_plan = plan_mlp(params["dec"])
    w_slab, v_slab = sb.finalize()

    # Graph connectivity as dense bf16 operators, built once in the wrapper.
    # G_i fuses the sender+receiver gather; rt_all is the pre-transposed
    # scatter-add operator over the concatenated edge axis (no in-kernel
    # transposes).  Out-of-range indices -> zero row (dropped edge).
    node_iota = jnp.arange(num_nodes, dtype=jnp.int32)[None, :]
    ef_in, gather_ops, rt_cols = [], [], []
    for feats, senders, receivers in edges:
        s1h = (senders.astype(jnp.int32)[:, None] == node_iota).astype(MXU_DTYPE)
        r1h = (receivers.astype(jnp.int32)[:, None] == node_iota).astype(MXU_DTYPE)
        gather_ops.append(jnp.concatenate([s1h, r1h], axis=1))   # [E, 2N]
        rt_cols.append(r1h.T)                                    # [N, E]
        d = feats.shape[1]
        pad = _ceil_to(d, 8) - d
        ef_in.append(jnp.pad(feats, ((0, 0), (0, pad))) if pad else feats)
    rt_all = jnp.concatenate(rt_cols, axis=1)                    # [N, E_tot]

    d = node_feats.shape[1]
    pad = _ceil_to(d, 8) - d
    nf_in = jnp.pad(node_feats, ((0, 0), (0, pad))) if pad else node_feats

    inputs = [nf_in] + ef_in + gather_ops + [rt_all, w_slab, v_slab]

    def kernel(*refs):
        nf_ref = refs[0]
        ef_refs = refs[1:1 + K]
        g_refs = refs[1 + K:1 + 2 * K]
        rt_ref = refs[1 + 2 * K]
        w_ref = refs[2 + 2 * K]
        v_ref = refs[3 + 2 * K]
        out_ref = refs[4 + 2 * K]

        def W(meta):                      # static slice of the weight slab
            row, rows, cols = meta
            return w_ref[row:row + rows, 0:cols]

        def V(meta):                      # static slice of the bias/LN slab
            row, d_ = meta
            return v_ref[row:row + 1, 0:d_]

        def mlp_tail(h, w_metas, b_metas, ln):
            # `h` is the (bias-included) output of linear layer 0.
            for wm, bm in zip(w_metas, b_metas):
                h = jnp.maximum(h, 0.0)
                h = _mm(h, W(wm)) + V(bm)
            if ln is not None:
                mean = jnp.mean(h, axis=-1, keepdims=True)
                var = jnp.mean(jnp.square(h - mean), axis=-1, keepdims=True)
                h = (h - mean) * lax.rsqrt(var + 1e-5) * V(ln[0]) + V(ln[1])
            return h

        def mlp_full(x, p):
            h = _mm(x, W(p["Ws"][0])) + V(p["bs"][0])
            return mlp_tail(h, p["Ws"][1:], p["bs"][1:], p["ln"])

        # ------------------------------ encoder -----------------------------
        nf = mlp_full(nf_ref[...], enc_node_plan)
        efs = [mlp_full(ef_refs[i][...], enc_edge_plans[i]) for i in range(K)]
        G = [g_refs[i][...] for i in range(K)]
        rt = rt_ref[...]

        # ----------------------- message-passing blocks ---------------------
        for bplan in block_plans:
            # All sender/receiver partials via one lane-dense matmul [N, 2K*L].
            partials = _mm(nf, W(bplan["w_sr"]))

            new_efs = []
            for i in range(K):
                ep = bplan["edges"][i]
                stacked = jnp.concatenate(                       # [2N, L]
                    [partials[:, 2 * i * L:(2 * i + 1) * L],
                     partials[:, (2 * i + 1) * L:(2 * i + 2) * L]], axis=0)
                h = (_mm(G[i], stacked)                          # fused gather
                     + _mm(efs[i], W(ep["w_ef"])) + V(ep["bs"][0]))
                new_efs.append(mlp_tail(h, ep["Ws"], ep["bs"][1:], ep["ln"]))

            # Node update: project per-edge messages, then ONE deep scatter-add
            # contraction over the concatenated edge axis.
            npn = bplan["node"]
            msgs = jnp.concatenate(                              # [E_tot, L]
                [_mm(new_efs[i], W(npn["w_seg"][i])) for i in range(K)], axis=0)
            h = _mm(nf, W(npn["w_node"])) + V(npn["bs"][0]) + _mm(rt, msgs)
            new_nf = mlp_tail(h, npn["Ws"], npn["bs"][1:], npn["ln"])

            # Residuals (edge residual after the node update, as in the ref).
            efs = [new_efs[i] + efs[i] for i in range(K)]
            nf = new_nf + nf

        # ------------------------------ decoder -----------------------------
        out_ref[...] = mlp_full(nf, dec_plan).astype(out_ref.dtype)

    vmem = pltpu.MemorySpace.VMEM
    return pl.pallas_call(
        kernel,
        out_shape=jax.ShapeDtypeStruct((num_nodes, out_dim), jnp.float32),
        in_specs=[pl.BlockSpec(memory_space=vmem) for _ in inputs],
        out_specs=pl.BlockSpec(memory_space=vmem),
    )(*inputs)


# ----------------------------------------------------------------------------
# Pure-JAX reference (sanity check only)
# ----------------------------------------------------------------------------
def _mlp_ref(x, mlp):
    h = x
    n = len(mlp["Ws"])
    for i, (w, b) in enumerate(zip(mlp["Ws"], mlp["bs"])):
        h = jnp.dot(h, w, precision=lax.Precision.HIGHEST) + b
        if i < n - 1:
            h = jnp.maximum(h, 0.0)
    if mlp["layernorm"]:
        mean = h.mean(-1, keepdims=True)
        var = jnp.square(h - mean).mean(-1, keepdims=True)
        h = (h - mean) * lax.rsqrt(var + 1e-5) * mlp["gamma"] + mlp["beta"]
    return h


def graphnet_reference(params, node_feats, edges):
    num_nodes = node_feats.shape[0]
    senders = [e[1] for e in edges]
    receivers = [e[2] for e in edges]
    nf = _mlp_ref(node_feats, params["enc_node"])
    efs = [_mlp_ref(edges[i][0], params["enc_edge"][i]) for i in range(len(edges))]
    for bp in params["blocks"]:
        new_efs = []
        for i in range(len(efs)):
            e_in = jnp.concatenate([nf[senders[i]], nf[receivers[i]], efs[i]], -1)
            new_efs.append(_mlp_ref(e_in, bp["edge"][i]))
        segs = [jnp.zeros((num_nodes, new_efs[i].shape[1]), jnp.float32)
                .at[receivers[i]].add(new_efs[i]) for i in range(len(efs))]
        n_in = jnp.concatenate([nf] + segs, -1)
        new_nf = _mlp_ref(n_in, bp["node"])
        efs = [new_efs[i] + efs[i] for i in range(len(efs))]
        nf = new_nf + nf
    return _mlp_ref(nf, params["dec"])


# ----------------------------------------------------------------------------
if __name__ == "__main__":
    cfg = dict(
        node_input_dim=7,
        edge_input_dims=[4, 3],
        output_dim=3,
        latent_size=32,
        num_edge_sets=2,
        num_mlp_layers=2,
        num_mp_steps=2,
    )

    key = jax.random.PRNGKey(0)
    params, key = init_graphnet(key, cfg)

    num_nodes, num_e1, num_e2 = 48, 96, 80
    key, k1, k2, k3, k4, k5, k6, k7 = jax.random.split(key, 8)
    node_feats = jax.random.normal(k1, (num_nodes, cfg["node_input_dim"]), jnp.float32)
    e1 = jax.random.normal(k2, (num_e1, cfg["edge_input_dims"][0]), jnp.float32)
    s1 = jax.random.randint(k3, (num_e1,), 0, num_nodes, jnp.int32)
    r1 = jax.random.randint(k4, (num_e1,), 0, num_nodes, jnp.int32)
    e2 = jax.random.normal(k5, (num_e2, cfg["edge_input_dims"][1]), jnp.float32)
    s2 = jax.random.randint(k6, (num_e2,), 0, num_nodes, jnp.int32)
    r2 = jax.random.randint(k7, (num_e2,), 0, num_nodes, jnp.int32)
    edges = [(e1, s1, r1), (e2, s2, r2)]

    # Validate indices (one-hot gather silently drops out-of-range indices).
    for _, s, r in edges:
        assert 0 <= int(s.min()) and int(s.max()) < num_nodes
        assert 0 <= int(r.min()) and int(r.max()) < num_nodes

    # Params are closed over (slabs constant-fold at compile time); graph data
    # is the jit argument.
    fwd = jax.jit(lambda nf, ed: graphnet_forward(params, nf, ed))
    out = jax.block_until_ready(fwd(node_feats, edges))
    assert out.shape == (num_nodes, cfg["output_dim"])

    ref = graphnet_reference(params, node_feats, edges)
    if not bool(jnp.allclose(out, ref, atol=5e-2, rtol=5e-2)):
        raise RuntimeError("Pallas output does not match JAX reference")

    print("KERNEL_OK")
</pallas_src>

<mosaic_0001>
module attributes {stable_mosaic.version = 11 : i64} {
  func.func @kernel(%arg0: memref<48x8xf32, #tpu.memory_space<vmem>>, %arg1: memref<96x8xf32, #tpu.memory_space<vmem>>, %arg2: memref<80x8xf32, #tpu.memory_space<vmem>>, %arg3: memref<96x96xbf16, #tpu.memory_space<vmem>>, %arg4: memref<80x96xbf16, #tpu.memory_space<vmem>>, %arg5: memref<48x176xbf16, #tpu.memory_space<vmem>>, %arg6: memref<1080x128xbf16, #tpu.memory_space<vmem>>, %arg7: memref<48x128xf32, #tpu.memory_space<vmem>>, %arg8: memref<48x3xf32, #tpu.memory_space<vmem>>) attributes {dimension_semantics = [], scalar_prefetch = 0 : i64, scratch_operands = 0 : i64, tpu.core_type = #tpu.core_type<tc>} {
    %c0 = arith.constant 0 : index
    %c0_0 = arith.constant 0 : index
    %0 = vector.load %arg0[%c0, %c0_0] : memref<48x8xf32, #tpu.memory_space<vmem>>, vector<48x8xf32>
    %c0_1 = arith.constant 0 : index
    %c0_2 = arith.constant 0 : index
    %1 = vector.load %arg6[%c0_1, %c0_2] : memref<1080x128xbf16, #tpu.memory_space<vmem>>, vector<8x32xbf16>
    %2 = arith.truncf %0 : vector<48x8xf32> to vector<48x8xbf16>
    %cst = arith.constant dense<0.000000e+00> : vector<48x32xf32>
    %3 = tpu.matmul %2, %1, %cst {dimension_numbers = #tpu.dot_dimension_numbers<[1], [0], [0], [1], [0, 0, 1, 1], [], []>} : vector<48x8xbf16>, vector<8x32xbf16>, vector<48x32xf32> -> vector<48x32xf32>
    %c0_3 = arith.constant 0 : index
    %c0_4 = arith.constant 0 : index
    %4 = vector.load %arg7[%c0_3, %c0_4] : memref<48x128xf32, #tpu.memory_space<vmem>>, vector<1x32xf32>
    %5 = vector.broadcast %4 : vector<1x32xf32> to vector<48x32xf32>
    %6 = arith.addf %3, %5 : vector<48x32xf32>
    %cst_5 = arith.constant 0.000000e+00 : f32
    %7 = vector.broadcast %cst_5 : f32 to vector<48x32xf32>
    %8 = arith.maximumf %6, %7 : vector<48x32xf32>
    %c8 = arith.constant 8 : index
    %c0_6 = arith.constant 0 : index
    %9 = vector.load %arg6[%c8, %c0_6] : memref<1080x128xbf16, #tpu.memory_space<vmem>>, vector<32x32xbf16>
    %10 = arith.truncf %8 : vector<48x32xf32> to vector<48x32xbf16>
    %cst_7 = arith.constant dense<0.000000e+00> : vector<48x32xf32>
    %11 = tpu.matmul %10, %9, %cst_7 {dimension_numbers = #tpu.dot_dimension_numbers<[1], [0], [0], [1], [0, 0, 1, 1], [], []>} : vector<48x32xbf16>, vector<32x32xbf16>, vector<48x32xf32> -> vector<48x32xf32>
    %c1 = arith.constant 1 : index
    %c0_8 = arith.constant 0 : index
    %12 = vector.load %arg7[%c1, %c0_8] : memref<48x128xf32, #tpu.memory_space<vmem>>, vector<1x32xf32>
    %13 = vector.broadcast %12 : vector<1x32xf32> to vector<48x32xf32>
    %14 = arith.addf %11, %13 : vector<48x32xf32>
    %cst_9 = arith.constant 0.000000e+00 : f32
    %15 = vector.broadcast %cst_9 : f32 to vector<48x32xf32>
    %16 = arith.maximumf %14, %15 : vector<48x32xf32>
    %c40 = arith.constant 40 : index
    %c0_10 = arith.constant 0 : index
    %17 = vector.load %arg6[%c40, %c0_10] : memref<1080x128xbf16, #tpu.memory_space<vmem>>, vector<32x32xbf16>
    %18 = arith.truncf %16 : vector<48x32xf32> to vector<48x32xbf16>
    %cst_11 = arith.constant dense<0.000000e+00> : vector<48x32xf32>
    %19 = tpu.matmul %18, %17, %cst_11 {dimension_numbers = #tpu.dot_dimension_numbers<[1], [0], [0], [1], [0, 0, 1, 1], [], []>} : vector<48x32xbf16>, vector<32x32xbf16>, vector<48x32xf32> -> vector<48x32xf32>
    %c2 = arith.constant 2 : index
    %c0_12 = arith.constant 0 : index
    %20 = vector.load %arg7[%c2, %c0_12] : memref<48x128xf32, #tpu.memory_space<vmem>>, vector<1x32xf32>
    %21 = vector.broadcast %20 : vector<1x32xf32> to vector<48x32xf32>
    %22 = arith.addf %19, %21 : vector<48x32xf32>
    %cst_13 = arith.constant dense<0.000000e+00> : vector<48xf32>
    %23 = vector.multi_reduction <add>, %22, %cst_13 [1] : vector<48x32xf32> to vector<48xf32>
    %24 = vector.shape_cast %23 : vector<48xf32> to vector<48x1xf32>
    %cst_14 = arith.constant 3.200000e+01 : f32
    %25 = vector.broadcast %cst_14 : f32 to vector<48x1xf32>
    %26 = arith.divf %24, %25 : vector<48x1xf32>
    %27 = vector.broadcast %26 : vector<48x1xf32> to vector<48x32xf32>
    %28 = arith.subf %22, %27 : vector<48x32xf32>
    %29 = arith.mulf %28, %28 : vector<48x32xf32>
    %cst_15 = arith.constant dense<0.000000e+00> : vector<48xf32>
    %30 = vector.multi_reduction <add>, %29, %cst_15 [1] : vector<48x32xf32> to vector<48xf32>
    %31 = vector.shape_cast %30 : vector<48xf32> to vector<48x1xf32>
    %cst_16 = arith.constant 3.200000e+01 : f32
    %32 = vector.broadcast %cst_16 : f32 to vector<48x1xf32>
    %33 = arith.divf %31, %32 : vector<48x1xf32>
    %34 = vector.broadcast %26 : vector<48x1xf32> to vector<48x32xf32>
    %35 = arith.subf %22, %34 : vector<48x32xf32>
    %cst_17 = arith.constant 9.99999974E-6 : f32
    %36 = vector.broadcast %cst_17 : f32 to vector<48x1xf32>
    %37 = arith.addf %33, %36 : vector<48x1xf32>
    %38 = math.rsqrt %37 : vector<48x1xf32>
    %39 = vector.broadcast %38 : vector<48x1xf32> to vector<48x32xf32>
    %40 = arith.mulf %35, %39 : vector<48x32xf32>
    %c3 = arith.constant 3 : index
    %c0_18 = arith.constant 0 : index
    %41 = vector.load %arg7[%c3, %c0_18] : memref<48x128xf32, #tpu.memory_space<vmem>>, vector<1x32xf32>
    %42 = vector.broadcast %41 : vector<1x32xf32> to vector<48x32xf32>
    %43 = arith.mulf %40, %42 : vector<48x32xf32>
    %c4 = arith.constant 4 : index
    %c0_19 = arith.constant 0 : index
    %44 = vector.load %arg7[%c4, %c0_19] : memref<48x128xf32, #tpu.memory_space<vmem>>, vector<1x32xf32>
    %45 = vector.broadcast %44 : vector<1x32xf32> to vector<48x32xf32>
    %46 = arith.addf %43, %45 : vector<48x32xf32>
    %c0_20 = arith.constant 0 : index
    %c0_21 = arith.constant 0 : index
    %47 = vector.load %arg1[%c0_20, %c0_21] : memref<96x8xf32, #tpu.memory_space<vmem>>, vector<96x8xf32>
    %c72 = arith.constant 72 : index
    %c0_22 = arith.constant 0 : index
    %48 = vector.load %arg6[%c72, %c0_22] : memref<1080x128xbf16, #tpu.memory_space<vmem>>, vector<8x32xbf16>
    %49 = arith.truncf %47 : vector<96x8xf32> to vector<96x8xbf16>
    %cst_23 = arith.constant dense<0.000000e+00> : vector<96x32xf32>
    %50 = tpu.matmul %49, %48, %cst_23 {dimension_numbers = #tpu.dot_dimension_numbers<[1], [0], [0], [1], [0, 0, 1, 1], [], []>} : vector<96x8xbf16>, vector<8x32xbf16>, vector<96x32xf32> -> vector<96x32xf32>
    %c5 = arith.constant 5 : index
    %c0_24 = arith.constant 0 : index
    %51 = vector.load %arg7[%c5, %c0_24] : memref<48x128xf32, #tpu.memory_space<vmem>>, vector<1x32xf32>
    %52 = vector.broadcast %51 : vector<1x32xf32> to vector<96x32xf32>
    %53 = arith.addf %50, %52 : vector<96x32xf32>
    %cst_25 = arith.constant 0.000000e+00 : f32
    %54 = vector.broadcast %cst_25 : f32 to vector<96x32xf32>
    %55 = arith.maximumf %53, %54 : vector<96x32xf32>
    %c80 = arith.constant 80 : index
    %c0_26 = arith.constant 0 : index
    %56 = vector.load %arg6[%c80, %c0_26] : memref<1080x128xbf16, #tpu.memory_space<vmem>>, vector<32x32xbf16>
    %57 = arith.truncf %55 : vector<96x32xf32> to vector<96x32xbf16>
    %cst_27 = arith.constant dense<0.000000e+00> : vector<96x32xf32>
    %58 = tpu.matmul %57, %56, %cst_27 {dimension_numbers = #tpu.dot_dimension_numbers<[1], [0], [0], [1], [0, 0, 1, 1], [], []>} : vector<96x32xbf16>, vector<32x32xbf16>, vector<96x32xf32> -> vector<96x32xf32>
    %c6 = arith.constant 6 : index
    %c0_28 = arith.constant 0 : index
    %59 = vector.load %arg7[%c6, %c0_28] : memref<48x128xf32, #tpu.memory_space<vmem>>, vector<1x32xf32>
    %60 = vector.broadcast %59 : vector<1x32xf32> to vector<96x32xf32>
    %61 = arith.addf %58, %60 : vector<96x32xf32>
    %cst_29 = arith.constant 0.000000e+00 : f32
    %62 = vector.broadcast %cst_29 : f32 to vector<96x32xf32>
    %63 = arith.maximumf %61, %62 : vector<96x32xf32>
    %c112 = arith.constant 112 : index
    %c0_30 = arith.constant 0 : index
    %64 = vector.load %arg6[%c112, %c0_30] : memref<1080x128xbf16, #tpu.memory_space<vmem>>, vector<32x32xbf16>
    %65 = arith.truncf %63 : vector<96x32xf32> to vector<96x32xbf16>
    %cst_31 = arith.constant dense<0.000000e+00> : vector<96x32xf32>
    %66 = tpu.matmul %65, %64, %cst_31 {dimension_numbers = #tpu.dot_dimension_numbers<[1], [0], [0], [1], [0, 0, 1, 1], [], []>} : vector<96x32xbf16>, vector<32x32xbf16>, vector<96x32xf32> -> vector<96x32xf32>
    %c7 = arith.constant 7 : index
    %c0_32 = arith.constant 0 : index
    %67 = vector.load %arg7[%c7, %c0_32] : memref<48x128xf32, #tpu.memory_space<vmem>>, vector<1x32xf32>
    %68 = vector.broadcast %67 : vector<1x32xf32> to vector<96x32xf32>
    %69 = arith.addf %66, %68 : vector<96x32xf32>
    %cst_33 = arith.constant dense<0.000000e+00> : vector<96xf32>
    %70 = vector.multi_reduction <add>, %69, %cst_33 [1] : vector<96x32xf32> to vector<96xf32>
    %71 = vector.shape_cast %70 : vector<96xf32> to vector<96x1xf32>
    %cst_34 = arith.constant 3.200000e+01 : f32
    %72 = vector.broadcast %cst_34 : f32 to vector<96x1xf32>
    %73 = arith.divf %71, %72 : vector<96x1xf32>
    %74 = vector.broadcast %73 : vector<96x1xf32> to vector<96x32xf32>
    %75 = arith.subf %69, %74 : vector<96x32xf32>
    %76 = arith.mulf %75, %75 : vector<96x32xf32>
    %cst_35 = arith.constant dense<0.000000e+00> : vector<96xf32>
    %77 = vector.multi_reduction <add>, %76, %cst_35 [1] : vector<96x32xf32> to vector<96xf32>
    %78 = vector.shape_cast %77 : vector<96xf32> to vector<96x1xf32>
    %cst_36 = arith.constant 3.200000e+01 : f32
    %79 = vector.broadcast %cst_36 : f32 to vector<96x1xf32>
    %80 = arith.divf %78, %79 : vector<96x1xf32>
    %81 = vector.broadcast %73 : vector<96x1xf32> to vector<96x32xf32>
    %82 = arith.subf %69, %81 : vector<96x32xf32>
    %cst_37 = arith.constant 9.99999974E-6 : f32
    %83 = vector.broadcast %cst_37 : f32 to vector<96x1xf32>
    %84 = arith.addf %80, %83 : vector<96x1xf32>
    %85 = math.rsqrt %84 : vector<96x1xf32>
    %86 = vector.broadcast %85 : vector<96x1xf32> to vector<96x32xf32>
    %87 = arith.mulf %82, %86 : vector<96x32xf32>
    %c8_38 = arith.constant 8 : index
    %c0_39 = arith.constant 0 : index
    %88 = vector.load %arg7[%c8_38, %c0_39] : memref<48x128xf32, #tpu.memory_space<vmem>>, vector<1x32xf32>
    %89 = vector.broadcast %88 : vector<1x32xf32> to vector<96x32xf32>
    %90 = arith.mulf %87, %89 : vector<96x32xf32>
    %c9 = arith.constant 9 : index
    %c0_40 = arith.constant 0 : index
    %91 = vector.load %arg7[%c9, %c0_40] : memref<48x128xf32, #tpu.memory_space<vmem>>, vector<1x32xf32>
    %92 = vector.broadcast %91 : vector<1x32xf32> to vector<96x32xf32>
    %93 = arith.addf %90, %92 : vector<96x32xf32>
    %c0_41 = arith.constant 0 : index
    %c0_42 = arith.constant 0 : index
    %94 = vector.load %arg2[%c0_41, %c0_42] : memref<80x8xf32, #tpu.memory_space<vmem>>, vector<80x8xf32>
    %c144 = arith.constant 144 : index
    %c0_43 = arith.constant 0 : index
    %95 = vector.load %arg6[%c144, %c0_43] : memref<1080x128xbf16, #tpu.memory_space<vmem>>, vector<8x32xbf16>
    %96 = arith.truncf %94 : vector<80x8xf32> to vector<80x8xbf16>
    %cst_44 = arith.constant dense<0.000000e+00> : vector<80x32xf32>
    %97 = tpu.matmul %96, %95, %cst_44 {dimension_numbers = #tpu.dot_dimension_numbers<[1], [0], [0], [1], [0, 0, 1, 1], [], []>} : vector<80x8xbf16>, vector<8x32xbf16>, vector<80x32xf32> -> vector<80x32xf32>
    %c10 = arith.constant 10 : index
    %c0_45 = arith.constant 0 : index
    %98 = vector.load %arg7[%c10, %c0_45] : memref<48x128xf32, #tpu.memory_space<vmem>>, vector<1x32xf32>
    %99 = vector.broadcast %98 : vector<1x32xf32> to vector<80x32xf32>
    %100 = arith.addf %97, %99 : vector<80x32xf32>
    %cst_46 = arith.constant 0.000000e+00 : f32
    %101 = vector.broadcast %cst_46 : f32 to vector<80x32xf32>
    %102 = arith.maximumf %100, %101 : vector<80x32xf32>
    %c152 = arith.constant 152 : index
    %c0_47 = arith.constant 0 : index
    %103 = vector.load %arg6[%c152, %c0_47] : memref<1080x128xbf16, #tpu.memory_space<vmem>>, vector<32x32xbf16>
    %104 = arith.truncf %102 : vector<80x32xf32> to vector<80x32xbf16>
    %cst_48 = arith.constant dense<0.000000e+00> : vector<80x32xf32>
    %105 = tpu.matmul %104, %103, %cst_48 {dimension_numbers = #tpu.dot_dimension_numbers<[1], [0], [0], [1], [0, 0, 1, 1], [], []>} : vector<80x32xbf16>, vector<32x32xbf16>, vector<80x32xf32> -> vector<80x32xf32>
    %c11 = arith.constant 11 : index
    %c0_49 = arith.constant 0 : index
    %106 = vector.load %arg7[%c11, %c0_49] : memref<48x128xf32, #tpu.memory_space<vmem>>, vector<1x32xf32>
    %107 = vector.broadcast %106 : vector<1x32xf32> to vector<80x32xf32>
    %108 = arith.addf %105, %107 : vector<80x32xf32>
    %cst_50 = arith.constant 0.000000e+00 : f32
    %109 = vector.broadcast %cst_50 : f32 to vector<80x32xf32>
    %110 = arith.maximumf %108, %109 : vector<80x32xf32>
    %c184 = arith.constant 184 : index
    %c0_51 = arith.constant 0 : index
    %111 = vector.load %arg6[%c184, %c0_51] : memref<1080x128xbf16, #tpu.memory_space<vmem>>, vector<32x32xbf16>
    %112 = arith.truncf %110 : vector<80x32xf32> to vector<80x32xbf16>
    %cst_52 = arith.constant dense<0.000000e+00> : vector<80x32xf32>
    %113 = tpu.matmul %112, %111, %cst_52 {dimension_numbers = #tpu.dot_dimension_numbers<[1], [0], [0], [1], [0, 0, 1, 1], [], []>} : vector<80x32xbf16>, vector<32x32xbf16>, vector<80x32xf32> -> vector<80x32xf32>
    %c12 = arith.constant 12 : index
    %c0_53 = arith.constant 0 : index
    %114 = vector.load %arg7[%c12, %c0_53] : memref<48x128xf32, #tpu.memory_space<vmem>>, vector<1x32xf32>
    %115 = vector.broadcast %114 : vector<1x32xf32> to vector<80x32xf32>
    %116 = arith.addf %113, %115 : vector<80x32xf32>
    %cst_54 = arith.constant dense<0.000000e+00> : vector<80xf32>
    %117 = vector.multi_reduction <add>, %116, %cst_54 [1] : vector<80x32xf32> to vector<80xf32>
    %118 = vector.shape_cast %117 : vector<80xf32> to vector<80x1xf32>
    %cst_55 = arith.constant 3.200000e+01 : f32
    %119 = vector.broadcast %cst_55 : f32 to vector<80x1xf32>
    %120 = arith.divf %118, %119 : vector<80x1xf32>
    %121 = vector.broadcast %120 : vector<80x1xf32> to vector<80x32xf32>
    %122 = arith.subf %116, %121 : vector<80x32xf32>
    %123 = arith.mulf %122, %122 : vector<80x32xf32>
    %cst_56 = arith.constant dense<0.000000e+00> : vector<80xf32>
    %124 = vector.multi_reduction <add>, %123, %cst_56 [1] : vector<80x32xf32> to vector<80xf32>
    %125 = vector.shape_cast %124 : vector<80xf32> to vector<80x1xf32>
    %cst_57 = arith.constant 3.200000e+01 : f32
    %126 = vector.broadcast %cst_57 : f32 to vector<80x1xf32>
    %127 = arith.divf %125, %126 : vector<80x1xf32>
    %128 = vector.broadcast %120 : vector<80x1xf32> to vector<80x32xf32>
    %129 = arith.subf %116, %128 : vector<80x32xf32>
    %cst_58 = arith.constant 9.99999974E-6 : f32
    %130 = vector.broadcast %cst_58 : f32 to vector<80x1xf32>
    %131 = arith.addf %127, %130 : vector<80x1xf32>
    %132 = math.rsqrt %131 : vector<80x1xf32>
    %133 = vector.broadcast %132 : vector<80x1xf32> to vector<80x32xf32>
    %134 = arith.mulf %129, %133 : vector<80x32xf32>
    %c13 = arith.constant 13 : index
    %c0_59 = arith.constant 0 : index
    %135 = vector.load %arg7[%c13, %c0_59] : memref<48x128xf32, #tpu.memory_space<vmem>>, vector<1x32xf32>
    %136 = vector.broadcast %135 : vector<1x32xf32> to vector<80x32xf32>
    %137 = arith.mulf %134, %136 : vector<80x32xf32>
    %c14 = arith.constant 14 : index
    %c0_60 = arith.constant 0 : index
    %138 = vector.load %arg7[%c14, %c0_60] : memref<48x128xf32, #tpu.memory_space<vmem>>, vector<1x32xf32>
    %139 = vector.broadcast %138 : vector<1x32xf32> to vector<80x32xf32>
    %140 = arith.addf %137, %139 : vector<80x32xf32>
    %c0_61 = arith.constant 0 : index
    %c0_62 = arith.constant 0 : index
    %141 = vector.load %arg3[%c0_61, %c0_62] : memref<96x96xbf16, #tpu.memory_space<vmem>>, vector<96x96xbf16>
    %c0_63 = arith.constant 0 : index
    %c0_64 = arith.constant 0 : index
    %142 = vector.load %arg4[%c0_63, %c0_64] : memref<80x96xbf16, #tpu.memory_space<vmem>>, vector<80x96xbf16>
    %c0_65 = arith.constant 0 : index
    %c0_66 = arith.constant 0 : index
    %143 = vector.load %arg5[%c0_65, %c0_66] : memref<48x176xbf16, #tpu.memory_space<vmem>>, vector<48x176xbf16>
    %c216 = arith.constant 216 : index
    %c0_67 = arith.constant 0 : index
    %144 = vector.load %arg6[%c216, %c0_67] : memref<1080x128xbf16, #tpu.memory_space<vmem>>, vector<32x128xbf16>
    %145 = arith.truncf %46 : vector<48x32xf32> to vector<48x32xbf16>
    %cst_68 = arith.constant dense<0.000000e+00> : vector<48x128xf32>
    %146 = tpu.matmul %145, %144, %cst_68 {dimension_numbers = #tpu.dot_dimension_numbers<[1], [0], [0], [1], [0, 0, 1, 1], [], []>} : vector<48x32xbf16>, vector<32x128xbf16>, vector<48x128xf32> -> vector<48x128xf32>
    %147 = vector.extract_strided_slice %146 {offsets = [0, 0], sizes = [48, 32], strides = [1, 1]} : vector<48x128xf32> to vector<48x32xf32>
    %148 = vector.extract_strided_slice %146 {offsets = [0, 32], sizes = [48, 32], strides = [1, 1]} : vector<48x128xf32> to vector<48x32xf32>
    %149 = tpu.concatenate %147, %148 in 0 : vector<48x32xf32>, vector<48x32xf32> -> vector<96x32xf32>
    %150 = arith.truncf %149 : vector<96x32xf32> to vector<96x32xbf16>
    %cst_69 = arith.constant dense<0.000000e+00> : vector<96x32xf32>
    %151 = tpu.matmul %141, %150, %cst_69 {dimension_numbers = #tpu.dot_dimension_numbers<[1], [0], [0], [1], [0, 0, 1, 1], [], []>} : vector<96x96xbf16>, vector<96x32xbf16>, vector<96x32xf32> -> vector<96x32xf32>
    %c248 = arith.constant 248 : index
    %c0_70 = arith.constant 0 : index
    %152 = vector.load %arg6[%c248, %c0_70] : memref<1080x128xbf16, #tpu.memory_space<vmem>>, vector<32x32xbf16>
    %153 = arith.truncf %93 : vector<96x32xf32> to vector<96x32xbf16>
    %cst_71 = arith.constant dense<0.000000e+00> : vector<96x32xf32>
    %154 = tpu.matmul %153, %152, %cst_71 {dimension_numbers = #tpu.dot_dimension_numbers<[1], [0], [0], [1], [0, 0, 1, 1], [], []>} : vector<96x32xbf16>, vector<32x32xbf16>, vector<96x32xf32> -> vector<96x32xf32>
    %155 = arith.addf %151, %154 : vector<96x32xf32>
    %c15 = arith.constant 15 : index
    %c0_72 = arith.constant 0 : index
    %156 = vector.load %arg7[%c15, %c0_72] : memref<48x128xf32, #tpu.memory_space<vmem>>, vector<1x32xf32>
    %157 = vector.broadcast %156 : vector<1x32xf32> to vector<96x32xf32>
    %158 = arith.addf %155, %157 : vector<96x32xf32>
    %cst_73 = arith.constant 0.000000e+00 : f32
    %159 = vector.broadcast %cst_73 : f32 to vector<96x32xf32>
    %160 = arith.maximumf %158, %159 : vector<96x32xf32>
    %c280 = arith.constant 280 : index
    %c0_74 = arith.constant 0 : index
    %161 = vector.load %arg6[%c280, %c0_74] : memref<1080x128xbf16, #tpu.memory_space<vmem>>, vector<32x32xbf16>
    %162 = arith.truncf %160 : vector<96x32xf32> to vector<96x32xbf16>
    %cst_75 = arith.constant dense<0.000000e+00> : vector<96x32xf32>
    %163 = tpu.matmul %162, %161, %cst_75 {dimension_numbers = #tpu.dot_dimension_numbers<[1], [0], [0], [1], [0, 0, 1, 1], [], []>} : vector<96x32xbf16>, vector<32x32xbf16>, vector<96x32xf32> -> vector<96x32xf32>
    %c16 = arith.constant 16 : index
    %c0_76 = arith.constant 0 : index
    %164 = vector.load %arg7[%c16, %c0_76] : memref<48x128xf32, #tpu.memory_space<vmem>>, vector<1x32xf32>
    %165 = vector.broadcast %164 : vector<1x32xf32> to vector<96x32xf32>
    %166 = arith.addf %163, %165 : vector<96x32xf32>
    %cst_77 = arith.constant 0.000000e+00 : f32
    %167 = vector.broadcast %cst_77 : f32 to vector<96x32xf32>
    %168 = arith.maximumf %166, %167 : vector<96x32xf32>
    %c312 = arith.constant 312 : index
    %c0_78 = arith.constant 0 : index
    %169 = vector.load %arg6[%c312, %c0_78] : memref<1080x128xbf16, #tpu.memory_space<vmem>>, vector<32x32xbf16>
    %170 = arith.truncf %168 : vector<96x32xf32> to vector<96x32xbf16>
    %cst_79 = arith.constant dense<0.000000e+00> : vector<96x32xf32>
    %171 = tpu.matmul %170, %169, %cst_79 {dimension_numbers = #tpu.dot_dimension_numbers<[1], [0], [0], [1], [0, 0, 1, 1], [], []>} : vector<96x32xbf16>, vector<32x32xbf16>, vector<96x32xf32> -> vector<96x32xf32>
    %c17 = arith.constant 17 : index
    %c0_80 = arith.constant 0 : index
    %172 = vector.load %arg7[%c17, %c0_80] : memref<48x128xf32, #tpu.memory_space<vmem>>, vector<1x32xf32>
    %173 = vector.broadcast %172 : vector<1x32xf32> to vector<96x32xf32>
    %174 = arith.addf %171, %173 : vector<96x32xf32>
    %cst_81 = arith.constant dense<0.000000e+00> : vector<96xf32>
    %175 = vector.multi_reduction <add>, %174, %cst_81 [1] : vector<96x32xf32> to vector<96xf32>
    %176 = vector.shape_cast %175 : vector<96xf32> to vector<96x1xf32>
    %cst_82 = arith.constant 3.200000e+01 : f32
    %177 = vector.broadcast %cst_82 : f32 to vector<96x1xf32>
    %178 = arith.divf %176, %177 : vector<96x1xf32>
    %179 = vector.broadcast %178 : vector<96x1xf32> to vector<96x32xf32>
    %180 = arith.subf %174, %179 : vector<96x32xf32>
    %181 = arith.mulf %180, %180 : vector<96x32xf32>
    %cst_83 = arith.constant dense<0.000000e+00> : vector<96xf32>
    %182 = vector.multi_reduction <add>, %181, %cst_83 [1] : vector<96x32xf32> to vector<96xf32>
    %183 = vector.shape_cast %182 : vector<96xf32> to vector<96x1xf32>
    %cst_84 = arith.constant 3.200000e+01 : f32
    %184 = vector.broadcast %cst_84 : f32 to vector<96x1xf32>
    %185 = arith.divf %183, %184 : vector<96x1xf32>
    %186 = vector.broadcast %178 : vector<96x1xf32> to vector<96x32xf32>
    %187 = arith.subf %174, %186 : vector<96x32xf32>
    %cst_85 = arith.constant 9.99999974E-6 : f32
    %188 = vector.broadcast %cst_85 : f32 to vector<96x1xf32>
    %189 = arith.addf %185, %188 : vector<96x1xf32>
    %190 = math.rsqrt %189 : vector<96x1xf32>
    %191 = vector.broadcast %190 : vector<96x1xf32> to vector<96x32xf32>
    %192 = arith.mulf %187, %191 : vector<96x32xf32>
    %c18 = arith.constant 18 : index
    %c0_86 = arith.constant 0 : index
    %193 = vector.load %arg7[%c18, %c0_86] : memref<48x128xf32, #tpu.memory_space<vmem>>, vector<1x32xf32>
    %194 = vector.broadcast %193 : vector<1x32xf32> to vector<96x32xf32>
    %195 = arith.mulf %192, %194 : vector<96x32xf32>
    %c19 = arith.constant 19 : index
    %c0_87 = arith.constant 0 : index
    %196 = vector.load %arg7[%c19, %c0_87] : memref<48x128xf32, #tpu.memory_space<vmem>>, vector<1x32xf32>
    %197 = vector.broadcast %196 : vector<1x32xf32> to vector<96x32xf32>
    %198 = arith.addf %195, %197 : vector<96x32xf32>
    %199 = vector.extract_strided_slice %146 {offsets = [0, 64], sizes = [48, 32], strides = [1, 1]} : vector<48x128xf32> to vector<48x32xf32>
    %200 = vector.extract_strided_slice %146 {offsets = [0, 96], sizes = [48, 32], strides = [1, 1]} : vector<48x128xf32> to vector<48x32xf32>
    %201 = tpu.concatenate %199, %200 in 0 : vector<48x32xf32>, vector<48x32xf32> -> vector<96x32xf32>
    %202 = arith.truncf %201 : vector<96x32xf32> to vector<96x32xbf16>
    %cst_88 = arith.constant dense<0.000000e+00> : vector<80x32xf32>
    %203 = tpu.matmul %142, %202, %cst_88 {dimension_numbers = #tpu.dot_dimension_numbers<[1], [0], [0], [1], [0, 0, 1, 1], [], []>} : vector<80x96xbf16>, vector<96x32xbf16>, vector<80x32xf32> -> vector<80x32xf32>
    %c344 = arith.constant 344 : index
    %c0_89 = arith.constant 0 : index
    %204 = vector.load %arg6[%c344, %c0_89] : memref<1080x128xbf16, #tpu.memory_space<vmem>>, vector<32x32xbf16>
    %205 = arith.truncf %140 : vector<80x32xf32> to vector<80x32xbf16>
    %cst_90 = arith.constant dense<0.000000e+00> : vector<80x32xf32>
    %206 = tpu.matmul %205, %204, %cst_90 {dimension_numbers = #tpu.dot_dimension_numbers<[1], [0], [0], [1], [0, 0, 1, 1], [], []>} : vector<80x32xbf16>, vector<32x32xbf16>, vector<80x32xf32> -> vector<80x32xf32>
    %207 = arith.addf %203, %206 : vector<80x32xf32>
    %c20 = arith.constant 20 : index
    %c0_91 = arith.constant 0 : index
    %208 = vector.load %arg7[%c20, %c0_91] : memref<48x128xf32, #tpu.memory_space<vmem>>, vector<1x32xf32>
    %209 = vector.broadcast %208 : vector<1x32xf32> to vector<80x32xf32>
    %210 = arith.addf %207, %209 : vector<80x32xf32>
    %cst_92 = arith.constant 0.000000e+00 : f32
    %211 = vector.broadcast %cst_92 : f32 to vector<80x32xf32>
    %212 = arith.maximumf %210, %211 : vector<80x32xf32>
    %c376 = arith.constant 376 : index
    %c0_93 = arith.constant 0 : index
    %213 = vector.load %arg6[%c376, %c0_93] : memref<1080x128xbf16, #tpu.memory_space<vmem>>, vector<32x32xbf16>
    %214 = arith.truncf %212 : vector<80x32xf32> to vector<80x32xbf16>
    %cst_94 = arith.constant dense<0.000000e+00> : vector<80x32xf32>
    %215 = tpu.matmul %214, %213, %cst_94 {dimension_numbers = #tpu.dot_dimension_numbers<[1], [0], [0], [1], [0, 0, 1, 1], [], []>} : vector<80x32xbf16>, vector<32x32xbf16>, vector<80x32xf32> -> vector<80x32xf32>
    %c21 = arith.constant 21 : index
    %c0_95 = arith.constant 0 : index
    %216 = vector.load %arg7[%c21, %c0_95] : memref<48x128xf32, #tpu.memory_space<vmem>>, vector<1x32xf32>
    %217 = vector.broadcast %216 : vector<1x32xf32> to vector<80x32xf32>
    %218 = arith.addf %215, %217 : vector<80x32xf32>
    %cst_96 = arith.constant 0.000000e+00 : f32
    %219 = vector.broadcast %cst_96 : f32 to vector<80x32xf32>
    %220 = arith.maximumf %218, %219 : vector<80x32xf32>
    %c408 = arith.constant 408 : index
    %c0_97 = arith.constant 0 : index
    %221 = vector.load %arg6[%c408, %c0_97] : memref<1080x128xbf16, #tpu.memory_space<vmem>>, vector<32x32xbf16>
    %222 = arith.truncf %220 : vector<80x32xf32> to vector<80x32xbf16>
    %cst_98 = arith.constant dense<0.000000e+00> : vector<80x32xf32>
    %223 = tpu.matmul %222, %221, %cst_98 {dimension_numbers = #tpu.dot_dimension_numbers<[1], [0], [0], [1], [0, 0, 1, 1], [], []>} : vector<80x32xbf16>, vector<32x32xbf16>, vector<80x32xf32> -> vector<80x32xf32>
    %c22 = arith.constant 22 : index
    %c0_99 = arith.constant 0 : index
    %224 = vector.load %arg7[%c22, %c0_99] : memref<48x128xf32, #tpu.memory_space<vmem>>, vector<1x32xf32>
    %225 = vector.broadcast %224 : vector<1x32xf32> to vector<80x32xf32>
    %226 = arith.addf %223, %225 : vector<80x32xf32>
    %cst_100 = arith.constant dense<0.000000e+00> : vector<80xf32>
    %227 = vector.multi_reduction <add>, %226, %cst_100 [1] : vector<80x32xf32> to vector<80xf32>
    %228 = vector.shape_cast %227 : vector<80xf32> to vector<80x1xf32>
    %cst_101 = arith.constant 3.200000e+01 : f32
    %229 = vector.broadcast %cst_101 : f32 to vector<80x1xf32>
    %230 = arith.divf %228, %229 : vector<80x1xf32>
    %231 = vector.broadcast %230 : vector<80x1xf32> to vector<80x32xf32>
    %232 = arith.subf %226, %231 : vector<80x32xf32>
    %233 = arith.mulf %232, %232 : vector<80x32xf32>
    %cst_102 = arith.constant dense<0.000000e+00> : vector<80xf32>
    %234 = vector.multi_reduction <add>, %233, %cst_102 [1] : vector<80x32xf32> to vector<80xf32>
    %235 = vector.shape_cast %234 : vector<80xf32> to vector<80x1xf32>
    %cst_103 = arith.constant 3.200000e+01 : f32
    %236 = vector.broadcast %cst_103 : f32 to vector<80x1xf32>
    %237 = arith.divf %235, %236 : vector<80x1xf32>
    %238 = vector.broadcast %230 : vector<80x1xf32> to vector<80x32xf32>
    %239 = arith.subf %226, %238 : vector<80x32xf32>
    %cst_104 = arith.constant 9.99999974E-6 : f32
    %240 = vector.broadcast %cst_104 : f32 to vector<80x1xf32>
    %241 = arith.addf %237, %240 : vector<80x1xf32>
    %242 = math.rsqrt %241 : vector<80x1xf32>
    %243 = vector.broadcast %242 : vector<80x1xf32> to vector<80x32xf32>
    %244 = arith.mulf %239, %243 : vector<80x32xf32>
    %c23 = arith.constant 23 : index
    %c0_105 = arith.constant 0 : index
    %245 = vector.load %arg7[%c23, %c0_105] : memref<48x128xf32, #tpu.memory_space<vmem>>, vector<1x32xf32>
    %246 = vector.broadcast %245 : vector<1x32xf32> to vector<80x32xf32>
    %247 = arith.mulf %244, %246 : vector<80x32xf32>
    %c24 = arith.constant 24 : index
    %c0_106 = arith.constant 0 : index
    %248 = vector.load %arg7[%c24, %c0_106] : memref<48x128xf32, #tpu.memory_space<vmem>>, vector<1x32xf32>
    %249 = vector.broadcast %248 : vector<1x32xf32> to vector<80x32xf32>
    %250 = arith.addf %247, %249 : vector<80x32xf32>
    %c472 = arith.constant 472 : index
    %c0_107 = arith.constant 0 : index
    %251 = vector.load %arg6[%c472, %c0_107] : memref<1080x128xbf16, #tpu.memory_space<vmem>>, vector<32x32xbf16>
    %252 = arith.truncf %198 : vector<96x32xf32> to vector<96x32xbf16>
    %cst_108 = arith.constant dense<0.000000e+00> : vector<96x32xf32>
    %253 = tpu.matmul %252, %251, %cst_108 {dimension_numbers = #tpu.dot_dimension_numbers<[1], [0], [0], [1], [0, 0, 1, 1], [], []>} : vector<96x32xbf16>, vector<32x32xbf16>, vector<96x32xf32> -> vector<96x32xf32>
    %c504 = arith.constant 504 : index
    %c0_109 = arith.constant 0 : index
    %254 = vector.load %arg6[%c504, %c0_109] : memref<1080x128xbf16, #tpu.memory_space<vmem>>, vector<32x32xbf16>
    %255 = arith.truncf %250 : vector<80x32xf32> to vector<80x32xbf16>
    %cst_110 = arith.constant dense<0.000000e+00> : vector<80x32xf32>
    %256 = tpu.matmul %255, %254, %cst_110 {dimension_numbers = #tpu.dot_dimension_numbers<[1], [0], [0], [1], [0, 0, 1, 1], [], []>} : vector<80x32xbf16>, vector<32x32xbf16>, vector<80x32xf32> -> vector<80x32xf32>
    %257 = tpu.concatenate %253, %256 in 0 : vector<96x32xf32>, vector<80x32xf32> -> vector<176x32xf32>
    %c440 = arith.constant 440 : index
    %c0_111 = arith.constant 0 : index
    %258 = vector.load %arg6[%c440, %c0_111] : memref<1080x128xbf16, #tpu.memory_space<vmem>>, vector<32x32xbf16>
    %259 = arith.truncf %46 : vector<48x32xf32> to vector<48x32xbf16>
    %cst_112 = arith.constant dense<0.000000e+00> : vector<48x32xf32>
    %260 = tpu.matmul %259, %258, %cst_112 {dimension_numbers = #tpu.dot_dimension_numbers<[1], [0], [0], [1], [0, 0, 1, 1], [], []>} : vector<48x32xbf16>, vector<32x32xbf16>, vector<48x32xf32> -> vector<48x32xf32>
    %c25 = arith.constant 25 : index
    %c0_113 = arith.constant 0 : index
    %261 = vector.load %arg7[%c25, %c0_113] : memref<48x128xf32, #tpu.memory_space<vmem>>, vector<1x32xf32>
    %262 = vector.broadcast %261 : vector<1x32xf32> to vector<48x32xf32>
    %263 = arith.addf %260, %262 : vector<48x32xf32>
    %264 = arith.truncf %257 : vector<176x32xf32> to vector<176x32xbf16>
    %cst_114 = arith.constant dense<0.000000e+00> : vector<48x32xf32>
    %265 = tpu.matmul %143, %264, %cst_114 {dimension_numbers = #tpu.dot_dimension_numbers<[1], [0], [0], [1], [0, 0, 1, 1], [], []>} : vector<48x176xbf16>, vector<176x32xbf16>, vector<48x32xf32> -> vector<48x32xf32>
    %266 = arith.addf %263, %265 : vector<48x32xf32>
    %cst_115 = arith.constant 0.000000e+00 : f32
    %267 = vector.broadcast %cst_115 : f32 to vector<48x32xf32>
    %268 = arith.maximumf %266, %267 : vector<48x32xf32>
    %c536 = arith.constant 536 : index
    %c0_116 = arith.constant 0 : index
    %269 = vector.load %arg6[%c536, %c0_116] : memref<1080x128xbf16, #tpu.memory_space<vmem>>, vector<32x32xbf16>
    %270 = arith.truncf %268 : vector<48x32xf32> to vector<48x32xbf16>
    %cst_117 = arith.constant dense<0.000000e+00> : vector<48x32xf32>
    %271 = tpu.matmul %270, %269, %cst_117 {dimension_numbers = #tpu.dot_dimension_numbers<[1], [0], [0], [1], [0, 0, 1, 1], [], []>} : vector<48x32xbf16>, vector<32x32xbf16>, vector<48x32xf32> -> vector<48x32xf32>
    %c26 = arith.constant 26 : index
    %c0_118 = arith.constant 0 : index
    %272 = vector.load %arg7[%c26, %c0_118] : memref<48x128xf32, #tpu.memory_space<vmem>>, vector<1x32xf32>
    %273 = vector.broadcast %272 : vector<1x32xf32> to vector<48x32xf32>
    %274 = arith.addf %271, %273 : vector<48x32xf32>
    %cst_119 = arith.constant 0.000000e+00 : f32
    %275 = vector.broadcast %cst_119 : f32 to vector<48x32xf32>
    %276 = arith.maximumf %274, %275 : vector<48x32xf32>
    %c568 = arith.constant 568 : index
    %c0_120 = arith.constant 0 : index
    %277 = vector.load %arg6[%c568, %c0_120] : memref<1080x128xbf16, #tpu.memory_space<vmem>>, vector<32x32xbf16>
    %278 = arith.truncf %276 : vector<48x32xf32> to vector<48x32xbf16>
    %cst_121 = arith.constant dense<0.000000e+00> : vector<48x32xf32>
    %279 = tpu.matmul %278, %277, %cst_121 {dimension_numbers = #tpu.dot_dimension_numbers<[1], [0], [0], [1], [0, 0, 1, 1], [], []>} : vector<48x32xbf16>, vector<32x32xbf16>, vector<48x32xf32> -> vector<48x32xf32>
    %c27 = arith.constant 27 : index
    %c0_122 = arith.constant 0 : index
    %280 = vector.load %arg7[%c27, %c0_122] : memref<48x128xf32, #tpu.memory_space<vmem>>, vector<1x32xf32>
    %281 = vector.broadcast %280 : vector<1x32xf32> to vector<48x32xf32>
    %282 = arith.addf %279, %281 : vector<48x32xf32>
    %cst_123 = arith.constant dense<0.000000e+00> : vector<48xf32>
    %283 = vector.multi_reduction <add>, %282, %cst_123 [1] : vector<48x32xf32> to vector<48xf32>
    %284 = vector.shape_cast %283 : vector<48xf32> to vector<48x1xf32>
    %cst_124 = arith.constant 3.200000e+01 : f32
    %285 = vector.broadcast %cst_124 : f32 to vector<48x1xf32>
    %286 = arith.divf %284, %285 : vector<48x1xf32>
    %287 = vector.broadcast %286 : vector<48x1xf32> to vector<48x32xf32>
    %288 = arith.subf %282, %287 : vector<48x32xf32>
    %289 = arith.mulf %288, %288 : vector<48x32xf32>
    %cst_125 = arith.constant dense<0.000000e+00> : vector<48xf32>
    %290 = vector.multi_reduction <add>, %289, %cst_125 [1] : vector<48x32xf32> to vector<48xf32>
    %291 = vector.shape_cast %290 : vector<48xf32> to vector<48x1xf32>
    %cst_126 = arith.constant 3.200000e+01 : f32
    %292 = vector.broadcast %cst_126 : f32 to vector<48x1xf32>
    %293 = arith.divf %291, %292 : vector<48x1xf32>
    %294 = vector.broadcast %286 : vector<48x1xf32> to vector<48x32xf32>
    %295 = arith.subf %282, %294 : vector<48x32xf32>
    %cst_127 = arith.constant 9.99999974E-6 : f32
    %296 = vector.broadcast %cst_127 : f32 to vector<48x1xf32>
    %297 = arith.addf %293, %296 : vector<48x1xf32>
    %298 = math.rsqrt %297 : vector<48x1xf32>
    %299 = vector.broadcast %298 : vector<48x1xf32> to vector<48x32xf32>
    %300 = arith.mulf %295, %299 : vector<48x32xf32>
    %c28 = arith.constant 28 : index
    %c0_128 = arith.constant 0 : index
    %301 = vector.load %arg7[%c28, %c0_128] : memref<48x128xf32, #tpu.memory_space<vmem>>, vector<1x32xf32>
    %302 = vector.broadcast %301 : vector<1x32xf32> to vector<48x32xf32>
    %303 = arith.mulf %300, %302 : vector<48x32xf32>
    %c29 = arith.constant 29 : index
    %c0_129 = arith.constant 0 : index
    %304 = vector.load %arg7[%c29, %c0_129] : memref<48x128xf32, #tpu.memory_space<vmem>>, vector<1x32xf32>
    %305 = vector.broadcast %304 : vector<1x32xf32> to vector<48x32xf32>
    %306 = arith.addf %303, %305 : vector<48x32xf32>
    %307 = arith.addf %198, %93 : vector<96x32xf32>
    %308 = arith.addf %250, %140 : vector<80x32xf32>
    %309 = arith.addf %306, %46 : vector<48x32xf32>
    %c600 = arith.constant 600 : index
    %c0_130 = arith.constant 0 : index
    %310 = vector.load %arg6[%c600, %c0_130] : memref<1080x128xbf16, #tpu.memory_space<vmem>>, vector<32x128xbf16>
    %311 = arith.truncf %309 : vector<48x32xf32> to vector<48x32xbf16>
    %cst_131 = arith.constant dense<0.000000e+00> : vector<48x128xf32>
    %312 = tpu.matmul %311, %310, %cst_131 {dimension_numbers = #tpu.dot_dimension_numbers<[1], [0], [0], [1], [0, 0, 1, 1], [], []>} : vector<48x32xbf16>, vector<32x128xbf16>, vector<48x128xf32> -> vector<48x128xf32>
    %313 = vector.extract_strided_slice %312 {offsets = [0, 0], sizes = [48, 32], strides = [1, 1]} : vector<48x128xf32> to vector<48x32xf32>
    %314 = vector.extract_strided_slice %312 {offsets = [0, 32], sizes = [48, 32], strides = [1, 1]} : vector<48x128xf32> to vector<48x32xf32>
    %315 = tpu.concatenate %313, %314 in 0 : vector<48x32xf32>, vector<48x32xf32> -> vector<96x32xf32>
    %316 = arith.truncf %315 : vector<96x32xf32> to vector<96x32xbf16>
    %cst_132 = arith.constant dense<0.000000e+00> : vector<96x32xf32>
    %317 = tpu.matmul %141, %316, %cst_132 {dimension_numbers = #tpu.dot_dimension_numbers<[1], [0], [0], [1], [0, 0, 1, 1], [], []>} : vector<96x96xbf16>, vector<96x32xbf16>, vector<96x32xf32> -> vector<96x32xf32>
    %c632 = arith.constant 632 : index
    %c0_133 = arith.constant 0 : index
    %318 = vector.load %arg6[%c632, %c0_133] : memref<1080x128xbf16, #tpu.memory_space<vmem>>, vector<32x32xbf16>
    %319 = arith.truncf %307 : vector<96x32xf32> to vector<96x32xbf16>
    %cst_134 = arith.constant dense<0.000000e+00> : vector<96x32xf32>
    %320 = tpu.matmul %319, %318, %cst_134 {dimension_numbers = #tpu.dot_dimension_numbers<[1], [0], [0], [1], [0, 0, 1, 1], [], []>} : vector<96x32xbf16>, vector<32x32xbf16>, vector<96x32xf32> -> vector<96x32xf32>
    %321 = arith.addf %317, %320 : vector<96x32xf32>
    %c30 = arith.constant 30 : index
    %c0_135 = arith.constant 0 : index
    %322 = vector.load %arg7[%c30, %c0_135] : memref<48x128xf32, #tpu.memory_space<vmem>>, vector<1x32xf32>
    %323 = vector.broadcast %322 : vector<1x32xf32> to vector<96x32xf32>
    %324 = arith.addf %321, %323 : vector<96x32xf32>
    %cst_136 = arith.constant 0.000000e+00 : f32
    %325 = vector.broadcast %cst_136 : f32 to vector<96x32xf32>
    %326 = arith.maximumf %324, %325 : vector<96x32xf32>
    %c664 = arith.constant 664 : index
    %c0_137 = arith.constant 0 : index
    %327 = vector.load %arg6[%c664, %c0_137] : memref<1080x128xbf16, #tpu.memory_space<vmem>>, vector<32x32xbf16>
    %328 = arith.truncf %326 : vector<96x32xf32> to vector<96x32xbf16>
    %cst_138 = arith.constant dense<0.000000e+00> : vector<96x32xf32>
    %329 = tpu.matmul %328, %327, %cst_138 {dimension_numbers = #tpu.dot_dimension_numbers<[1], [0], [0], [1], [0, 0, 1, 1], [], []>} : vector<96x32xbf16>, vector<32x32xbf16>, vector<96x32xf32> -> vector<96x32xf32>
    %c31 = arith.constant 31 : index
    %c0_139 = arith.constant 0 : index
    %330 = vector.load %arg7[%c31, %c0_139] : memref<48x128xf32, #tpu.memory_space<vmem>>, vector<1x32xf32>
    %331 = vector.broadcast %330 : vector<1x32xf32> to vector<96x32xf32>
    %332 = arith.addf %329, %331 : vector<96x32xf32>
    %cst_140 = arith.constant 0.000000e+00 : f32
    %333 = vector.broadcast %cst_140 : f32 to vector<96x32xf32>
    %334 = arith.maximumf %332, %333 : vector<96x32xf32>
    %c696 = arith.constant 696 : index
    %c0_141 = arith.constant 0 : index
    %335 = vector.load %arg6[%c696, %c0_141] : memref<1080x128xbf16, #tpu.memory_space<vmem>>, vector<32x32xbf16>
    %336 = arith.truncf %334 : vector<96x32xf32> to vector<96x32xbf16>
    %cst_142 = arith.constant dense<0.000000e+00> : vector<96x32xf32>
    %337 = tpu.matmul %336, %335, %cst_142 {dimension_numbers = #tpu.dot_dimension_numbers<[1], [0], [0], [1], [0, 0, 1, 1], [], []>} : vector<96x32xbf16>, vector<32x32xbf16>, vector<96x32xf32> -> vector<96x32xf32>
    %c32 = arith.constant 32 : index
    %c0_143 = arith.constant 0 : index
    %338 = vector.load %arg7[%c32, %c0_143] : memref<48x128xf32, #tpu.memory_space<vmem>>, vector<1x32xf32>
    %339 = vector.broadcast %338 : vector<1x32xf32> to vector<96x32xf32>
    %340 = arith.addf %337, %339 : vector<96x32xf32>
    %cst_144 = arith.constant dense<0.000000e+00> : vector<96xf32>
    %341 = vector.multi_reduction <add>, %340, %cst_144 [1] : vector<96x32xf32> to vector<96xf32>
    %342 = vector.shape_cast %341 : vector<96xf32> to vector<96x1xf32>
    %cst_145 = arith.constant 3.200000e+01 : f32
    %343 = vector.broadcast %cst_145 : f32 to vector<96x1xf32>
    %344 = arith.divf %342, %343 : vector<96x1xf32>
    %345 = vector.broadcast %344 : vector<96x1xf32> to vector<96x32xf32>
    %346 = arith.subf %340, %345 : vector<96x32xf32>
    %347 = arith.mulf %346, %346 : vector<96x32xf32>
    %cst_146 = arith.constant dense<0.000000e+00> : vector<96xf32>
    %348 = vector.multi_reduction <add>, %347, %cst_146 [1] : vector<96x32xf32> to vector<96xf32>
    %349 = vector.shape_cast %348 : vector<96xf32> to vector<96x1xf32>
    %cst_147 = arith.constant 3.200000e+01 : f32
    %350 = vector.broadcast %cst_147 : f32 to vector<96x1xf32>
    %351 = arith.divf %349, %350 : vector<96x1xf32>
    %352 = vector.broadcast %344 : vector<96x1xf32> to vector<96x32xf32>
    %353 = arith.subf %340, %352 : vector<96x32xf32>
    %cst_148 = arith.constant 9.99999974E-6 : f32
    %354 = vector.broadcast %cst_148 : f32 to vector<96x1xf32>
    %355 = arith.addf %351, %354 : vector<96x1xf32>
    %356 = math.rsqrt %355 : vector<96x1xf32>
    %357 = vector.broadcast %356 : vector<96x1xf32> to vector<96x32xf32>
    %358 = arith.mulf %353, %357 : vector<96x32xf32>
    %c33 = arith.constant 33 : index
    %c0_149 = arith.constant 0 : index
    %359 = vector.load %arg7[%c33, %c0_149] : memref<48x128xf32, #tpu.memory_space<vmem>>, vector<1x32xf32>
    %360 = vector.broadcast %359 : vector<1x32xf32> to vector<96x32xf32>
    %361 = arith.mulf %358, %360 : vector<96x32xf32>
    %c34 = arith.constant 34 : index
    %c0_150 = arith.constant 0 : index
    %362 = vector.load %arg7[%c34, %c0_150] : memref<48x128xf32, #tpu.memory_space<vmem>>, vector<1x32xf32>
    %363 = vector.broadcast %362 : vector<1x32xf32> to vector<96x32xf32>
    %364 = arith.addf %361, %363 : vector<96x32xf32>
    %365 = vector.extract_strided_slice %312 {offsets = [0, 64], sizes = [48, 32], strides = [1, 1]} : vector<48x128xf32> to vector<48x32xf32>
    %366 = vector.extract_strided_slice %312 {offsets = [0, 96], sizes = [48, 32], strides = [1, 1]} : vector<48x128xf32> to vector<48x32xf32>
    %367 = tpu.concatenate %365, %366 in 0 : vector<48x32xf32>, vector<48x32xf32> -> vector<96x32xf32>
    %368 = arith.truncf %367 : vector<96x32xf32> to vector<96x32xbf16>
    %cst_151 = arith.constant dense<0.000000e+00> : vector<80x32xf32>
    %369 = tpu.matmul %142, %368, %cst_151 {dimension_numbers = #tpu.dot_dimension_numbers<[1], [0], [0], [1], [0, 0, 1, 1], [], []>} : vector<80x96xbf16>, vector<96x32xbf16>, vector<80x32xf32> -> vector<80x32xf32>
    %c728 = arith.constant 728 : index
    %c0_152 = arith.constant 0 : index
    %370 = vector.load %arg6[%c728, %c0_152] : memref<1080x128xbf16, #tpu.memory_space<vmem>>, vector<32x32xbf16>
    %371 = arith.truncf %308 : vector<80x32xf32> to vector<80x32xbf16>
    %cst_153 = arith.constant dense<0.000000e+00> : vector<80x32xf32>
    %372 = tpu.matmul %371, %370, %cst_153 {dimension_numbers = #tpu.dot_dimension_numbers<[1], [0], [0], [1], [0, 0, 1, 1], [], []>} : vector<80x32xbf16>, vector<32x32xbf16>, vector<80x32xf32> -> vector<80x32xf32>
    %373 = arith.addf %369, %372 : vector<80x32xf32>
    %c35 = arith.constant 35 : index
    %c0_154 = arith.constant 0 : index
    %374 = vector.load %arg7[%c35, %c0_154] : memref<48x128xf32, #tpu.memory_space<vmem>>, vector<1x32xf32>
    %375 = vector.broadcast %374 : vector<1x32xf32> to vector<80x32xf32>
    %376 = arith.addf %373, %375 : vector<80x32xf32>
    %cst_155 = arith.constant 0.000000e+00 : f32
    %377 = vector.broadcast %cst_155 : f32 to vector<80x32xf32>
    %378 = arith.maximumf %376, %377 : vector<80x32xf32>
    %c760 = arith.constant 760 : index
    %c0_156 = arith.constant 0 : index
    %379 = vector.load %arg6[%c760, %c0_156] : memref<1080x128xbf16, #tpu.memory_space<vmem>>, vector<32x32xbf16>
    %380 = arith.truncf %378 : vector<80x32xf32> to vector<80x32xbf16>
    %cst_157 = arith.constant dense<0.000000e+00> : vector<80x32xf32>
    %381 = tpu.matmul %380, %379, %cst_157 {dimension_numbers = #tpu.dot_dimension_numbers<[1], [0], [0], [1], [0, 0, 1, 1], [], []>} : vector<80x32xbf16>, vector<32x32xbf16>, vector<80x32xf32> -> vector<80x32xf32>
    %c36 = arith.constant 36 : index
    %c0_158 = arith.constant 0 : index
    %382 = vector.load %arg7[%c36, %c0_158] : memref<48x128xf32, #tpu.memory_space<vmem>>, vector<1x32xf32>
    %383 = vector.broadcast %382 : vector<1x32xf32> to vector<80x32xf32>
    %384 = arith.addf %381, %383 : vector<80x32xf32>
    %cst_159 = arith.constant 0.000000e+00 : f32
    %385 = vector.broadcast %cst_159 : f32 to vector<80x32xf32>
    %386 = arith.maximumf %384, %385 : vector<80x32xf32>
    %c792 = arith.constant 792 : index
    %c0_160 = arith.constant 0 : index
    %387 = vector.load %arg6[%c792, %c0_160] : memref<1080x128xbf16, #tpu.memory_space<vmem>>, vector<32x32xbf16>
    %388 = arith.truncf %386 : vector<80x32xf32> to vector<80x32xbf16>
    %cst_161 = arith.constant dense<0.000000e+00> : vector<80x32xf32>
    %389 = tpu.matmul %388, %387, %cst_161 {dimension_numbers = #tpu.dot_dimension_numbers<[1], [0], [0], [1], [0, 0, 1, 1], [], []>} : vector<80x32xbf16>, vector<32x32xbf16>, vector<80x32xf32> -> vector<80x32xf32>
    %c37 = arith.constant 37 : index
    %c0_162 = arith.constant 0 : index
    %390 = vector.load %arg7[%c37, %c0_162] : memref<48x128xf32, #tpu.memory_space<vmem>>, vector<1x32xf32>
    %391 = vector.broadcast %390 : vector<1x32xf32> to vector<80x32xf32>
    %392 = arith.addf %389, %391 : vector<80x32xf32>
    %cst_163 = arith.constant dense<0.000000e+00> : vector<80xf32>
    %393 = vector.multi_reduction <add>, %392, %cst_163 [1] : vector<80x32xf32> to vector<80xf32>
    %394 = vector.shape_cast %393 : vector<80xf32> to vector<80x1xf32>
    %cst_164 = arith.constant 3.200000e+01 : f32
    %395 = vector.broadcast %cst_164 : f32 to vector<80x1xf32>
    %396 = arith.divf %394, %395 : vector<80x1xf32>
    %397 = vector.broadcast %396 : vector<80x1xf32> to vector<80x32xf32>
    %398 = arith.subf %392, %397 : vector<80x32xf32>
    %399 = arith.mulf %398, %398 : vector<80x32xf32>
    %cst_165 = arith.constant dense<0.000000e+00> : vector<80xf32>
    %400 = vector.multi_reduction <add>, %399, %cst_165 [1] : vector<80x32xf32> to vector<80xf32>
    %401 = vector.shape_cast %400 : vector<80xf32> to vector<80x1xf32>
    %cst_166 = arith.constant 3.200000e+01 : f32
    %402 = vector.broadcast %cst_166 : f32 to vector<80x1xf32>
    %403 = arith.divf %401, %402 : vector<80x1xf32>
    %404 = vector.broadcast %396 : vector<80x1xf32> to vector<80x32xf32>
    %405 = arith.subf %392, %404 : vector<80x32xf32>
    %cst_167 = arith.constant 9.99999974E-6 : f32
    %406 = vector.broadcast %cst_167 : f32 to vector<80x1xf32>
    %407 = arith.addf %403, %406 : vector<80x1xf32>
    %408 = math.rsqrt %407 : vector<80x1xf32>
    %409 = vector.broadcast %408 : vector<80x1xf32> to vector<80x32xf32>
    %410 = arith.mulf %405, %409 : vector<80x32xf32>
    %c38 = arith.constant 38 : index
    %c0_168 = arith.constant 0 : index
    %411 = vector.load %arg7[%c38, %c0_168] : memref<48x128xf32, #tpu.memory_space<vmem>>, vector<1x32xf32>
    %412 = vector.broadcast %411 : vector<1x32xf32> to vector<80x32xf32>
    %413 = arith.mulf %410, %412 : vector<80x32xf32>
    %c39 = arith.constant 39 : index
    %c0_169 = arith.constant 0 : index
    %414 = vector.load %arg7[%c39, %c0_169] : memref<48x128xf32, #tpu.memory_space<vmem>>, vector<1x32xf32>
    %415 = vector.broadcast %414 : vector<1x32xf32> to vector<80x32xf32>
    %416 = arith.addf %413, %415 : vector<80x32xf32>
    %c856 = arith.constant 856 : index
    %c0_170 = arith.constant 0 : index
    %417 = vector.load %arg6[%c856, %c0_170] : memref<1080x128xbf16, #tpu.memory_space<vmem>>, vector<32x32xbf16>
    %418 = arith.truncf %364 : vector<96x32xf32> to vector<96x32xbf16>
    %cst_171 = arith.constant dense<0.000000e+00> : vector<96x32xf32>
    %419 = tpu.matmul %418, %417, %cst_171 {dimension_numbers = #tpu.dot_dimension_numbers<[1], [0], [0], [1], [0, 0, 1, 1], [], []>} : vector<96x32xbf16>, vector<32x32xbf16>, vector<96x32xf32> -> vector<96x32xf32>
    %c888 = arith.constant 888 : index
    %c0_172 = arith.constant 0 : index
    %420 = vector.load %arg6[%c888, %c0_172] : memref<1080x128xbf16, #tpu.memory_space<vmem>>, vector<32x32xbf16>
    %421 = arith.truncf %416 : vector<80x32xf32> to vector<80x32xbf16>
    %cst_173 = arith.constant dense<0.000000e+00> : vector<80x32xf32>
    %422 = tpu.matmul %421, %420, %cst_173 {dimension_numbers = #tpu.dot_dimension_numbers<[1], [0], [0], [1], [0, 0, 1, 1], [], []>} : vector<80x32xbf16>, vector<32x32xbf16>, vector<80x32xf32> -> vector<80x32xf32>
    %423 = tpu.concatenate %419, %422 in 0 : vector<96x32xf32>, vector<80x32xf32> -> vector<176x32xf32>
    %c824 = arith.constant 824 : index
    %c0_174 = arith.constant 0 : index
    %424 = vector.load %arg6[%c824, %c0_174] : memref<1080x128xbf16, #tpu.memory_space<vmem>>, vector<32x32xbf16>
    %425 = arith.truncf %309 : vector<48x32xf32> to vector<48x32xbf16>
    %cst_175 = arith.constant dense<0.000000e+00> : vector<48x32xf32>
    %426 = tpu.matmul %425, %424, %cst_175 {dimension_numbers = #tpu.dot_dimension_numbers<[1], [0], [0], [1], [0, 0, 1, 1], [], []>} : vector<48x32xbf16>, vector<32x32xbf16>, vector<48x32xf32> -> vector<48x32xf32>
    %c40_176 = arith.constant 40 : index
    %c0_177 = arith.constant 0 : index
    %427 = vector.load %arg7[%c40_176, %c0_177] : memref<48x128xf32, #tpu.memory_space<vmem>>, vector<1x32xf32>
    %428 = vector.broadcast %427 : vector<1x32xf32> to vector<48x32xf32>
    %429 = arith.addf %426, %428 : vector<48x32xf32>
    %430 = arith.truncf %423 : vector<176x32xf32> to vector<176x32xbf16>
    %cst_178 = arith.constant dense<0.000000e+00> : vector<48x32xf32>
    %431 = tpu.matmul %143, %430, %cst_178 {dimension_numbers = #tpu.dot_dimension_numbers<[1], [0], [0], [1], [0, 0, 1, 1], [], []>} : vector<48x176xbf16>, vector<176x32xbf16>, vector<48x32xf32> -> vector<48x32xf32>
    %432 = arith.addf %429, %431 : vector<48x32xf32>
    %cst_179 = arith.constant 0.000000e+00 : f32
    %433 = vector.broadcast %cst_179 : f32 to vector<48x32xf32>
    %434 = arith.maximumf %432, %433 : vector<48x32xf32>
    %c920 = arith.constant 920 : index
    %c0_180 = arith.constant 0 : index
    %435 = vector.load %arg6[%c920, %c0_180] : memref<1080x128xbf16, #tpu.memory_space<vmem>>, vector<32x32xbf16>
    %436 = arith.truncf %434 : vector<48x32xf32> to vector<48x32xbf16>
    %cst_181 = arith.constant dense<0.000000e+00> : vector<48x32xf32>
    %437 = tpu.matmul %436, %435, %cst_181 {dimension_numbers = #tpu.dot_dimension_numbers<[1], [0], [0], [1], [0, 0, 1, 1], [], []>} : vector<48x32xbf16>, vector<32x32xbf16>, vector<48x32xf32> -> vector<48x32xf32>
    %c41 = arith.constant 41 : index
    %c0_182 = arith.constant 0 : index
    %438 = vector.load %arg7[%c41, %c0_182] : memref<48x128xf32, #tpu.memory_space<vmem>>, vector<1x32xf32>
    %439 = vector.broadcast %438 : vector<1x32xf32> to vector<48x32xf32>
    %440 = arith.addf %437, %439 : vector<48x32xf32>
    %cst_183 = arith.constant 0.000000e+00 : f32
    %441 = vector.broadcast %cst_183 : f32 to vector<48x32xf32>
    %442 = arith.maximumf %440, %441 : vector<48x32xf32>
    %c952 = arith.constant 952 : index
    %c0_184 = arith.constant 0 : index
    %443 = vector.load %arg6[%c952, %c0_184] : memref<1080x128xbf16, #tpu.memory_space<vmem>>, vector<32x32xbf16>
    %444 = arith.truncf %442 : vector<48x32xf32> to vector<48x32xbf16>
    %cst_185 = arith.constant dense<0.000000e+00> : vector<48x32xf32>
    %445 = tpu.matmul %444, %443, %cst_185 {dimension_numbers = #tpu.dot_dimension_numbers<[1], [0], [0], [1], [0, 0, 1, 1], [], []>} : vector<48x32xbf16>, vector<32x32xbf16>, vector<48x32xf32> -> vector<48x32xf32>
    %c42 = arith.constant 42 : index
    %c0_186 = arith.constant 0 : index
    %446 = vector.load %arg7[%c42, %c0_186] : memref<48x128xf32, #tpu.memory_space<vmem>>, vector<1x32xf32>
    %447 = vector.broadcast %446 : vector<1x32xf32> to vector<48x32xf32>
    %448 = arith.addf %445, %447 : vector<48x32xf32>
    %cst_187 = arith.constant dense<0.000000e+00> : vector<48xf32>
    %449 = vector.multi_reduction <add>, %448, %cst_187 [1] : vector<48x32xf32> to vector<48xf32>
    %450 = vector.shape_cast %449 : vector<48xf32> to vector<48x1xf32>
    %cst_188 = arith.constant 3.200000e+01 : f32
    %451 = vector.broadcast %cst_188 : f32 to vector<48x1xf32>
    %452 = arith.divf %450, %451 : vector<48x1xf32>
    %453 = vector.broadcast %452 : vector<48x1xf32> to vector<48x32xf32>
    %454 = arith.subf %448, %453 : vector<48x32xf32>
    %455 = arith.mulf %454, %454 : vector<48x32xf32>
    %cst_189 = arith.constant dense<0.000000e+00> : vector<48xf32>
    %456 = vector.multi_reduction <add>, %455, %cst_189 [1] : vector<48x32xf32> to vector<48xf32>
    %457 = vector.shape_cast %456 : vector<48xf32> to vector<48x1xf32>
    %cst_190 = arith.constant 3.200000e+01 : f32
    %458 = vector.broadcast %cst_190 : f32 to vector<48x1xf32>
    %459 = arith.divf %457, %458 : vector<48x1xf32>
    %460 = vector.broadcast %452 : vector<48x1xf32> to vector<48x32xf32>
    %461 = arith.subf %448, %460 : vector<48x32xf32>
    %cst_191 = arith.constant 9.99999974E-6 : f32
    %462 = vector.broadcast %cst_191 : f32 to vector<48x1xf32>
    %463 = arith.addf %459, %462 : vector<48x1xf32>
    %464 = math.rsqrt %463 : vector<48x1xf32>
    %465 = vector.broadcast %464 : vector<48x1xf32> to vector<48x32xf32>
    %466 = arith.mulf %461, %465 : vector<48x32xf32>
    %c43 = arith.constant 43 : index
    %c0_192 = arith.constant 0 : index
    %467 = vector.load %arg7[%c43, %c0_192] : memref<48x128xf32, #tpu.memory_space<vmem>>, vector<1x32xf32>
    %468 = vector.broadcast %467 : vector<1x32xf32> to vector<48x32xf32>
    %469 = arith.mulf %466, %468 : vector<48x32xf32>
    %c44 = arith.constant 44 : index
    %c0_193 = arith.constant 0 : index
    %470 = vector.load %arg7[%c44, %c0_193] : memref<48x128xf32, #tpu.memory_space<vmem>>, vector<1x32xf32>
    %471 = vector.broadcast %470 : vector<1x32xf32> to vector<48x32xf32>
    %472 = arith.addf %469, %471 : vector<48x32xf32>
    %473 = arith.addf %472, %309 : vector<48x32xf32>
    %c984 = arith.constant 984 : index
    %c0_194 = arith.constant 0 : index
    %474 = vector.load %arg6[%c984, %c0_194] : memref<1080x128xbf16, #tpu.memory_space<vmem>>, vector<32x32xbf16>
    %475 = arith.truncf %473 : vector<48x32xf32> to vector<48x32xbf16>
    %cst_195 = arith.constant dense<0.000000e+00> : vector<48x32xf32>
    %476 = tpu.matmul %475, %474, %cst_195 {dimension_numbers = #tpu.dot_dimension_numbers<[1], [0], [0], [1], [0, 0, 1, 1], [], []>} : vector<48x32xbf16>, vector<32x32xbf16>, vector<48x32xf32> -> vector<48x32xf32>
    %c45 = arith.constant 45 : index
    %c0_196 = arith.constant 0 : index
    %477 = vector.load %arg7[%c45, %c0_196] : memref<48x128xf32, #tpu.memory_space<vmem>>, vector<1x32xf32>
    %478 = vector.broadcast %477 : vector<1x32xf32> to vector<48x32xf32>
    %479 = arith.addf %476, %478 : vector<48x32xf32>
    %cst_197 = arith.constant 0.000000e+00 : f32
    %480 = vector.broadcast %cst_197 : f32 to vector<48x32xf32>
    %481 = arith.maximumf %479, %480 : vector<48x32xf32>
    %c1016 = arith.constant 1016 : index
    %c0_198 = arith.constant 0 : index
    %482 = vector.load %arg6[%c1016, %c0_198] : memref<1080x128xbf16, #tpu.memory_space<vmem>>, vector<32x32xbf16>
    %483 = arith.truncf %481 : vector<48x32xf32> to vector<48x32xbf16>
    %cst_199 = arith.constant dense<0.000000e+00> : vector<48x32xf32>
    %484 = tpu.matmul %483, %482, %cst_199 {dimension_numbers = #tpu.dot_dimension_numbers<[1], [0], [0], [1], [0, 0, 1, 1], [], []>} : vector<48x32xbf16>, vector<32x32xbf16>, vector<48x32xf32> -> vector<48x32xf32>
    %c46 = arith.constant 46 : index
    %c0_200 = arith.constant 0 : index
    %485 = vector.load %arg7[%c46, %c0_200] : memref<48x128xf32, #tpu.memory_space<vmem>>, vector<1x32xf32>
    %486 = vector.broadcast %485 : vector<1x32xf32> to vector<48x32xf32>
    %487 = arith.addf %484, %486 : vector<48x32xf32>
    %cst_201 = arith.constant 0.000000e+00 : f32
    %488 = vector.broadcast %cst_201 : f32 to vector<48x32xf32>
    %489 = arith.maximumf %487, %488 : vector<48x32xf32>
    %c1048 = arith.constant 1048 : index
    %c0_202 = arith.constant 0 : index
    %490 = vector.load %arg6[%c1048, %c0_202] : memref<1080x128xbf16, #tpu.memory_space<vmem>>, vector<32x3xbf16>
    %491 = arith.truncf %489 : vector<48x32xf32> to vector<48x32xbf16>
    %cst_203 = arith.constant dense<0.000000e+00> : vector<48x3xf32>
    %492 = tpu.matmul %491, %490, %cst_203 {dimension_numbers = #tpu.dot_dimension_numbers<[1], [0], [0], [1], [0, 0, 1, 1], [], []>} : vector<48x32xbf16>, vector<32x3xbf16>, vector<48x3xf32> -> vector<48x3xf32>
    %c47 = arith.constant 47 : index
    %c0_204 = arith.constant 0 : index
    %493 = vector.load %arg7[%c47, %c0_204] : memref<48x128xf32, #tpu.memory_space<vmem>>, vector<1x3xf32>
    %494 = vector.broadcast %493 : vector<1x3xf32> to vector<48x3xf32>
    %495 = arith.addf %492, %494 : vector<48x3xf32>
    %c0_205 = arith.constant 0 : index
    %c0_206 = arith.constant 0 : index
    %496 = vector.load %arg8[%c0_205, %c0_206] : memref<48x3xf32, #tpu.memory_space<vmem>>, vector<48x3xf32>
    tpu.vector_store %arg8[%c0_205, %c0_206], %495 {strides = array<i32>} : memref<48x3xf32, #tpu.memory_space<vmem>>, vector<48x3xf32>,
    return
  }
}

</mosaic_0001>

<llo_original>
// kernel: _lambda_.1
$region0: #{_lambda_.1}
  #allocation0 [shape = 'u32[]', space=smem, size = 0x4, offset = 0x4, fixed_abs, tag = 'smem constant byte address 0x4 - core index']
  #allocation1 [shape = 'u32[72,128]{1,0:T(1,128)}', space=vmem, size = 0x9000, scoped, tag = 'internal scratch']
  %s0 = inlined_call_operand.vmem [shape: f32[48,8], index: 0, kind: input, shape index: {}]
  %s1 = inlined_call_operand.vmem [shape: f32[96,8], index: 1, kind: input, shape index: {}]
  %s2 = inlined_call_operand.vmem [shape: f32[80,8], index: 2, kind: input, shape index: {}]
  %s3 = inlined_call_operand.vmem [shape: bf16[96,96], index: 3, kind: input, shape index: {}]
  %s4 = inlined_call_operand.vmem [shape: bf16[80,96], index: 4, kind: input, shape index: {}]
  %s5 = inlined_call_operand.vmem [shape: bf16[48,176], index: 5, kind: input, shape index: {}]
  %s6 = inlined_call_operand.vmem [shape: bf16[1080,128], index: 6, kind: input, shape index: {}]
  %s7 = inlined_call_operand.vmem [shape: f32[48,128], index: 7, kind: input, shape index: {}]
  %s8 = inlined_call_operand.vmem [shape: f32[48,3], index: 8, kind: output, shape index: {}]
  %s9 = sld [smem:[#allocation0]]
  $region42: #{_lambda_.1} parent=0
    _
  %s11 = ssub.s32 1, %s9
  %s12 = scalar_select 0, %s11, %s9
  // Predicated region
  $region2: #{_lambda_.1} parent=0 // pred_check
    _
  $region3: #{_lambda_.1} parent=0 // pred_check_branch
    %14 = sbr.rel (0) target = $region5
  $region4: #{_lambda_.1} parent=0 // pred_region
    _
  $region5: #{_lambda_.1} parent=0 // pred_fallthru
    _
  // Predicated region
  $region6: #{_lambda_.1} parent=0 // pred_check
    _
  $region7: #{_lambda_.1} parent=0 // pred_check_branch
    %16 = sbr.rel (0) target = $region9
  $region8: #{_lambda_.1} parent=0 // pred_region
    _
  $region9: #{_lambda_.1} parent=0 // pred_fallthru
    _
  // Predicated region
  $region10: #{_lambda_.1} parent=0 // pred_check
    _
  $region11: #{_lambda_.1} parent=0 // pred_check_branch
    %18 = sbr.rel (0) target = $region13
  $region12: #{_lambda_.1} parent=0 // pred_region
    _
  $region13: #{_lambda_.1} parent=0 // pred_fallthru
    _
  // Predicated region
  $region14: #{_lambda_.1} parent=0 // pred_check
    _
  $region15: #{_lambda_.1} parent=0 // pred_check_branch
    %20 = sbr.rel (0) target = $region17
  $region16: #{_lambda_.1} parent=0 // pred_region
    _
  $region17: #{_lambda_.1} parent=0 // pred_fallthru
    _
  // Predicated region
  $region18: #{_lambda_.1} parent=0 // pred_check
    _
  $region19: #{_lambda_.1} parent=0 // pred_check_branch
    %22 = sbr.rel (0) target = $region21
  $region20: #{_lambda_.1} parent=0 // pred_region
    _
  $region21: #{_lambda_.1} parent=0 // pred_fallthru
    _
  // Predicated region
  $region22: #{_lambda_.1} parent=0 // pred_check
    _
  $region23: #{_lambda_.1} parent=0 // pred_check_branch
    %24 = sbr.rel (0) target = $region25
  $region24: #{_lambda_.1} parent=0 // pred_region
    _
  $region25: #{_lambda_.1} parent=0 // pred_fallthru
    _
  // Predicated region
  $region26: #{_lambda_.1} parent=0 // pred_check
    _
  $region27: #{_lambda_.1} parent=0 // pred_check_branch
    %26 = sbr.rel (0) target = $region29
  $region28: #{_lambda_.1} parent=0 // pred_region
    _
  $region29: #{_lambda_.1} parent=0 // pred_fallthru
    _
  // Predicated region
  $region30: #{_lambda_.1} parent=0 // pred_check
    _
  $region31: #{_lambda_.1} parent=0 // pred_check_branch
    %28 = sbr.rel (0) target = $region33
  $region32: #{_lambda_.1} parent=0 // pred_region
    _
  $region33: #{_lambda_.1} parent=0 // pred_fallthru
    _
  %v30 = vld [vmem:[%s0] sm:$0xff]
  %v31 = vld [vmem:[%s0 + $0x8] sm:$0xff]
  %v32 = vld [vmem:[%s0 + $0x10] sm:$0xff]
  %v33 = vld [vmem:[%s0 + $0x18] sm:$0xff]
  %v34 = vld [vmem:[%s0 + $0x20] sm:$0xff]
  %v35 = vld [vmem:[%s0 + $0x28] sm:$0xff]
  %v36 = vld [vmem:[%s6] sm:$0xf]
  %v37 = vpack.c.bf16 %v31, %v30
  %v38 = vpack.c.bf16 %v33, %v32
  %v39 = vpack.c.bf16 %v35, %v34
  %v40 = vld [vmem:[%s7] sm:$0x1]
  %v41 = vperm.slane %v40, 0
  %vm42 = vcmask 64512
  %v44 = vsel %vm42, %v37, 0
  %v47 = vsel %vm42, %v38, 0
  %v50 = vsel %vm42, %v39, 0
  %vm52 = vcmask 1043456
  %v54 = vsel %vm52, %v36, 0
  %56 = vmatpush.bf16.msra.mxu0 0
  %57 = vmatpush.bf16.msra.mxu0 0
  %58 = vmatpush.bf16.msra.mxu0 0
  %59 = vmatpush.bf16.msra.mxu0 0
  %60 = vmatpush.bf16.msra.mxu0 0
  %61 = vmatpush.bf16.msra.mxu0 0
  %62 = vmatpush.bf16.msra.mxu0 0
  %63 = vmatpush.bf16.msra.mxu0 %v54
  %64 = vmatmul.bf16.gmra.mxu0 %v44
  %v65 = vpop.f32.mrf.mxu0
  %v66 = vadd.f32 %v41, %v65
  %v67 = vpop.f32.mrf.mxu0
  %v68 = vadd.f32 %v41, %v67
  %69 = vmatmul.bf16.gmra.mxu0 %v47
  %v70 = vpop.f32.mrf.mxu0
  %v71 = vadd.f32 %v41, %v70
  %v72 = vpop.f32.mrf.mxu0
  %v73 = vadd.f32 %v41, %v72
  %74 = vmatmul.bf16.gmra.mxu0 %v50
  %v75 = vpop.f32.mrf.mxu0
  %v76 = vadd.f32 %v41, %v75
  %v77 = vpop.f32.mrf.mxu0
  %v78 = vadd.f32 %v41, %v77
  %79 = vdwg.mxu0
  %v80 = vmax.f32 %v66, 0.0
  %v81 = vmax.f32 %v68, 0.0
  %v82 = vmax.f32 %v71, 0.0
  %v83 = vmax.f32 %v73, 0.0
  %v84 = vmax.f32 %v76, 0.0
  %v85 = vmax.f32 %v78, 0.0
  %v86 = vld [vmem:[%s6 + $0x4] sm:$0xf]
  %v87 = vld [vmem:[%s6 + $0x8] sm:$0xf]
  %v88 = vld [vmem:[%s6 + $0xc] sm:$0xf]
  %v89 = vld [vmem:[%s6 + $0x10] sm:$0xf]
  %v90 = vpack.c.bf16 %v81, %v80
  %v91 = vpack.c.bf16 %v83, %v82
  %v92 = vpack.c.bf16 %v85, %v84
  %v93 = vld [vmem:[%s7 + $0x1] sm:$0x1]
  %v94 = vperm.slane %v93, 0
  %v99 = vunpack.c.l.b16 %v86
  %v100 = vunpack.c.l.b16 %v87
  %v101 = vunpack.c.l.b16 %v88
  %v102 = vunpack.c.l.b16 %v89
  %v103 = vpack.c.b16 %v100, %v99
  %v104 = vpack.c.b16 %v102, %v101
  %vm107 = vcmask 261120
  %v109 = vsel %vm107, %v90, 0
  %v112 = vsel %vm107, %v91, 0
  %v115 = vsel %vm107, %v92, 0
  %117 = vmatpush.bf16.msra.mxu0 0
  %118 = vmatpush.bf16.msra.mxu0 0
  %119 = vmatpush.bf16.msra.mxu0 0
  %120 = vmatpush.bf16.msra.mxu0 0
  %121 = vmatpush.bf16.msra.mxu0 0
  %122 = vmatpush.bf16.msra.mxu0 0
  %123 = vmatpush.bf16.msra.mxu0 %v104
  %124 = vmatpush.bf16.msra.mxu0 %v103
  %125 = vmatmul.bf16.gmra.mxu0 %v109
  %v126 = vpop.f32.mrf.mxu0
  %v127 = vadd.f32 %v94, %v126
  %v128 = vpop.f32.mrf.mxu0
  %v129 = vadd.f32 %v94, %v128
  %130 = vmatmul.bf16.gmra.mxu0 %v112
  %v131 = vpop.f32.mrf.mxu0
  %v132 = vadd.f32 %v94, %v131
  %v133 = vpop.f32.mrf.mxu0
  %v134 = vadd.f32 %v94, %v133
  %135 = vmatmul.bf16.gmra.mxu0 %v115
  %v136 = vpop.f32.mrf.mxu0
  %v137 = vadd.f32 %v94, %v136
  %v138 = vpop.f32.mrf.mxu0
  %v139 = vadd.f32 %v94, %v138
  %140 = vdwg.mxu0
  %v141 = vmax.f32 %v127, 0.0
  %v142 = vmax.f32 %v129, 0.0
  %v143 = vmax.f32 %v132, 0.0
  %v144 = vmax.f32 %v134, 0.0
  %v145 = vmax.f32 %v137, 0.0
  %v146 = vmax.f32 %v139, 0.0
  %v147 = vld [vmem:[%s6 + $0x14] sm:$0xf]
  %v148 = vld [vmem:[%s6 + $0x18] sm:$0xf]
  %v149 = vld [vmem:[%s6 + $0x1c] sm:$0xf]
  %v150 = vld [vmem:[%s6 + $0x20] sm:$0xf]
  %v151 = vpack.c.bf16 %v142, %v141
  %v152 = vpack.c.bf16 %v144, %v143
  %v153 = vpack.c.bf16 %v146, %v145
  %v154 = vld [vmem:[%s7 + $0x2] sm:$0x1]
  %v155 = vperm.slane %v154, 0
  %v160 = vunpack.c.l.b16 %v147
  %v161 = vunpack.c.l.b16 %v148
  %v162 = vunpack.c.l.b16 %v149
  %v163 = vunpack.c.l.b16 %v150
  %v164 = vpack.c.b16 %v161, %v160
  %v165 = vpack.c.b16 %v163, %v162
  %v169 = vsel %vm107, %v151, 0
  %v172 = vsel %vm107, %v152, 0
  %v175 = vsel %vm107, %v153, 0
  %177 = vmatpush.bf16.msra.mxu0 0
  %178 = vmatpush.bf16.msra.mxu0 0
  %179 = vmatpush.bf16.msra.mxu0 0
  %180 = vmatpush.bf16.msra.mxu0 0
  %181 = vmatpush.bf16.msra.mxu0 0
  %182 = vmatpush.bf16.msra.mxu0 0
  %183 = vmatpush.bf16.msra.mxu0 %v165
  %184 = vmatpush.bf16.msra.mxu0 %v164
  %185 = vmatmul.bf16.gmra.mxu0 %v169
  %v186 = vpop.f32.mrf.mxu0
  %v187 = vadd.f32 %v155, %v186
  %v188 = vpop.f32.mrf.mxu0
  %v189 = vadd.f32 %v155, %v188
  %190 = vmatmul.bf16.gmra.mxu0 %v172
  %v191 = vpop.f32.mrf.mxu0
  %v192 = vadd.f32 %v155, %v191
  %v193 = vpop.f32.mrf.mxu0
  %v194 = vadd.f32 %v155, %v193
  %195 = vmatmul.bf16.gmra.mxu0 %v175
  %v196 = vpop.f32.mrf.mxu0
  %v197 = vadd.f32 %v155, %v196
  %v198 = vpop.f32.mrf.mxu0
  %v199 = vadd.f32 %v155, %v198
  %200 = vdwg.mxu0
  %v201 = vsel %vm107, %v187, 0.0
  %202 = vadd.xlane.f32.xlu0 %v201
  %v203 = vpop.xlane.xlu0 %202
  %v204 = vsel %vm107, %v189, 0.0
  %205 = vadd.xlane.f32.xlu0 %v204
  %v206 = vpop.xlane.xlu0 %205
  %v207 = vsel %vm107, %v192, 0.0
  %208 = vadd.xlane.f32.xlu0 %v207
  %v209 = vpop.xlane.xlu0 %208
  %v210 = vsel %vm107, %v194, 0.0
  %211 = vadd.xlane.f32.xlu0 %v210
  %v212 = vpop.xlane.xlu0 %211
  %v213 = vsel %vm107, %v197, 0.0
  %214 = vadd.xlane.f32.xlu0 %v213
  %v215 = vpop.xlane.xlu0 %214
  %v216 = vsel %vm107, %v199, 0.0
  %217 = vadd.xlane.f32.xlu0 %v216
  %v218 = vpop.xlane.xlu0 %217
  %v219 = vrcp.pop 32.0
  %v220 = vmul.f32 32.0, %v219
  %v221 = vsub.f32 1.0, %v220
  %v222 = vmul.f32 %v219, %v221
  %v223 = vadd.f32 %v219, %v222
  %vm224 = vweird.f32 %v219
  %v225 = vsel %vm224, %v219, %v223
  %v226 = vmul.f32 %v203, %v225
  %v227 = vmul.f32 %v206, %v225
  %v228 = vmul.f32 %v209, %v225
  %v229 = vmul.f32 %v212, %v225
  %v230 = vmul.f32 %v215, %v225
  %v231 = vmul.f32 %v218, %v225
  %v232 = vsub.f32 %v187, %v226
  %v233 = vsub.f32 %v189, %v227
  %v234 = vsub.f32 %v192, %v228
  %v235 = vsub.f32 %v194, %v229
  %v236 = vsub.f32 %v197, %v230
  %v237 = vsub.f32 %v199, %v231
  %v238 = vmul.f32 %v232, %v232
  %v239 = vmul.f32 %v233, %v233
  %v240 = vmul.f32 %v234, %v234
  %v241 = vmul.f32 %v235, %v235
  %v242 = vmul.f32 %v236, %v236
  %v243 = vmul.f32 %v237, %v237
  %v244 = vsel %vm107, %v238, 0.0
  %245 = vadd.xlane.f32.xlu0 %v244
  %v246 = vpop.xlane.xlu0 %245
  %v247 = vsel %vm107, %v239, 0.0
  %248 = vadd.xlane.f32.xlu0 %v247
  %v249 = vpop.xlane.xlu0 %248
  %v250 = vsel %vm107, %v240, 0.0
  %251 = vadd.xlane.f32.xlu0 %v250
  %v252 = vpop.xlane.xlu0 %251
  %v253 = vsel %vm107, %v241, 0.0
  %254 = vadd.xlane.f32.xlu0 %v253
  %v255 = vpop.xlane.xlu0 %254
  %v256 = vsel %vm107, %v242, 0.0
  %257 = vadd.xlane.f32.xlu0 %v256
  %v258 = vpop.xlane.xlu0 %257
  %v259 = vsel %vm107, %v243, 0.0
  %260 = vadd.xlane.f32.xlu0 %v259
  %v261 = vpop.xlane.xlu0 %260
  %v262 = vmul.f32 %v246, %v225
  %v263 = vmul.f32 %v249, %v225
  %v264 = vmul.f32 %v252, %v225
  %v265 = vmul.f32 %v255, %v225
  %v266 = vmul.f32 %v258, %v225
  %v267 = vmul.f32 %v261, %v225
  %v268 = vadd.f32 %v262, 1e-05
  %v269 = vadd.f32 %v263, 1e-05
  %v270 = vadd.f32 %v264, 1e-05
  %v271 = vadd.f32 %v265, 1e-05
  %v272 = vadd.f32 %v266, 1e-05
  %v273 = vadd.f32 %v267, 1e-05
  %v274 = vrsqrt.pop %v268
  %v275 = vmul.f32 %v274, %v268
  %v276 = vmul.f32 %v275, %v274
  %v277 = vmul.f32 0.5, %v276
  %v278 = vsub.f32 1.5, %v277
  %v279 = vmul.f32 %v274, %v278
  %vm280 = vweird.f32 %v268
  %vm281 = vweird.f32 %v274
  %vm282 = vmor %vm280, %vm281
  %v283 = vsel %vm282, %v274, %v279
  %v284 = vrsqrt.pop %v269
  %v285 = vmul.f32 %v284, %v269
  %v286 = vmul.f32 %v285, %v284
  %v287 = vmul.f32 0.5, %v286
  %v288 = vsub.f32 1.5, %v287
  %v289 = vmul.f32 %v284, %v288
  %vm290 = vweird.f32 %v269
  %vm291 = vweird.f32 %v284
  %vm292 = vmor %vm290, %vm291
  %v293 = vsel %vm292, %v284, %v289
  %v294 = vrsqrt.pop %v270
  %v295 = vmul.f32 %v294, %v270
  %v296 = vmul.f32 %v295, %v294
  %v297 = vmul.f32 0.5, %v296
  %v298 = vsub.f32 1.5, %v297
  %v299 = vmul.f32 %v294, %v298
  %vm300 = vweird.f32 %v270
  %vm301 = vweird.f32 %v294
  %vm302 = vmor %vm300, %vm301
  %v303 = vsel %vm302, %v294, %v299
  %v304 = vrsqrt.pop %v271
  %v305 = vmul.f32 %v304, %v271
  %v306 = vmul.f32 %v305, %v304
  %v307 = vmul.f32 0.5, %v306
  %v308 = vsub.f32 1.5, %v307
  %v309 = vmul.f32 %v304, %v308
  %vm310 = vweird.f32 %v271
  %vm311 = vweird.f32 %v304
  %vm312 = vmor %vm310, %vm311
  %v313 = vsel %vm312, %v304, %v309
  %v314 = vrsqrt.pop %v272
  %v315 = vmul.f32 %v314, %v272
  %v316 = vmul.f32 %v315, %v314
  %v317 = vmul.f32 0.5, %v316
  %v318 = vsub.f32 1.5, %v317
  %v319 = vmul.f32 %v314, %v318
  %vm320 = vweird.f32 %v272
  %vm321 = vweird.f32 %v314
  %vm322 = vmor %vm320, %vm321
  %v323 = vsel %vm322, %v314, %v319
  %v324 = vrsqrt.pop %v273
  %v325 = vmul.f32 %v324, %v273
  %v326 = vmul.f32 %v325, %v324
  %v327 = vmul.f32 0.5, %v326
  %v328 = vsub.f32 1.5, %v327
  %v329 = vmul.f32 %v324, %v328
  %vm330 = vweird.f32 %v273
  %vm331 = vweird.f32 %v324
  %vm332 = vmor %vm330, %vm331
  %v333 = vsel %vm332, %v324, %v329
  %v334 = vmul.f32 %v232, %v283
  %v335 = vmul.f32 %v233, %v293
  %v336 = vmul.f32 %v234, %v303
  %v337 = vmul.f32 %v235, %v313
  %v338 = vmul.f32 %v236, %v323
  %v339 = vmul.f32 %v237, %v333
  %v340 = vld [vmem:[%s7 + $0x3] sm:$0x1]
  %v341 = vperm.slane %v340, 0
  %v342 = vmul.f32 %v334, %v341
  %v343 = vmul.f32 %v335, %v341
  %v344 = vmul.f32 %v336, %v341
  %v345 = vmul.f32 %v337, %v341
  %v346 = vmul.f32 %v338, %v341
  %v347 = vmul.f32 %v339, %v341
  %v348 = vld [vmem:[%s7 + $0x4] sm:$0x1]
  %v349 = vperm.slane %v348, 0
  %v350 = vadd.f32 %v342, %v349
  %v351 = vadd.f32 %v343, %v349
  %v352 = vadd.f32 %v344, %v349
  %v353 = vadd.f32 %v345, %v349
  %v354 = vadd.f32 %v346, %v349
  %v355 = vadd.f32 %v347, %v349
  %v356 = vld [vmem:[%s1] sm:$0xff]
  %v357 = vld [vmem:[%s1 + $0x8] sm:$0xff]
  %v358 = vld [vmem:[%s1 + $0x10] sm:$0xff]
  %v359 = vld [vmem:[%s1 + $0x18] sm:$0xff]
  %v360 = vld [vmem:[%s1 + $0x20] sm:$0xff]
  %v361 = vld [vmem:[%s1 + $0x28] sm:$0xff]
  %v362 = vld [vmem:[%s1 + $0x30] sm:$0xff]
  %v363 = vld [vmem:[%s1 + $0x38] sm:$0xff]
  %v364 = vld [vmem:[%s1 + $0x40] sm:$0xff]
  %v365 = vld [vmem:[%s1 + $0x48] sm:$0xff]
  %v366 = vld [vmem:[%s1 + $0x50] sm:$0xff]
  %v367 = vld [vmem:[%s1 + $0x58] sm:$0xff]
  %v368 = vld [vmem:[%s6 + $0x24] sm:$0xf]
  %v369 = vpack.c.bf16 %v357, %v356
  %v370 = vpack.c.bf16 %v359, %v358
  %v371 = vpack.c.bf16 %v361, %v360
  %v372 = vpack.c.bf16 %v363, %v362
  %v373 = vpack.c.bf16 %v365, %v364
  %v374 = vpack.c.bf16 %v367, %v366
  %v375 = vld [vmem:[%s7 + $0x5] sm:$0x1]
  %v376 = vperm.slane %v375, 0
  %v378 = vsel %vm42, %v369, 0
  %v381 = vsel %vm42, %v370, 0
  %v384 = vsel %vm42, %v371, 0
  %v387 = vsel %vm42, %v372, 0
  %v390 = vsel %vm42, %v373, 0
  %v393 = vsel %vm42, %v374, 0
  %v396 = vsel %vm52, %v368, 0
  %398 = vmatpush.bf16.msra.mxu0 0
  %399 = vmatpush.bf16.msra.mxu0 0
  %400 = vmatpush.bf16.msra.mxu0 0
  %401 = vmatpush.bf16.msra.mxu0 0
  %402 = vmatpush.bf16.msra.mxu0 0
  %403 = vmatpush.bf16.msra.mxu0 0
  %404 = vmatpush.bf16.msra.mxu0 0
  %405 = vmatpush.bf16.msra.mxu0 %v396
  %406 = vmatmul.bf16.gmra.mxu0 %v378
  %v407 = vpop.f32.mrf.mxu0
  %v408 = vadd.f32 %v376, %v407
  %v409 = vpop.f32.mrf.mxu0
  %v410 = vadd.f32 %v376, %v409
  %411 = vmatmul.bf16.gmra.mxu0 %v381
  %v412 = vpop.f32.mrf.mxu0
  %v413 = vadd.f32 %v376, %v412
  %v414 = vpop.f32.mrf.mxu0
  %v415 = vadd.f32 %v376, %v414
  %416 = vmatmul.bf16.gmra.mxu0 %v384
  %v417 = vpop.f32.mrf.mxu0
  %v418 = vadd.f32 %v376, %v417
  %v419 = vpop.f32.mrf.mxu0
  %v420 = vadd.f32 %v376, %v419
  %421 = vmatmul.bf16.gmra.mxu0 %v387
  %v422 = vpop.f32.mrf.mxu0
  %v423 = vadd.f32 %v376, %v422
  %v424 = vpop.f32.mrf.mxu0
  %v425 = vadd.f32 %v376, %v424
  %426 = vmatmul.bf16.gmra.mxu0 %v390
  %v427 = vpop.f32.mrf.mxu0
  %v428 = vadd.f32 %v376, %v427
  %v429 = vpop.f32.mrf.mxu0
  %v430 = vadd.f32 %v376, %v429
  %431 = vmatmul.bf16.gmra.mxu0 %v393
  %v432 = vpop.f32.mrf.mxu0
  %v433 = vadd.f32 %v376, %v432
  %v434 = vpop.f32.mrf.mxu0
  %v435 = vadd.f32 %v376, %v434
  %436 = vdwg.mxu0
  %v437 = vmax.f32 %v408, 0.0
  %v438 = vmax.f32 %v410, 0.0
  %v439 = vmax.f32 %v413, 0.0
  %v440 = vmax.f32 %v415, 0.0
  %v441 = vmax.f32 %v418, 0.0
  %v442 = vmax.f32 %v420, 0.0
  %v443 = vmax.f32 %v423, 0.0
  %v444 = vmax.f32 %v425, 0.0
  %v445 = vmax.f32 %v428, 0.0
  %v446 = vmax.f32 %v430, 0.0
  %v447 = vmax.f32 %v433, 0.0
  %v448 = vmax.f32 %v435, 0.0
  %v449 = vld [vmem:[%s6 + $0x28] sm:$0xf]
  %v450 = vld [vmem:[%s6 + $0x2c] sm:$0xf]
  %v451 = vld [vmem:[%s6 + $0x30] sm:$0xf]
  %v452 = vld [vmem:[%s6 + $0x34] sm:$0xf]
  %v453 = vpack.c.bf16 %v438, %v437
  %v454 = vpack.c.bf16 %v440, %v439
  %v455 = vpack.c.bf16 %v442, %v441
  %v456 = vpack.c.bf16 %v444, %v443
  %v457 = vpack.c.bf16 %v446, %v445
  %v458 = vpack.c.bf16 %v448, %v447
  %v459 = vld [vmem:[%s7 + $0x6] sm:$0x1]
  %v460 = vperm.slane %v459, 0
  %v465 = vunpack.c.l.b16 %v449
  %v466 = vunpack.c.l.b16 %v450
  %v467 = vunpack.c.l.b16 %v451
  %v468 = vunpack.c.l.b16 %v452
  %v469 = vpack.c.b16 %v466, %v465
  %v470 = vpack.c.b16 %v468, %v467
  %v474 = vsel %vm107, %v453, 0
  %v477 = vsel %vm107, %v454, 0
  %v480 = vsel %vm107, %v455, 0
  %v483 = vsel %vm107, %v456, 0
  %v486 = vsel %vm107, %v457, 0
  %v489 = vsel %vm107, %v458, 0
  %491 = vmatpush.bf16.msra.mxu0 0
  %492 = vmatpush.bf16.msra.mxu0 0
  %493 = vmatpush.bf16.msra.mxu0 0
  %494 = vmatpush.bf16.msra.mxu0 0
  %495 = vmatpush.bf16.msra.mxu0 0
  %496 = vmatpush.bf16.msra.mxu0 0
  %497 = vmatpush.bf16.msra.mxu0 %v470
  %498 = vmatpush.bf16.msra.mxu0 %v469
  %499 = vmatmul.bf16.gmra.mxu0 %v474
  %v500 = vpop.f32.mrf.mxu0
  %v501 = vadd.f32 %v460, %v500
  %v502 = vpop.f32.mrf.mxu0
  %v503 = vadd.f32 %v460, %v502
  %504 = vmatmul.bf16.gmra.mxu0 %v477
  %v505 = vpop.f32.mrf.mxu0
  %v506 = vadd.f32 %v460, %v505
  %v507 = vpop.f32.mrf.mxu0
  %v508 = vadd.f32 %v460, %v507
  %509 = vmatmul.bf16.gmra.mxu0 %v480
  %v510 = vpop.f32.mrf.mxu0
  %v511 = vadd.f32 %v460, %v510
  %v512 = vpop.f32.mrf.mxu0
  %v513 = vadd.f32 %v460, %v512
  %514 = vmatmul.bf16.gmra.mxu0 %v483
  %v515 = vpop.f32.mrf.mxu0
  %v516 = vadd.f32 %v460, %v515
  %v517 = vpop.f32.mrf.mxu0
  %v518 = vadd.f32 %v460, %v517
  %519 = vmatmul.bf16.gmra.mxu0 %v486
  %v520 = vpop.f32.mrf.mxu0
  %v521 = vadd.f32 %v460, %v520
  %v522 = vpop.f32.mrf.mxu0
  %v523 = vadd.f32 %v460, %v522
  %524 = vmatmul.bf16.gmra.mxu0 %v489
  %v525 = vpop.f32.mrf.mxu0
  %v526 = vadd.f32 %v460, %v525
  %v527 = vpop.f32.mrf.mxu0
  %v528 = vadd.f32 %v460, %v527
  %529 = vdwg.mxu0
  %v530 = vmax.f32 %v501, 0.0
  %v531 = vmax.f32 %v503, 0.0
  %v532 = vmax.f32 %v506, 0.0
  %v533 = vmax.f32 %v508, 0.0
  %v534 = vmax.f32 %v511, 0.0
  %v535 = vmax.f32 %v513, 0.0
  %v536 = vmax.f32 %v516, 0.0
  %v537 = vmax.f32 %v518, 0.0
  %v538 = vmax.f32 %v521, 0.0
  %v539 = vmax.f32 %v523, 0.0
  %v540 = vmax.f32 %v526, 0.0
  %v541 = vmax.f32 %v528, 0.0
  %v542 = vld [vmem:[%s6 + $0x38] sm:$0xf]
  %v543 = vld [vmem:[%s6 + $0x3c] sm:$0xf]
  %v544 = vld [vmem:[%s6 + $0x40] sm:$0xf]
  %v545 = vld [vmem:[%s6 + $0x44] sm:$0xf]
  %v546 = vpack.c.bf16 %v531, %v530
  %v547 = vpack.c.bf16 %v533, %v532
  %v548 = vpack.c.bf16 %v535, %v534
  %v549 = vpack.c.bf16 %v537, %v536
  %v550 = vpack.c.bf16 %v539, %v538
  %v551 = vpack.c.bf16 %v541, %v540
  %v552 = vld [vmem:[%s7 + $0x7] sm:$0x1]
  %v553 = vperm.slane %v552, 0
  %v558 = vunpack.c.l.b16 %v542
  %v559 = vunpack.c.l.b16 %v543
  %v560 = vunpack.c.l.b16 %v544
  %v561 = vunpack.c.l.b16 %v545
  %v562 = vpack.c.b16 %v559, %v558
  %v563 = vpack.c.b16 %v561, %v560
  %v567 = vsel %vm107, %v546, 0
  %v570 = vsel %vm107, %v547, 0
  %v573 = vsel %vm107, %v548, 0
  %v576 = vsel %vm107, %v549, 0
  %v579 = vsel %vm107, %v550, 0
  %v582 = vsel %vm107, %v551, 0
  %584 = vmatpush.bf16.msra.mxu0 0
  %585 = vmatpush.bf16.msra.mxu0 0
  %586 = vmatpush.bf16.msra.mxu0 0
  %587 = vmatpush.bf16.msra.mxu0 0
  %588 = vmatpush.bf16.msra.mxu0 0
  %589 = vmatpush.bf16.msra.mxu0 0
  %590 = vmatpush.bf16.msra.mxu0 %v563
  %591 = vmatpush.bf16.msra.mxu0 %v562
  %592 = vmatmul.bf16.gmra.mxu0 %v567
  %v593 = vpop.f32.mrf.mxu0
  %v594 = vadd.f32 %v553, %v593
  %v595 = vpop.f32.mrf.mxu0
  %v596 = vadd.f32 %v553, %v595
  %597 = vmatmul.bf16.gmra.mxu0 %v570
  %v598 = vpop.f32.mrf.mxu0
  %v599 = vadd.f32 %v553, %v598
  %v600 = vpop.f32.mrf.mxu0
  %v601 = vadd.f32 %v553, %v600
  %602 = vmatmul.bf16.gmra.mxu0 %v573
  %v603 = vpop.f32.mrf.mxu0
  %v604 = vadd.f32 %v553, %v603
  %v605 = vpop.f32.mrf.mxu0
  %v606 = vadd.f32 %v553, %v605
  %607 = vmatmul.bf16.gmra.mxu0 %v576
  %v608 = vpop.f32.mrf.mxu0
  %v609 = vadd.f32 %v553, %v608
  %v610 = vpop.f32.mrf.mxu0
  %v611 = vadd.f32 %v553, %v610
  %612 = vmatmul.bf16.gmra.mxu0 %v579
  %v613 = vpop.f32.mrf.mxu0
  %v614 = vadd.f32 %v553, %v613
  %v615 = vpop.f32.mrf.mxu0
  %v616 = vadd.f32 %v553, %v615
  %617 = vmatmul.bf16.gmra.mxu0 %v582
  %v618 = vpop.f32.mrf.mxu0
  %v619 = vadd.f32 %v553, %v618
  %v620 = vpop.f32.mrf.mxu0
  %v621 = vadd.f32 %v553, %v620
  %622 = vdwg.mxu0
  %v623 = vsel %vm107, %v594, 0.0
  %624 = vadd.xlane.f32.xlu0 %v623
  %v625 = vpop.xlane.xlu0 %624
  %v626 = vsel %vm107, %v596, 0.0
  %627 = vadd.xlane.f32.xlu0 %v626
  %v628 = vpop.xlane.xlu0 %627
  %v629 = vsel %vm107, %v599, 0.0
  %630 = vadd.xlane.f32.xlu0 %v629
  %v631 = vpop.xlane.xlu0 %630
  %v632 = vsel %vm107, %v601, 0.0
  %633 = vadd.xlane.f32.xlu0 %v632
  %v634 = vpop.xlane.xlu0 %633
  %v635 = vsel %vm107, %v604, 0.0
  %636 = vadd.xlane.f32.xlu0 %v635
  %v637 = vpop.xlane.xlu0 %636
  %v638 = vsel %vm107, %v606, 0.0
  %639 = vadd.xlane.f32.xlu0 %v638
  %v640 = vpop.xlane.xlu0 %639
  %v641 = vsel %vm107, %v609, 0.0
  %642 = vadd.xlane.f32.xlu0 %v641
  %v643 = vpop.xlane.xlu0 %642
  %v644 = vsel %vm107, %v611, 0.0
  %645 = vadd.xlane.f32.xlu0 %v644
  %v646 = vpop.xlane.xlu0 %645
  %v647 = vsel %vm107, %v614, 0.0
  %648 = vadd.xlane.f32.xlu0 %v647
  %v649 = vpop.xlane.xlu0 %648
  %v650 = vsel %vm107, %v616, 0.0
  %651 = vadd.xlane.f32.xlu0 %v650
  %v652 = vpop.xlane.xlu0 %651
  %v653 = vsel %vm107, %v619, 0.0
  %654 = vadd.xlane.f32.xlu0 %v653
  %v655 = vpop.xlane.xlu0 %654
  %v656 = vsel %vm107, %v621, 0.0
  %657 = vadd.xlane.f32.xlu0 %v656
  %v658 = vpop.xlane.xlu0 %657
  %v659 = vmul.f32 %v625, %v225
  %v660 = vmul.f32 %v628, %v225
  %v661 = vmul.f32 %v631, %v225
  %v662 = vmul.f32 %v634, %v225
  %v663 = vmul.f32 %v637, %v225
  %v664 = vmul.f32 %v640, %v225
  %v665 = vmul.f32 %v643, %v225
  %v666 = vmul.f32 %v646, %v225
  %v667 = vmul.f32 %v649, %v225
  %v668 = vmul.f32 %v652, %v225
  %v669 = vmul.f32 %v655, %v225
  %v670 = vmul.f32 %v658, %v225
  %v671 = vsub.f32 %v594, %v659
  %v672 = vsub.f32 %v596, %v660
  %v673 = vsub.f32 %v599, %v661
  %v674 = vsub.f32 %v601, %v662
  %v675 = vsub.f32 %v604, %v663
  %v676 = vsub.f32 %v606, %v664
  %v677 = vsub.f32 %v609, %v665
  %v678 = vsub.f32 %v611, %v666
  %v679 = vsub.f32 %v614, %v667
  %v680 = vsub.f32 %v616, %v668
  %v681 = vsub.f32 %v619, %v669
  %v682 = vsub.f32 %v621, %v670
  %v683 = vmul.f32 %v671, %v671
  %v684 = vmul.f32 %v672, %v672
  %v685 = vmul.f32 %v673, %v673
  %v686 = vmul.f32 %v674, %v674
  %v687 = vmul.f32 %v675, %v675
  %v688 = vmul.f32 %v676, %v676
  %v689 = vmul.f32 %v677, %v677
  %v690 = vmul.f32 %v678, %v678
  %v691 = vmul.f32 %v679, %v679
  %v692 = vmul.f32 %v680, %v680
  %v693 = vmul.f32 %v681, %v681
  %v694 = vmul.f32 %v682, %v682
  %v695 = vsel %vm107, %v683, 0.0
  %696 = vadd.xlane.f32.xlu0 %v695
  %v697 = vpop.xlane.xlu0 %696
  %v698 = vsel %vm107, %v684, 0.0
  %699 = vadd.xlane.f32.xlu0 %v698
  %v700 = vpop.xlane.xlu0 %699
  %v701 = vsel %vm107, %v685, 0.0
  %702 = vadd.xlane.f32.xlu0 %v701
  %v703 = vpop.xlane.xlu0 %702
  %v704 = vsel %vm107, %v686, 0.0
  %705 = vadd.xlane.f32.xlu0 %v704
  %v706 = vpop.xlane.xlu0 %705
  %v707 = vsel %vm107, %v687, 0.0
  %708 = vadd.xlane.f32.xlu0 %v707
  %v709 = vpop.xlane.xlu0 %708
  %v710 = vsel %vm107, %v688, 0.0
  %711 = vadd.xlane.f32.xlu0 %v710
  %v712 = vpop.xlane.xlu0 %711
  %v713 = vsel %vm107, %v689, 0.0
  %714 = vadd.xlane.f32.xlu0 %v713
  %v715 = vpop.xlane.xlu0 %714
  %v716 = vsel %vm107, %v690, 0.0
  %717 = vadd.xlane.f32.xlu0 %v716
  %v718 = vpop.xlane.xlu0 %717
  %v719 = vsel %vm107, %v691, 0.0
  %720 = vadd.xlane.f32.xlu0 %v719
  %v721 = vpop.xlane.xlu0 %720
  %v722 = vsel %vm107, %v692, 0.0
  %723 = vadd.xlane.f32.xlu0 %v722
  %v724 = vpop.xlane.xlu0 %723
  %v725 = vsel %vm107, %v693, 0.0
  %726 = vadd.xlane.f32.xlu0 %v725
  %v727 = vpop.xlane.xlu0 %726
  %v728 = vsel %vm107, %v694, 0.0
  %729 = vadd.xlane.f32.xlu0 %v728
  %v730 = vpop.xlane.xlu0 %729
  %v731 = vmul.f32 %v697, %v225
  %v732 = vmul.f32 %v700, %v225
  %v733 = vmul.f32 %v703, %v225
  %v734 = vmul.f32 %v706, %v225
  %v735 = vmul.f32 %v709, %v225
  %v736 = vmul.f32 %v712, %v225
  %v737 = vmul.f32 %v715, %v225
  %v738 = vmul.f32 %v718, %v225
  %v739 = vmul.f32 %v721, %v225
  %v740 = vmul.f32 %v724, %v225
  %v741 = vmul.f32 %v727, %v225
  %v742 = vmul.f32 %v730, %v225
  %v743 = vadd.f32 %v731, 1e-05
  %v744 = vadd.f32 %v732, 1e-05
  %v745 = vadd.f32 %v733, 1e-05
  %v746 = vadd.f32 %v734, 1e-05
  %v747 = vadd.f32 %v735, 1e-05
  %v748 = vadd.f32 %v736, 1e-05
  %v749 = vadd.f32 %v737, 1e-05
  %v750 = vadd.f32 %v738, 1e-05
  %v751 = vadd.f32 %v739, 1e-05
  %v752 = vadd.f32 %v740, 1e-05
  %v753 = vadd.f32 %v741, 1e-05
  %v754 = vadd.f32 %v742, 1e-05
  %v755 = vrsqrt.pop %v743
  %v756 = vmul.f32 %v755, %v743
  %v757 = vmul.f32 %v756, %v755
  %v758 = vmul.f32 0.5, %v757
  %v759 = vsub.f32 1.5, %v758
  %v760 = vmul.f32 %v755, %v759
  %vm761 = vweird.f32 %v743
  %vm762 = vweird.f32 %v755
  %vm763 = vmor %vm761, %vm762
  %v764 = vsel %vm763, %v755, %v760
  %v765 = vrsqrt.pop %v744
  %v766 = vmul.f32 %v765, %v744
  %v767 = vmul.f32 %v766, %v765
  %v768 = vmul.f32 0.5, %v767
  %v769 = vsub.f32 1.5, %v768
  %v770 = vmul.f32 %v765, %v769
  %vm771 = vweird.f32 %v744
  %vm772 = vweird.f32 %v765
  %vm773 = vmor %vm771, %vm772
  %v774 = vsel %vm773, %v765, %v770
  %v775 = vrsqrt.pop %v745
  %v776 = vmul.f32 %v775, %v745
  %v777 = vmul.f32 %v776, %v775
  %v778 = vmul.f32 0.5, %v777
  %v779 = vsub.f32 1.5, %v778
  %v780 = vmul.f32 %v775, %v779
  %vm781 = vweird.f32 %v745
  %vm782 = vweird.f32 %v775
  %vm783 = vmor %vm781, %vm782
  %v784 = vsel %vm783, %v775, %v780
  %v785 = vrsqrt.pop %v746
  %v786 = vmul.f32 %v785, %v746
  %v787 = vmul.f32 %v786, %v785
  %v788 = vmul.f32 0.5, %v787
  %v789 = vsub.f32 1.5, %v788
  %v790 = vmul.f32 %v785, %v789
  %vm791 = vweird.f32 %v746
  %vm792 = vweird.f32 %v785
  %vm793 = vmor %vm791, %vm792
  %v794 = vsel %vm793, %v785, %v790
  %v795 = vrsqrt.pop %v747
  %v796 = vmul.f32 %v795, %v747
  %v797 = vmul.f32 %v796, %v795
  %v798 = vmul.f32 0.5, %v797
  %v799 = vsub.f32 1.5, %v798
  %v800 = vmul.f32 %v795, %v799
  %vm801 = vweird.f32 %v747
  %vm802 = vweird.f32 %v795
  %vm803 = vmor %vm801, %vm802
  %v804 = vsel %vm803, %v795, %v800
  %v805 = vrsqrt.pop %v748
  %v806 = vmul.f32 %v805, %v748
  %v807 = vmul.f32 %v806, %v805
  %v808 = vmul.f32 0.5, %v807
  %v809 = vsub.f32 1.5, %v808
  %v810 = vmul.f32 %v805, %v809
  %vm811 = vweird.f32 %v748
  %vm812 = vweird.f32 %v805
  %vm813 = vmor %vm811, %vm812
  %v814 = vsel %vm813, %v805, %v810
  %v815 = vrsqrt.pop %v749
  %v816 = vmul.f32 %v815, %v749
  %v817 = vmul.f32 %v816, %v815
  %v818 = vmul.f32 0.5, %v817
  %v819 = vsub.f32 1.5, %v818
  %v820 = vmul.f32 %v815, %v819
  %vm821 = vweird.f32 %v749
  %vm822 = vweird.f32 %v815
  %vm823 = vmor %vm821, %vm822
  %v824 = vsel %vm823, %v815, %v820
  %v825 = vrsqrt.pop %v750
  %v826 = vmul.f32 %v825, %v750
  %v827 = vmul.f32 %v826, %v825
  %v828 = vmul.f32 0.5, %v827
  %v829 = vsub.f32 1.5, %v828
  %v830 = vmul.f32 %v825, %v829
  %vm831 = vweird.f32 %v750
  %vm832 = vweird.f32 %v825
  %vm833 = vmor %vm831, %vm832
  %v834 = vsel %vm833, %v825, %v830
  %v835 = vrsqrt.pop %v751
  %v836 = vmul.f32 %v835, %v751
  %v837 = vmul.f32 %v836, %v835
  %v838 = vmul.f32 0.5, %v837
  %v839 = vsub.f32 1.5, %v838
  %v840 = vmul.f32 %v835, %v839
  %vm841 = vweird.f32 %v751
  %vm842 = vweird.f32 %v835
  %vm843 = vmor %vm841, %vm842
  %v844 = vsel %vm843, %v835, %v840
  %v845 = vrsqrt.pop %v752
  %v846 = vmul.f32 %v845, %v752
  %v847 = vmul.f32 %v846, %v845
  %v848 = vmul.f32 0.5, %v847
  %v849 = vsub.f32 1.5, %v848
  %v850 = vmul.f32 %v845, %v849
  %vm851 = vweird.f32 %v752
  %vm852 = vweird.f32 %v845
  %vm853 = vmor %vm851, %vm852
  %v854 = vsel %vm853, %v845, %v850
  %v855 = vrsqrt.pop %v753
  %v856 = vmul.f32 %v855, %v753
  %v857 = vmul.f32 %v856, %v855
  %v858 = vmul.f32 0.5, %v857
  %v859 = vsub.f32 1.5, %v858
  %v860 = vmul.f32 %v855, %v859
  %vm861 = vweird.f32 %v753
  %vm862 = vweird.f32 %v855
  %vm863 = vmor %vm861, %vm862
  %v864 = vsel %vm863, %v855, %v860
  %v865 = vrsqrt.pop %v754
  %v866 = vmul.f32 %v865, %v754
  %v867 = vmul.f32 %v866, %v865
  %v868 = vmul.f32 0.5, %v867
  %v869 = vsub.f32 1.5, %v868
  %v870 = vmul.f32 %v865, %v869
  %vm871 = vweird.f32 %v754
  %vm872 = vweird.f32 %v865
  %vm873 = vmor %vm871, %vm872
  %v874 = vsel %vm873, %v865, %v870
  %v875 = vmul.f32 %v671, %v764
  %v876 = vmul.f32 %v672, %v774
  %v877 = vmul.f32 %v673, %v784
  %v878 = vmul.f32 %v674, %v794
  %v879 = vmul.f32 %v675, %v804
  %v880 = vmul.f32 %v676, %v814
  %v881 = vmul.f32 %v677, %v824
  %v882 = vmul.f32 %v678, %v834
  %v883 = vmul.f32 %v679, %v844
  %v884 = vmul.f32 %v680, %v854
  %v885 = vmul.f32 %v681, %v864
  %v886 = vmul.f32 %v682, %v874
  %v887 = vld [vmem:[%s7 + $0x8] sm:$0x1]
  %v888 = vperm.slane %v887, 0
  %v889 = vmul.f32 %v875, %v888
  %v890 = vmul.f32 %v876, %v888
  %v891 = vmul.f32 %v877, %v888
  %v892 = vmul.f32 %v878, %v888
  %v893 = vmul.f32 %v879, %v888
  %v894 = vmul.f32 %v880, %v888
  %v895 = vmul.f32 %v881, %v888
  %v896 = vmul.f32 %v882, %v888
  %v897 = vmul.f32 %v883, %v888
  %v898 = vmul.f32 %v884, %v888
  %v899 = vmul.f32 %v885, %v888
  %v900 = vmul.f32 %v886, %v888
  %v901 = vld [vmem:[%s7 + $0x9] sm:$0x1]
  %v902 = vperm.slane %v901, 0
  %v903 = vadd.f32 %v889, %v902
  %v904 = vadd.f32 %v890, %v902
  %v905 = vadd.f32 %v891, %v902
  %v906 = vadd.f32 %v892, %v902
  %v907 = vadd.f32 %v893, %v902
  %v908 = vadd.f32 %v894, %v902
  %v909 = vadd.f32 %v895, %v902
  %v910 = vadd.f32 %v896, %v902
  %v911 = vadd.f32 %v897, %v902
  %v912 = vadd.f32 %v898, %v902
  %v913 = vadd.f32 %v899, %v902
  %v914 = vadd.f32 %v900, %v902
  %v915 = vld [vmem:[%s2] sm:$0xff]
  %v916 = vld [vmem:[%s2 + $0x8] sm:$0xff]
  %v917 = vld [vmem:[%s2 + $0x10] sm:$0xff]
  %v918 = vld [vmem:[%s2 + $0x18] sm:$0xff]
  %v919 = vld [vmem:[%s2 + $0x20] sm:$0xff]
  %v920 = vld [vmem:[%s2 + $0x28] sm:$0xff]
  %v921 = vld [vmem:[%s2 + $0x30] sm:$0xff]
  %v922 = vld [vmem:[%s2 + $0x38] sm:$0xff]
  %v923 = vld [vmem:[%s2 + $0x40] sm:$0xff]
  %v924 = vld [vmem:[%s2 + $0x48] sm:$0xff]
  %v925 = vld [vmem:[%s6 + $0x48] sm:$0xf]
  %v926 = vpack.c.bf16 %v916, %v915
  %v927 = vpack.c.bf16 %v918, %v917
  %v928 = vpack.c.bf16 %v920, %v919
  %v929 = vpack.c.bf16 %v922, %v921
  %v930 = vpack.c.bf16 %v924, %v923
  %v931 = vld [vmem:[%s7 + $0xa] sm:$0x1]
  %v932 = vperm.slane %v931, 0
  %v934 = vsel %vm42, %v926, 0
  %v937 = vsel %vm42, %v927, 0
  %v940 = vsel %vm42, %v928, 0
  %v943 = vsel %vm42, %v929, 0
  %v946 = vsel %vm42, %v930, 0
  %v949 = vsel %vm52, %v925, 0
  %951 = vmatpush.bf16.msra.mxu0 0
  %952 = vmatpush.bf16.msra.mxu0 0
  %953 = vmatpush.bf16.msra.mxu0 0
  %954 = vmatpush.bf16.msra.mxu0 0
  %955 = vmatpush.bf16.msra.mxu0 0
  %956 = vmatpush.bf16.msra.mxu0 0
  %957 = vmatpush.bf16.msra.mxu0 0
  %958 = vmatpush.bf16.msra.mxu0 %v949
  %959 = vmatmul.bf16.gmra.mxu0 %v934
  %v960 = vpop.f32.mrf.mxu0
  %v961 = vadd.f32 %v932, %v960
  %v962 = vpop.f32.mrf.mxu0
  %v963 = vadd.f32 %v932, %v962
  %964 = vmatmul.bf16.gmra.mxu0 %v937
  %v965 = vpop.f32.mrf.mxu0
  %v966 = vadd.f32 %v932, %v965
  %v967 = vpop.f32.mrf.mxu0
  %v968 = vadd.f32 %v932, %v967
  %969 = vmatmul.bf16.gmra.mxu0 %v940
  %v970 = vpop.f32.mrf.mxu0
  %v971 = vadd.f32 %v932, %v970
  %v972 = vpop.f32.mrf.mxu0
  %v973 = vadd.f32 %v932, %v972
  %974 = vmatmul.bf16.gmra.mxu0 %v943
  %v975 = vpop.f32.mrf.mxu0
  %v976 = vadd.f32 %v932, %v975
  %v977 = vpop.f32.mrf.mxu0
  %v978 = vadd.f32 %v932, %v977
  %979 = vmatmul.bf16.gmra.mxu0 %v946
  %v980 = vpop.f32.mrf.mxu0
  %v981 = vadd.f32 %v932, %v980
  %v982 = vpop.f32.mrf.mxu0
  %v983 = vadd.f32 %v932, %v982
  %984 = vdwg.mxu0
  %v985 = vmax.f32 %v961, 0.0
  %v986 = vmax.f32 %v963, 0.0
  %v987 = vmax.f32 %v966, 0.0
  %v988 = vmax.f32 %v968, 0.0
  %v989 = vmax.f32 %v971, 0.0
  %v990 = vmax.f32 %v973, 0.0
  %v991 = vmax.f32 %v976, 0.0
  %v992 = vmax.f32 %v978, 0.0
  %v993 = vmax.f32 %v981, 0.0
  %v994 = vmax.f32 %v983, 0.0
  %v995 = vld [vmem:[%s6 + $0x4c] sm:$0xf]
  %v996 = vld [vmem:[%s6 + $0x50] sm:$0xf]
  %v997 = vld [vmem:[%s6 + $0x54] sm:$0xf]
  %v998 = vld [vmem:[%s6 + $0x58] sm:$0xf]
  %v999 = vpack.c.bf16 %v986, %v985
  %v1000 = vpack.c.bf16 %v988, %v987
  %v1001 = vpack.c.bf16 %v990, %v989
  %v1002 = vpack.c.bf16 %v992, %v991
  %v1003 = vpack.c.bf16 %v994, %v993
  %v1004 = vld [vmem:[%s7 + $0xb] sm:$0x1]
  %v1005 = vperm.slane %v1004, 0
  %v1010 = vunpack.c.l.b16 %v995
  %v1011 = vunpack.c.l.b16 %v996
  %v1012 = vunpack.c.l.b16 %v997
  %v1013 = vunpack.c.l.b16 %v998
  %v1014 = vpack.c.b16 %v1011, %v1010
  %v1015 = vpack.c.b16 %v1013, %v1012
  %v1019 = vsel %vm107, %v999, 0
  %v1022 = vsel %vm107, %v1000, 0
  %v1025 = vsel %vm107, %v1001, 0
  %v1028 = vsel %vm107, %v1002, 0
  %v1031 = vsel %vm107, %v1003, 0
  %1033 = vmatpush.bf16.msra.mxu0 0
  %1034 = vmatpush.bf16.msra.mxu0 0
  %1035 = vmatpush.bf16.msra.mxu0 0
  %1036 = vmatpush.bf16.msra.mxu0 0
  %1037 = vmatpush.bf16.msra.mxu0 0
  %1038 = vmatpush.bf16.msra.mxu0 0
  %1039 = vmatpush.bf16.msra.mxu0 %v1015
  %1040 = vmatpush.bf16.msra.mxu0 %v1014
  %1041 = vmatmul.bf16.gmra.mxu0 %v1019
  %v1042 = vpop.f32.mrf.mxu0
  %v1043 = vadd.f32 %v1005, %v1042
  %v1044 = vpop.f32.mrf.mxu0
  %v1045 = vadd.f32 %v1005, %v1044
  %1046 = vmatmul.bf16.gmra.mxu0 %v1022
  %v1047 = vpop.f32.mrf.mxu0
  %v1048 = vadd.f32 %v1005, %v1047
  %v1049 = vpop.f32.mrf.mxu0
  %v1050 = vadd.f32 %v1005, %v1049
  %1051 = vmatmul.bf16.gmra.mxu0 %v1025
  %v1052 = vpop.f32.mrf.mxu0
  %v1053 = vadd.f32 %v1005, %v1052
  %v1054 = vpop.f32.mrf.mxu0
  %v1055 = vadd.f32 %v1005, %v1054
  %1056 = vmatmul.bf16.gmra.mxu0 %v1028
  %v1057 = vpop.f32.mrf.mxu0
  %v1058 = vadd.f32 %v1005, %v1057
  %v1059 = vpop.f32.mrf.mxu0
  %v1060 = vadd.f32 %v1005, %v1059
  %1061 = vmatmul.bf16.gmra.mxu0 %v1031
  %v1062 = vpop.f32.mrf.mxu0
  %v1063 = vadd.f32 %v1005, %v1062
  %v1064 = vpop.f32.mrf.mxu0
  %v1065 = vadd.f32 %v1005, %v1064
  %1066 = vdwg.mxu0
  %v1067 = vmax.f32 %v1043, 0.0
  %v1068 = vmax.f32 %v1045, 0.0
  %v1069 = vmax.f32 %v1048, 0.0
  %v1070 = vmax.f32 %v1050, 0.0
  %v1071 = vmax.f32 %v1053, 0.0
  %v1072 = vmax.f32 %v1055, 0.0
  %v1073 = vmax.f32 %v1058, 0.0
  %v1074 = vmax.f32 %v1060, 0.0
  %v1075 = vmax.f32 %v1063, 0.0
  %v1076 = vmax.f32 %v1065, 0.0
  %v1077 = vld [vmem:[%s6 + $0x5c] sm:$0xf]
  %v1078 = vld [vmem:[%s6 + $0x60] sm:$0xf]
  %v1079 = vld [vmem:[%s6 + $0x64] sm:$0xf]
  %v1080 = vld [vmem:[%s6 + $0x68] sm:$0xf]
  %v1081 = vpack.c.bf16 %v1068, %v1067
  %v1082 = vpack.c.bf16 %v1070, %v1069
  %v1083 = vpack.c.bf16 %v1072, %v1071
  %v1084 = vpack.c.bf16 %v1074, %v1073
  %v1085 = vpack.c.bf16 %v1076, %v1075
  %v1086 = vld [vmem:[%s7 + $0xc] sm:$0x1]
  %v1087 = vperm.slane %v1086, 0
  %v1092 = vunpack.c.l.b16 %v1077
  %v1093 = vunpack.c.l.b16 %v1078
  %v1094 = vunpack.c.l.b16 %v1079
  %v1095 = vunpack.c.l.b16 %v1080
  %v1096 = vpack.c.b16 %v1093, %v1092
  %v1097 = vpack.c.b16 %v1095, %v1094
  %v1101 = vsel %vm107, %v1081, 0
  %v1104 = vsel %vm107, %v1082, 0
  %v1107 = vsel %vm107, %v1083, 0
  %v1110 = vsel %vm107, %v1084, 0
  %v1113 = vsel %vm107, %v1085, 0
  %1115 = vmatpush.bf16.msra.mxu0 0
  %1116 = vmatpush.bf16.msra.mxu0 0
  %1117 = vmatpush.bf16.msra.mxu0 0
  %1118 = vmatpush.bf16.msra.mxu0 0
  %1119 = vmatpush.bf16.msra.mxu0 0
  %1120 = vmatpush.bf16.msra.mxu0 0
  %1121 = vmatpush.bf16.msra.mxu0 %v1097
  %1122 = vmatpush.bf16.msra.mxu0 %v1096
  %1123 = vmatmul.bf16.gmra.mxu0 %v1101
  %v1124 = vpop.f32.mrf.mxu0
  %v1125 = vadd.f32 %v1087, %v1124
  %v1126 = vpop.f32.mrf.mxu0
  %v1127 = vadd.f32 %v1087, %v1126
  %1128 = vmatmul.bf16.gmra.mxu0 %v1104
  %v1129 = vpop.f32.mrf.mxu0
  %v1130 = vadd.f32 %v1087, %v1129
  %v1131 = vpop.f32.mrf.mxu0
  %v1132 = vadd.f32 %v1087, %v1131
  %1133 = vmatmul.bf16.gmra.mxu0 %v1107
  %v1134 = vpop.f32.mrf.mxu0
  %v1135 = vadd.f32 %v1087, %v1134
  %v1136 = vpop.f32.mrf.mxu0
  %v1137 = vadd.f32 %v1087, %v1136
  %1138 = vmatmul.bf16.gmra.mxu0 %v1110
  %v1139 = vpop.f32.mrf.mxu0
  %v1140 = vadd.f32 %v1087, %v1139
  %v1141 = vpop.f32.mrf.mxu0
  %v1142 = vadd.f32 %v1087, %v1141
  %1143 = vmatmul.bf16.gmra.mxu0 %v1113
  %v1144 = vpop.f32.mrf.mxu0
  %v1145 = vadd.f32 %v1087, %v1144
  %v1146 = vpop.f32.mrf.mxu0
  %v1147 = vadd.f32 %v1087, %v1146
  %1148 = vdwg.mxu0
  %v1149 = vsel %vm107, %v1125, 0.0
  %1150 = vadd.xlane.f32.xlu0 %v1149
  %v1151 = vpop.xlane.xlu0 %1150
  %v1152 = vsel %vm107, %v1127, 0.0
  %1153 = vadd.xlane.f32.xlu0 %v1152
  %v1154 = vpop.xlane.xlu0 %1153
  %v1155 = vsel %vm107, %v1130, 0.0
  %1156 = vadd.xlane.f32.xlu0 %v1155
  %v1157 = vpop.xlane.xlu0 %1156
  %v1158 = vsel %vm107, %v1132, 0.0
  %1159 = vadd.xlane.f32.xlu0 %v1158
  %v1160 = vpop.xlane.xlu0 %1159
  %v1161 = vsel %vm107, %v1135, 0.0
  %1162 = vadd.xlane.f32.xlu0 %v1161
  %v1163 = vpop.xlane.xlu0 %1162
  %v1164 = vsel %vm107, %v1137, 0.0
  %1165 = vadd.xlane.f32.xlu0 %v1164
  %v1166 = vpop.xlane.xlu0 %1165
  %v1167 = vsel %vm107, %v1140, 0.0
  %1168 = vadd.xlane.f32.xlu0 %v1167
  %v1169 = vpop.xlane.xlu0 %1168
  %v1170 = vsel %vm107, %v1142, 0.0
  %1171 = vadd.xlane.f32.xlu0 %v1170
  %v1172 = vpop.xlane.xlu0 %1171
  %v1173 = vsel %vm107, %v1145, 0.0
  %1174 = vadd.xlane.f32.xlu0 %v1173
  %v1175 = vpop.xlane.xlu0 %1174
  %v1176 = vsel %vm107, %v1147, 0.0
  %1177 = vadd.xlane.f32.xlu0 %v1176
  %v1178 = vpop.xlane.xlu0 %1177
  %v1179 = vmul.f32 %v1151, %v225
  %v1180 = vmul.f32 %v1154, %v225
  %v1181 = vmul.f32 %v1157, %v225
  %v1182 = vmul.f32 %v1160, %v225
  %v1183 = vmul.f32 %v1163, %v225
  %v1184 = vmul.f32 %v1166, %v225
  %v1185 = vmul.f32 %v1169, %v225
  %v1186 = vmul.f32 %v1172, %v225
  %v1187 = vmul.f32 %v1175, %v225
  %v1188 = vmul.f32 %v1178, %v225
  %v1189 = vsub.f32 %v1125, %v1179
  %v1190 = vsub.f32 %v1127, %v1180
  %v1191 = vsub.f32 %v1130, %v1181
  %v1192 = vsub.f32 %v1132, %v1182
  %v1193 = vsub.f32 %v1135, %v1183
  %v1194 = vsub.f32 %v1137, %v1184
  %v1195 = vsub.f32 %v1140, %v1185
  %v1196 = vsub.f32 %v1142, %v1186
  %v1197 = vsub.f32 %v1145, %v1187
  %v1198 = vsub.f32 %v1147, %v1188
  %v1199 = vmul.f32 %v1189, %v1189
  %v1200 = vmul.f32 %v1190, %v1190
  %v1201 = vmul.f32 %v1191, %v1191
  %v1202 = vmul.f32 %v1192, %v1192
  %v1203 = vmul.f32 %v1193, %v1193
  %v1204 = vmul.f32 %v1194, %v1194
  %v1205 = vmul.f32 %v1195, %v1195
  %v1206 = vmul.f32 %v1196, %v1196
  %v1207 = vmul.f32 %v1197, %v1197
  %v1208 = vmul.f32 %v1198, %v1198
  %v1209 = vsel %vm107, %v1199, 0.0
  %1210 = vadd.xlane.f32.xlu0 %v1209
  %v1211 = vpop.xlane.xlu0 %1210
  %v1212 = vsel %vm107, %v1200, 0.0
  %1213 = vadd.xlane.f32.xlu0 %v1212
  %v1214 = vpop.xlane.xlu0 %1213
  %v1215 = vsel %vm107, %v1201, 0.0
  %1216 = vadd.xlane.f32.xlu0 %v1215
  %v1217 = vpop.xlane.xlu0 %1216
  %v1218 = vsel %vm107, %v1202, 0.0
  %1219 = vadd.xlane.f32.xlu0 %v1218
  %v1220 = vpop.xlane.xlu0 %1219
  %v1221 = vsel %vm107, %v1203, 0.0
  %1222 = vadd.xlane.f32.xlu0 %v1221
  %v1223 = vpop.xlane.xlu0 %1222
  %v1224 = vsel %vm107, %v1204, 0.0
  %1225 = vadd.xlane.f32.xlu0 %v1224
  %v1226 = vpop.xlane.xlu0 %1225
  %v1227 = vsel %vm107, %v1205, 0.0
  %1228 = vadd.xlane.f32.xlu0 %v1227
  %v1229 = vpop.xlane.xlu0 %1228
  %v1230 = vsel %vm107, %v1206, 0.0
  %1231 = vadd.xlane.f32.xlu0 %v1230
  %v1232 = vpop.xlane.xlu0 %1231
  %v1233 = vsel %vm107, %v1207, 0.0
  %1234 = vadd.xlane.f32.xlu0 %v1233
  %v1235 = vpop.xlane.xlu0 %1234
  %v1236 = vsel %vm107, %v1208, 0.0
  %1237 = vadd.xlane.f32.xlu0 %v1236
  %v1238 = vpop.xlane.xlu0 %1237
  %v1239 = vmul.f32 %v1211, %v225
  %v1240 = vmul.f32 %v1214, %v225
  %v1241 = vmul.f32 %v1217, %v225
  %v1242 = vmul.f32 %v1220, %v225
  %v1243 = vmul.f32 %v1223, %v225
  %v1244 = vmul.f32 %v1226, %v225
  %v1245 = vmul.f32 %v1229, %v225
  %v1246 = vmul.f32 %v1232, %v225
  %v1247 = vmul.f32 %v1235, %v225
  %v1248 = vmul.f32 %v1238, %v225
  %v1249 = vadd.f32 %v1239, 1e-05
  %v1250 = vadd.f32 %v1240, 1e-05
  %v1251 = vadd.f32 %v1241, 1e-05
  %v1252 = vadd.f32 %v1242, 1e-05
  %v1253 = vadd.f32 %v1243, 1e-05
  %v1254 = vadd.f32 %v1244, 1e-05
  %v1255 = vadd.f32 %v1245, 1e-05
  %v1256 = vadd.f32 %v1246, 1e-05
  %v1257 = vadd.f32 %v1247, 1e-05
  %v1258 = vadd.f32 %v1248, 1e-05
  %v1259 = vrsqrt.pop %v1249
  %v1260 = vmul.f32 %v1259, %v1249
  %v1261 = vmul.f32 %v1260, %v1259
  %v1262 = vmul.f32 0.5, %v1261
  %v1263 = vsub.f32 1.5, %v1262
  %v1264 = vmul.f32 %v1259, %v1263
  %vm1265 = vweird.f32 %v1249
  %vm1266 = vweird.f32 %v1259
  %vm1267 = vmor %vm1265, %vm1266
  %v1268 = vsel %vm1267, %v1259, %v1264
  %v1269 = vrsqrt.pop %v1250
  %v1270 = vmul.f32 %v1269, %v1250
  %v1271 = vmul.f32 %v1270, %v1269
  %v1272 = vmul.f32 0.5, %v1271
  %v1273 = vsub.f32 1.5, %v1272
  %v1274 = vmul.f32 %v1269, %v1273
  %vm1275 = vweird.f32 %v1250
  %vm1276 = vweird.f32 %v1269
  %vm1277 = vmor %vm1275, %vm1276
  %v1278 = vsel %vm1277, %v1269, %v1274
  %v1279 = vrsqrt.pop %v1251
  %v1280 = vmul.f32 %v1279, %v1251
  %v1281 = vmul.f32 %v1280, %v1279
  %v1282 = vmul.f32 0.5, %v1281
  %v1283 = vsub.f32 1.5, %v1282
  %v1284 = vmul.f32 %v1279, %v1283
  %vm1285 = vweird.f32 %v1251
  %vm1286 = vweird.f32 %v1279
  %vm1287 = vmor %vm1285, %vm1286
  %v1288 = vsel %vm1287, %v1279, %v1284
  %v1289 = vrsqrt.pop %v1252
  %v1290 = vmul.f32 %v1289, %v1252
  %v1291 = vmul.f32 %v1290, %v1289
  %v1292 = vmul.f32 0.5, %v1291
  %v1293 = vsub.f32 1.5, %v1292
  %v1294 = vmul.f32 %v1289, %v1293
  %vm1295 = vweird.f32 %v1252
  %vm1296 = vweird.f32 %v1289
  %vm1297 = vmor %vm1295, %vm1296
  %v1298 = vsel %vm1297, %v1289, %v1294
  %v1299 = vrsqrt.pop %v1253
  %v1300 = vmul.f32 %v1299, %v1253
  %v1301 = vmul.f32 %v1300, %v1299
  %v1302 = vmul.f32 0.5, %v1301
  %v1303 = vsub.f32 1.5, %v1302
  %v1304 = vmul.f32 %v1299, %v1303
  %vm1305 = vweird.f32 %v1253
  %vm1306 = vweird.f32 %v1299
  %vm1307 = vmor %vm1305, %vm1306
  %v1308 = vsel %vm1307, %v1299, %v1304
  %v1309 = vrsqrt.pop %v1254
  %v1310 = vmul.f32 %v1309, %v1254
  %v1311 = vmul.f32 %v1310, %v1309
  %v1312 = vmul.f32 0.5, %v1311
  %v1313 = vsub.f32 1.5, %v1312
  %v1314 = vmul.f32 %v1309, %v1313
  %vm1315 = vweird.f32 %v1254
  %vm1316 = vweird.f32 %v1309
  %vm1317 = vmor %vm1315, %vm1316
  %v1318 = vsel %vm1317, %v1309, %v1314
  %v1319 = vrsqrt.pop %v1255
  %v1320 = vmul.f32 %v1319, %v1255
  %v1321 = vmul.f32 %v1320, %v1319
  %v1322 = vmul.f32 0.5, %v1321
  %v1323 = vsub.f32 1.5, %v1322
  %v1324 = vmul.f32 %v1319, %v1323
  %vm1325 = vweird.f32 %v1255
  %vm1326 = vweird.f32 %v1319
  %vm1327 = vmor %vm1325, %vm1326
  %v1328 = vsel %vm1327, %v1319, %v1324
  %v1329 = vrsqrt.pop %v1256
  %v1330 = vmul.f32 %v1329, %v1256
  %v1331 = vmul.f32 %v1330, %v1329
  %v1332 = vmul.f32 0.5, %v1331
  %v1333 = vsub.f32 1.5, %v1332
  %v1334 = vmul.f32 %v1329, %v1333
  %vm1335 = vweird.f32 %v1256
  %vm1336 = vweird.f32 %v1329
  %vm1337 = vmor %vm1335, %vm1336
  %v1338 = vsel %vm1337, %v1329, %v1334
  %v1339 = vrsqrt.pop %v1257
  %v1340 = vmul.f32 %v1339, %v1257
  %v1341 = vmul.f32 %v1340, %v1339
  %v1342 = vmul.f32 0.5, %v1341
  %v1343 = vsub.f32 1.5, %v1342
  %v1344 = vmul.f32 %v1339, %v1343
  %vm1345 = vweird.f32 %v1257
  %vm1346 = vweird.f32 %v1339
  %vm1347 = vmor %vm1345, %vm1346
  %v1348 = vsel %vm1347, %v1339, %v1344
  %v1349 = vrsqrt.pop %v1258
  %v1350 = vmul.f32 %v1349, %v1258
  %v1351 = vmul.f32 %v1350, %v1349
  %v1352 = vmul.f32 0.5, %v1351
  %v1353 = vsub.f32 1.5, %v1352
  %v1354 = vmul.f32 %v1349, %v1353
  %vm1355 = vweird.f32 %v1258
  %vm1356 = vweird.f32 %v1349
  %vm1357 = vmor %vm1355, %vm1356
  %v1358 = vsel %vm1357, %v1349, %v1354
  %v1359 = vmul.f32 %v1189, %v1268
  %v1360 = vmul.f32 %v1190, %v1278
  %v1361 = vmul.f32 %v1191, %v1288
  %v1362 = vmul.f32 %v1192, %v1298
  %v1363 = vmul.f32 %v1193, %v1308
  %v1364 = vmul.f32 %v1194, %v1318
  %v1365 = vmul.f32 %v1195, %v1328
  %v1366 = vmul.f32 %v1196, %v1338
  %v1367 = vmul.f32 %v1197, %v1348
  %v1368 = vmul.f32 %v1198, %v1358
  %v1369 = vld [vmem:[%s7 + $0xd] sm:$0x1]
  %v1370 = vperm.slane %v1369, 0
  %v1371 = vmul.f32 %v1359, %v1370
  %v1372 = vmul.f32 %v1360, %v1370
  %v1373 = vmul.f32 %v1361, %v1370
  %v1374 = vmul.f32 %v1362, %v1370
  %v1375 = vmul.f32 %v1363, %v1370
  %v1376 = vmul.f32 %v1364, %v1370
  %v1377 = vmul.f32 %v1365, %v1370
  %v1378 = vmul.f32 %v1366, %v1370
  %v1379 = vmul.f32 %v1367, %v1370
  %v1380 = vmul.f32 %v1368, %v1370
  %v1381 = vld [vmem:[%s7 + $0xe] sm:$0x1]
  %v1382 = vperm.slane %v1381, 0
  %v1383 = vadd.f32 %v1371, %v1382
  %v1384 = vadd.f32 %v1372, %v1382
  %v1385 = vadd.f32 %v1373, %v1382
  %v1386 = vadd.f32 %v1374, %v1382
  %v1387 = vadd.f32 %v1375, %v1382
  %v1388 = vadd.f32 %v1376, %v1382
  %v1389 = vadd.f32 %v1377, %v1382
  %v1390 = vadd.f32 %v1378, %v1382
  %v1391 = vadd.f32 %v1379, %v1382
  %v1392 = vadd.f32 %v1380, %v1382
  %v1393 = vld [vmem:[%s3] sm:$0xf]
  %v1394 = vld [vmem:[%s3 + $0x4] sm:$0xf]
  %v1395 = vld [vmem:[%s3 + $0x8] sm:$0xf]
  %v1396 = vld [vmem:[%s3 + $0xc] sm:$0xf]
  %v1397 = vld [vmem:[%s3 + $0x10] sm:$0xf]
  %v1398 = vld [vmem:[%s3 + $0x14] sm:$0xf]
  %v1399 = vld [vmem:[%s3 + $0x18] sm:$0xf]
  %v1400 = vld [vmem:[%s3 + $0x1c] sm:$0xf]
  %v1401 = vld [vmem:[%s3 + $0x20] sm:$0xf]
  %v1402 = vld [vmem:[%s3 + $0x24] sm:$0xf]
  %v1403 = vld [vmem:[%s3 + $0x28] sm:$0xf]
  %v1404 = vld [vmem:[%s3 + $0x2c] sm:$0xf]
  %v1405 = vld [vmem:[%s4] sm:$0xf]
  %v1406 = vld [vmem:[%s4 + $0x4] sm:$0xf]
  %v1407 = vld [vmem:[%s4 + $0x8] sm:$0xf]
  %v1408 = vld [vmem:[%s4 + $0xc] sm:$0xf]
  %v1409 = vld [vmem:[%s4 + $0x10] sm:$0xf]
  %v1410 = vld [vmem:[%s4 + $0x14] sm:$0xf]
  %v1411 = vld [vmem:[%s4 + $0x18] sm:$0xf]
  %v1412 = vld [vmem:[%s4 + $0x1c] sm:$0xf]
  %v1413 = vld [vmem:[%s4 + $0x20] sm:$0xf]
  %v1414 = vld [vmem:[%s4 + $0x24] sm:$0xf]
  %v1415 = vld [vmem:[%s5] sm:$0xff]
  %v1416 = vld [vmem:[%s5 + $0x8] sm:$0xff]
  %v1417 = vld [vmem:[%s5 + $0x10] sm:$0xff]
  %v1418 = vld [vmem:[%s5 + $0x18] sm:$0xff]
  %v1419 = vld [vmem:[%s5 + $0x20] sm:$0xff]
  %v1420 = vld [vmem:[%s5 + $0x28] sm:$0xff]
  %v1421 = vld [vmem:[%s6 + $0x6c] sm:$0xf]
  %v1422 = vld [vmem:[%s6 + $0x70] sm:$0xf]
  %v1423 = vld [vmem:[%s6 + $0x74] sm:$0xf]
  %v1424 = vld [vmem:[%s6 + $0x78] sm:$0xf]
  %v1425 = vpack.c.bf16 %v351, %v350
  %v1426 = vpack.c.bf16 %v353, %v352
  %v1427 = vpack.c.bf16 %v355, %v354
  %v1432 = vunpack.c.l.b16 %v1421
  %v1433 = vunpack.c.l.b16 %v1422
  %v1434 = vunpack.c.l.b16 %v1423
  %v1435 = vunpack.c.l.b16 %v1424
  %v1436 = vpack.c.b16 %v1433, %v1432
  %v1437 = vpack.c.b16 %v1435, %v1434
  %v1441 = vsel %vm107, %v1425, 0
  %v1444 = vsel %vm107, %v1426, 0
  %v1447 = vsel %vm107, %v1427, 0
  %1449 = vmatpush.bf16.msra.mxu0 0
  %1450 = vmatpush.bf16.msra.mxu0 0
  %1451 = vmatpush.bf16.msra.mxu0 0
  %1452 = vmatpush.bf16.msra.mxu0 0
  %1453 = vmatpush.bf16.msra.mxu0 0
  %1454 = vmatpush.bf16.msra.mxu0 0
  %1455 = vmatpush.bf16.msra.mxu0 %v1437
  %1456 = vmatpush.bf16.msra.mxu0 %v1436
  %1457 = vmatmul.bf16.gmra.mxu0 %v1441
  %v1458 = vpop.f32.mrf.mxu0
  %v1459 = vadd.f32 0.0, %v1458
  %v1460 = vpop.f32.mrf.mxu0
  %v1461 = vadd.f32 0.0, %v1460
  %1462 = vmatmul.bf16.gmra.mxu0 %v1444
  %v1463 = vpop.f32.mrf.mxu0
  %v1464 = vadd.f32 0.0, %v1463
  %v1465 = vpop.f32.mrf.mxu0
  %v1466 = vadd.f32 0.0, %v1465
  %1467 = vmatmul.bf16.gmra.mxu0 %v1447
  %v1468 = vpop.f32.mrf.mxu0
  %v1469 = vadd.f32 0.0, %v1468
  %v1470 = vpop.f32.mrf.mxu0
  %v1471 = vadd.f32 0.0, %v1470
  %1472 = vdwg.mxu0
  %1479 = vrot.lane.b32.xlu0 %v1459, 96
  %v1480 = vpop.permute.xlu0 %1479
  %1481 = vrot.lane.b32.xlu0 %v1461, 96
  %v1482 = vpop.permute.xlu0 %1481
  %1483 = vrot.lane.b32.xlu0 %v1464, 96
  %v1484 = vpop.permute.xlu0 %1483
  %1485 = vrot.lane.b32.xlu0 %v1466, 96
  %v1486 = vpop.permute.xlu0 %1485
  %1487 = vrot.lane.b32.xlu0 %v1469, 96
  %v1488 = vpop.permute.xlu0 %1487
  %1489 = vrot.lane.b32.xlu0 %v1471, 96
  %v1490 = vpop.permute.xlu0 %1489
  %v1497 = vpack.c.bf16 %v1461, %v1459
  %v1498 = vpack.c.bf16 %v1466, %v1464
  %v1499 = vpack.c.bf16 %v1471, %v1469
  %v1500 = vpack.c.bf16 %v1482, %v1480
  %v1501 = vpack.c.bf16 %v1486, %v1484
  %v1502 = vpack.c.bf16 %v1490, %v1488
  %v1503 = vld [vmem:[%s6 + $0x7c] sm:$0xf]
  %v1504 = vld [vmem:[%s6 + $0x80] sm:$0xf]
  %v1505 = vld [vmem:[%s6 + $0x84] sm:$0xf]
  %v1506 = vld [vmem:[%s6 + $0x88] sm:$0xf]
  %v1507 = vpack.c.bf16 %v904, %v903
  %v1508 = vpack.c.bf16 %v906, %v905
  %v1509 = vpack.c.bf16 %v908, %v907
  %v1510 = vpack.c.bf16 %v910, %v909
  %v1511 = vpack.c.bf16 %v912, %v911
  %v1512 = vpack.c.bf16 %v914, %v913
  %v1517 = vunpack.c.l.b16 %v1503
  %v1518 = vunpack.c.l.b16 %v1504
  %v1519 = vunpack.c.l.b16 %v1505
  %v1520 = vunpack.c.l.b16 %v1506
  %v1521 = vpack.c.b16 %v1518, %v1517
  %v1522 = vpack.c.b16 %v1520, %v1519
  %v1526 = vsel %vm107, %v1507, 0
  %v1529 = vsel %vm107, %v1508, 0
  %v1532 = vsel %vm107, %v1509, 0
  %v1535 = vsel %vm107, %v1510, 0
  %v1538 = vsel %vm107, %v1511, 0
  %v1541 = vsel %vm107, %v1512, 0
  %1543 = vmatpush.bf16.msra.mxu0 0
  %1544 = vmatpush.bf16.msra.mxu0 0
  %1545 = vmatpush.bf16.msra.mxu0 0
  %1546 = vmatpush.bf16.msra.mxu0 0
  %1547 = vmatpush.bf16.msra.mxu0 0
  %1548 = vmatpush.bf16.msra.mxu0 0
  %1549 = vmatpush.bf16.msra.mxu0 %v1522
  %1550 = vmatpush.bf16.msra.mxu0 %v1521
  %1551 = vmatmul.bf16.gmra.mxu0 %v1526
  %v1552 = vpop.f32.mrf.mxu0
  %v1553 = vadd.f32 0.0, %v1552
  %v1554 = vpop.f32.mrf.mxu0
  %v1555 = vadd.f32 0.0, %v1554
  %1556 = vmatmul.bf16.gmra.mxu0 %v1529
  %v1557 = vpop.f32.mrf.mxu0
  %v1558 = vadd.f32 0.0, %v1557
  %v1559 = vpop.f32.mrf.mxu0
  %v1560 = vadd.f32 0.0, %v1559
  %1561 = vmatmul.bf16.gmra.mxu0 %v1532
  %v1562 = vpop.f32.mrf.mxu0
  %v1563 = vadd.f32 0.0, %v1562
  %v1564 = vpop.f32.mrf.mxu0
  %v1565 = vadd.f32 0.0, %v1564
  %1566 = vmatmul.bf16.gmra.mxu0 %v1535
  %v1567 = vpop.f32.mrf.mxu0
  %v1568 = vadd.f32 0.0, %v1567
  %v1569 = vpop.f32.mrf.mxu0
  %v1570 = vadd.f32 0.0, %v1569
  %1571 = vmatmul.bf16.gmra.mxu0 %v1538
  %v1572 = vpop.f32.mrf.mxu0
  %v1573 = vadd.f32 0.0, %v1572
  %v1574 = vpop.f32.mrf.mxu0
  %v1575 = vadd.f32 0.0, %v1574
  %1576 = vmatmul.bf16.gmra.mxu0 %v1541
  %v1577 = vpop.f32.mrf.mxu0
  %v1578 = vadd.f32 0.0, %v1577
  %v1579 = vpop.f32.mrf.mxu0
  %v1580 = vadd.f32 0.0, %v1579
  %1581 = vdwg.mxu0
  %v1594 = vunpack.c.l.b16 %v1393
  %v1595 = vunpack.c.l.b16 %v1394
  %v1596 = vunpack.c.l.b16 %v1395
  %v1597 = vunpack.c.l.b16 %v1396
  %v1598 = vunpack.c.l.b16 %v1397
  %v1599 = vunpack.c.l.b16 %v1398
  %v1600 = vunpack.c.l.b16 %v1399
  %v1601 = vunpack.c.l.b16 %v1400
  %v1602 = vunpack.c.l.b16 %v1401
  %v1603 = vunpack.c.l.b16 %v1402
  %v1604 = vunpack.c.l.b16 %v1403
  %v1605 = vunpack.c.l.b16 %v1404
  %v1606 = vpack.c.b16 %v1595, %v1594
  %v1607 = vpack.c.b16 %v1597, %v1596
  %v1608 = vpack.c.b16 %v1599, %v1598
  %v1609 = vpack.c.b16 %v1601, %v1600
  %v1610 = vpack.c.b16 %v1603, %v1602
  %v1611 = vpack.c.b16 %v1605, %v1604
  %vm1612 = vcmask 785408
  %v1614 = vsel %vm1612, %v1606, 0
  %v1617 = vsel %vm1612, %v1607, 0
  %v1620 = vsel %vm1612, %v1608, 0
  %v1623 = vsel %vm1612, %v1609, 0
  %v1626 = vsel %vm1612, %v1610, 0
  %v1629 = vsel %vm1612, %v1611, 0
  %1631 = vmatpush.bf16.msra.mxu0 0
  %1632 = vmatpush.bf16.msra.mxu0 0
  %1633 = vmatpush.bf16.msra.mxu0 %v1502
  %1634 = vmatpush.bf16.msra.mxu0 %v1501
  %1635 = vmatpush.bf16.msra.mxu0 %v1500
  %1636 = vmatpush.bf16.msra.mxu0 %v1499
  %1637 = vmatpush.bf16.msra.mxu0 %v1498
  %1638 = vmatpush.bf16.msra.mxu0 %v1497
  %1639 = vmatmul.bf16.gmra.mxu0 %v1614
  %v1640 = vpop.f32.mrf.mxu0
  %v1641 = vadd.f32 %v1553, %v1640
  %v1642 = vpop.f32.mrf.mxu0
  %v1643 = vadd.f32 %v1555, %v1642
  %1644 = vmatmul.bf16.gmra.mxu0 %v1617
  %v1645 = vpop.f32.mrf.mxu0
  %v1646 = vadd.f32 %v1558, %v1645
  %v1647 = vpop.f32.mrf.mxu0
  %v1648 = vadd.f32 %v1560, %v1647
  %1649 = vmatmul.bf16.gmra.mxu0 %v1620
  %v1650 = vpop.f32.mrf.mxu0
  %v1651 = vadd.f32 %v1563, %v1650
  %v1652 = vpop.f32.mrf.mxu0
  %v1653 = vadd.f32 %v1565, %v1652
  %1654 = vmatmul.bf16.gmra.mxu0 %v1623
  %v1655 = vpop.f32.mrf.mxu0
  %v1656 = vadd.f32 %v1568, %v1655
  %v1657 = vpop.f32.mrf.mxu0
  %v1658 = vadd.f32 %v1570, %v1657
  %1659 = vmatmul.bf16.gmra.mxu0 %v1626
  %v1660 = vpop.f32.mrf.mxu0
  %v1661 = vadd.f32 %v1573, %v1660
  %v1662 = vpop.f32.mrf.mxu0
  %v1663 = vadd.f32 %v1575, %v1662
  %1664 = vmatmul.bf16.gmra.mxu0 %v1629
  %v1665 = vpop.f32.mrf.mxu0
  %v1666 = vadd.f32 %v1578, %v1665
  %v1667 = vpop.f32.mrf.mxu0
  %v1668 = vadd.f32 %v1580, %v1667
  %1669 = vdwg.mxu0
  %v1670 = vld [vmem:[%s7 + $0xf] sm:$0x1]
  %v1671 = vperm.slane %v1670, 0
  %v1672 = vadd.f32 %v1641, %v1671
  %v1673 = vadd.f32 %v1643, %v1671
  %v1674 = vadd.f32 %v1646, %v1671
  %v1675 = vadd.f32 %v1648, %v1671
  %v1676 = vadd.f32 %v1651, %v1671
  %v1677 = vadd.f32 %v1653, %v1671
  %v1678 = vadd.f32 %v1656, %v1671
  %v1679 = vadd.f32 %v1658, %v1671
  %v1680 = vadd.f32 %v1661, %v1671
  %v1681 = vadd.f32 %v1663, %v1671
  %v1682 = vadd.f32 %v1666, %v1671
  %v1683 = vadd.f32 %v1668, %v1671
  %v1684 = vmax.f32 %v1672, 0.0
  %v1685 = vmax.f32 %v1673, 0.0
  %v1686 = vmax.f32 %v1674, 0.0
  %v1687 = vmax.f32 %v1675, 0.0
  %v1688 = vmax.f32 %v1676, 0.0
  %v1689 = vmax.f32 %v1677, 0.0
  %v1690 = vmax.f32 %v1678, 0.0
  %v1691 = vmax.f32 %v1679, 0.0
  %v1692 = vmax.f32 %v1680, 0.0
  %v1693 = vmax.f32 %v1681, 0.0
  %v1694 = vmax.f32 %v1682, 0.0
  %v1695 = vmax.f32 %v1683, 0.0
  %v1696 = vld [vmem:[%s6 + $0x8c] sm:$0xf]
  %v1697 = vld [vmem:[%s6 + $0x90] sm:$0xf]
  %v1698 = vld [vmem:[%s6 + $0x94] sm:$0xf]
  %v1699 = vld [vmem:[%s6 + $0x98] sm:$0xf]
  %v1700 = vpack.c.bf16 %v1685, %v1684
  %v1701 = vpack.c.bf16 %v1687, %v1686
  %v1702 = vpack.c.bf16 %v1689, %v1688
  %v1703 = vpack.c.bf16 %v1691, %v1690
  %v1704 = vpack.c.bf16 %v1693, %v1692
  %v1705 = vpack.c.bf16 %v1695, %v1694
  %v1706 = vld [vmem:[%s7 + $0x10] sm:$0x1]
  %v1707 = vperm.slane %v1706, 0
  %v1712 = vunpack.c.l.b16 %v1696
  %v1713 = vunpack.c.l.b16 %v1697
  %v1714 = vunpack.c.l.b16 %v1698
  %v1715 = vunpack.c.l.b16 %v1699
  %v1716 = vpack.c.b16 %v1713, %v1712
  %v1717 = vpack.c.b16 %v1715, %v1714
  %v1721 = vsel %vm107, %v1700, 0
  %v1724 = vsel %vm107, %v1701, 0
  %v1727 = vsel %vm107, %v1702, 0
  %v1730 = vsel %vm107, %v1703, 0
  %v1733 = vsel %vm107, %v1704, 0
  %v1736 = vsel %vm107, %v1705, 0
  %1738 = vmatpush.bf16.msra.mxu0 0
  %1739 = vmatpush.bf16.msra.mxu0 0
  %1740 = vmatpush.bf16.msra.mxu0 0
  %1741 = vmatpush.bf16.msra.mxu0 0
  %1742 = vmatpush.bf16.msra.mxu0 0
  %1743 = vmatpush.bf16.msra.mxu0 0
  %1744 = vmatpush.bf16.msra.mxu0 %v1717
  %1745 = vmatpush.bf16.msra.mxu0 %v1716
  %1746 = vmatmul.bf16.gmra.mxu0 %v1721
  %v1747 = vpop.f32.mrf.mxu0
  %v1748 = vadd.f32 %v1707, %v1747
  %v1749 = vpop.f32.mrf.mxu0
  %v1750 = vadd.f32 %v1707, %v1749
  %1751 = vmatmul.bf16.gmra.mxu0 %v1724
  %v1752 = vpop.f32.mrf.mxu0
  %v1753 = vadd.f32 %v1707, %v1752
  %v1754 = vpop.f32.mrf.mxu0
  %v1755 = vadd.f32 %v1707, %v1754
  %1756 = vmatmul.bf16.gmra.mxu0 %v1727
  %v1757 = vpop.f32.mrf.mxu0
  %v1758 = vadd.f32 %v1707, %v1757
  %v1759 = vpop.f32.mrf.mxu0
  %v1760 = vadd.f32 %v1707, %v1759
  %1761 = vmatmul.bf16.gmra.mxu0 %v1730
  %v1762 = vpop.f32.mrf.mxu0
  %v1763 = vadd.f32 %v1707, %v1762
  %v1764 = vpop.f32.mrf.mxu0
  %v1765 = vadd.f32 %v1707, %v1764
  %1766 = vmatmul.bf16.gmra.mxu0 %v1733
  %v1767 = vpop.f32.mrf.mxu0
  %v1768 = vadd.f32 %v1707, %v1767
  %v1769 = vpop.f32.mrf.mxu0
  %v1770 = vadd.f32 %v1707, %v1769
  %1771 = vmatmul.bf16.gmra.mxu0 %v1736
  %v1772 = vpop.f32.mrf.mxu0
  %v1773 = vadd.f32 %v1707, %v1772
  %v1774 = vpop.f32.mrf.mxu0
  %v1775 = vadd.f32 %v1707, %v1774
  %1776 = vdwg.mxu0
  %v1777 = vmax.f32 %v1748, 0.0
  %v1778 = vmax.f32 %v1750, 0.0
  %v1779 = vmax.f32 %v1753, 0.0
  %v1780 = vmax.f32 %v1755, 0.0
  %v1781 = vmax.f32 %v1758, 0.0
  %v1782 = vmax.f32 %v1760, 0.0
  %v1783 = vmax.f32 %v1763, 0.0
  %v1784 = vmax.f32 %v1765, 0.0
  %v1785 = vmax.f32 %v1768, 0.0
  %v1786 = vmax.f32 %v1770, 0.0
  %v1787 = vmax.f32 %v1773, 0.0
  %v1788 = vmax.f32 %v1775, 0.0
  %v1789 = vld [vmem:[%s6 + $0x9c] sm:$0xf]
  %v1790 = vld [vmem:[%s6 + $0xa0] sm:$0xf]
  %v1791 = vld [vmem:[%s6 + $0xa4] sm:$0xf]
  %v1792 = vld [vmem:[%s6 + $0xa8] sm:$0xf]
  %v1793 = vpack.c.bf16 %v1778, %v1777
  %v1794 = vpack.c.bf16 %v1780, %v1779
  %v1795 = vpack.c.bf16 %v1782, %v1781
  %v1796 = vpack.c.bf16 %v1784, %v1783
  %v1797 = vpack.c.bf16 %v1786, %v1785
  %v1798 = vpack.c.bf16 %v1788, %v1787
  %v1799 = vld [vmem:[%s7 + $0x11] sm:$0x1]
  %v1800 = vperm.slane %v1799, 0
  %v1805 = vunpack.c.l.b16 %v1789
  %v1806 = vunpack.c.l.b16 %v1790
  %v1807 = vunpack.c.l.b16 %v1791
  %v1808 = vunpack.c.l.b16 %v1792
  %v1809 = vpack.c.b16 %v1806, %v1805
  %v1810 = vpack.c.b16 %v1808, %v1807
  %v1814 = vsel %vm107, %v1793, 0
  %v1817 = vsel %vm107, %v1794, 0
  %v1820 = vsel %vm107, %v1795, 0
  %v1823 = vsel %vm107, %v1796, 0
  %v1826 = vsel %vm107, %v1797, 0
  %v1829 = vsel %vm107, %v1798, 0
  %1831 = vmatpush.bf16.msra.mxu0 0
  %1832 = vmatpush.bf16.msra.mxu0 0
  %1833 = vmatpush.bf16.msra.mxu0 0
  %1834 = vmatpush.bf16.msra.mxu0 0
  %1835 = vmatpush.bf16.msra.mxu0 0
  %1836 = vmatpush.bf16.msra.mxu0 0
  %1837 = vmatpush.bf16.msra.mxu0 %v1810
  %1838 = vmatpush.bf16.msra.mxu0 %v1809
  %1839 = vmatmul.bf16.gmra.mxu0 %v1814
  %v1840 = vpop.f32.mrf.mxu0
  %v1841 = vadd.f32 %v1800, %v1840
  %v1842 = vpop.f32.mrf.mxu0
  %v1843 = vadd.f32 %v1800, %v1842
  %1844 = vmatmul.bf16.gmra.mxu0 %v1817
  %v1845 = vpop.f32.mrf.mxu0
  %v1846 = vadd.f32 %v1800, %v1845
  %v1847 = vpop.f32.mrf.mxu0
  %v1848 = vadd.f32 %v1800, %v1847
  %1849 = vmatmul.bf16.gmra.mxu0 %v1820
  %v1850 = vpop.f32.mrf.mxu0
  %v1851 = vadd.f32 %v1800, %v1850
  %v1852 = vpop.f32.mrf.mxu0
  %v1853 = vadd.f32 %v1800, %v1852
  %1854 = vmatmul.bf16.gmra.mxu0 %v1823
  %v1855 = vpop.f32.mrf.mxu0
  %v1856 = vadd.f32 %v1800, %v1855
  %v1857 = vpop.f32.mrf.mxu0
  %v1858 = vadd.f32 %v1800, %v1857
  %1859 = vmatmul.bf16.gmra.mxu0 %v1826
  %v1860 = vpop.f32.mrf.mxu0
  %v1861 = vadd.f32 %v1800, %v1860
  %v1862 = vpop.f32.mrf.mxu0
  %v1863 = vadd.f32 %v1800, %v1862
  %1864 = vmatmul.bf16.gmra.mxu0 %v1829
  %v1865 = vpop.f32.mrf.mxu0
  %v1866 = vadd.f32 %v1800, %v1865
  %v1867 = vpop.f32.mrf.mxu0
  %v1868 = vadd.f32 %v1800, %v1867
  %1869 = vdwg.mxu0
  %v1870 = vsel %vm107, %v1841, 0.0
  %1871 = vadd.xlane.f32.xlu0 %v1870
  %v1872 = vpop.xlane.xlu0 %1871
  %v1873 = vsel %vm107, %v1843, 0.0
  %1874 = vadd.xlane.f32.xlu0 %v1873
  %v1875 = vpop.xlane.xlu0 %1874
  %v1876 = vsel %vm107, %v1846, 0.0
  %1877 = vadd.xlane.f32.xlu0 %v1876
  %v1878 = vpop.xlane.xlu0 %1877
  %v1879 = vsel %vm107, %v1848, 0.0
  %1880 = vadd.xlane.f32.xlu0 %v1879
  %v1881 = vpop.xlane.xlu0 %1880
  %v1882 = vsel %vm107, %v1851, 0.0
  %1883 = vadd.xlane.f32.xlu0 %v1882
  %v1884 = vpop.xlane.xlu0 %1883
  %v1885 = vsel %vm107, %v1853, 0.0
  %1886 = vadd.xlane.f32.xlu0 %v1885
  %v1887 = vpop.xlane.xlu0 %1886
  %v1888 = vsel %vm107, %v1856, 0.0
  %1889 = vadd.xlane.f32.xlu0 %v1888
  %v1890 = vpop.xlane.xlu0 %1889
  %v1891 = vsel %vm107, %v1858, 0.0
  %1892 = vadd.xlane.f32.xlu0 %v1891
  %v1893 = vpop.xlane.xlu0 %1892
  %v1894 = vsel %vm107, %v1861, 0.0
  %1895 = vadd.xlane.f32.xlu0 %v1894
  %v1896 = vpop.xlane.xlu0 %1895
  %v1897 = vsel %vm107, %v1863, 0.0
  %1898 = vadd.xlane.f32.xlu0 %v1897
  %v1899 = vpop.xlane.xlu0 %1898
  %v1900 = vsel %vm107, %v1866, 0.0
  %1901 = vadd.xlane.f32.xlu0 %v1900
  %v1902 = vpop.xlane.xlu0 %1901
  %v1903 = vsel %vm107, %v1868, 0.0
  %1904 = vadd.xlane.f32.xlu0 %v1903
  %v1905 = vpop.xlane.xlu0 %1904
  %v1906 = vmul.f32 %v1872, %v225
  %v1907 = vmul.f32 %v1875, %v225
  %v1908 = vmul.f32 %v1878, %v225
  %v1909 = vmul.f32 %v1881, %v225
  %v1910 = vmul.f32 %v1884, %v225
  %v1911 = vmul.f32 %v1887, %v225
  %v1912 = vmul.f32 %v1890, %v225
  %v1913 = vmul.f32 %v1893, %v225
  %v1914 = vmul.f32 %v1896, %v225
  %v1915 = vmul.f32 %v1899, %v225
  %v1916 = vmul.f32 %v1902, %v225
  %v1917 = vmul.f32 %v1905, %v225
  %v1918 = vsub.f32 %v1841, %v1906
  %v1919 = vsub.f32 %v1843, %v1907
  %v1920 = vsub.f32 %v1846, %v1908
  %v1921 = vsub.f32 %v1848, %v1909
  %v1922 = vsub.f32 %v1851, %v1910
  %v1923 = vsub.f32 %v1853, %v1911
  %v1924 = vsub.f32 %v1856, %v1912
  %v1925 = vsub.f32 %v1858, %v1913
  %v1926 = vsub.f32 %v1861, %v1914
  %v1927 = vsub.f32 %v1863, %v1915
  %v1928 = vsub.f32 %v1866, %v1916
  %v1929 = vsub.f32 %v1868, %v1917
  %v1930 = vmul.f32 %v1918, %v1918
  %v1931 = vmul.f32 %v1919, %v1919
  %v1932 = vmul.f32 %v1920, %v1920
  %v1933 = vmul.f32 %v1921, %v1921
  %v1934 = vmul.f32 %v1922, %v1922
  %v1935 = vmul.f32 %v1923, %v1923
  %v1936 = vmul.f32 %v1924, %v1924
  %v1937 = vmul.f32 %v1925, %v1925
  %v1938 = vmul.f32 %v1926, %v1926
  %v1939 = vmul.f32 %v1927, %v1927
  %v1940 = vmul.f32 %v1928, %v1928
  %v1941 = vmul.f32 %v1929, %v1929
  %v1942 = vsel %vm107, %v1930, 0.0
  %1943 = vadd.xlane.f32.xlu0 %v1942
  %v1944 = vpop.xlane.xlu0 %1943
  %v1945 = vsel %vm107, %v1931, 0.0
  %1946 = vadd.xlane.f32.xlu0 %v1945
  %v1947 = vpop.xlane.xlu0 %1946
  %v1948 = vsel %vm107, %v1932, 0.0
  %1949 = vadd.xlane.f32.xlu0 %v1948
  %v1950 = vpop.xlane.xlu0 %1949
  %v1951 = vsel %vm107, %v1933, 0.0
  %1952 = vadd.xlane.f32.xlu0 %v1951
  %v1953 = vpop.xlane.xlu0 %1952
  %v1954 = vsel %vm107, %v1934, 0.0
  %1955 = vadd.xlane.f32.xlu0 %v1954
  %v1956 = vpop.xlane.xlu0 %1955
  %v1957 = vsel %vm107, %v1935, 0.0
  %1958 = vadd.xlane.f32.xlu0 %v1957
  %v1959 = vpop.xlane.xlu0 %1958
  %v1960 = vsel %vm107, %v1936, 0.0
  %1961 = vadd.xlane.f32.xlu0 %v1960
  %v1962 = vpop.xlane.xlu0 %1961
  %v1963 = vsel %vm107, %v1937, 0.0
  %1964 = vadd.xlane.f32.xlu0 %v1963
  %v1965 = vpop.xlane.xlu0 %1964
  %v1966 = vsel %vm107, %v1938, 0.0
  %1967 = vadd.xlane.f32.xlu0 %v1966
  %v1968 = vpop.xlane.xlu0 %1967
  %v1969 = vsel %vm107, %v1939, 0.0
  %1970 = vadd.xlane.f32.xlu0 %v1969
  %v1971 = vpop.xlane.xlu0 %1970
  %v1972 = vsel %vm107, %v1940, 0.0
  %1973 = vadd.xlane.f32.xlu0 %v1972
  %v1974 = vpop.xlane.xlu0 %1973
  %v1975 = vsel %vm107, %v1941, 0.0
  %1976 = vadd.xlane.f32.xlu0 %v1975
  %v1977 = vpop.xlane.xlu0 %1976
  %v1978 = vmul.f32 %v1944, %v225
  %v1979 = vmul.f32 %v1947, %v225
  %v1980 = vmul.f32 %v1950, %v225
  %v1981 = vmul.f32 %v1953, %v225
  %v1982 = vmul.f32 %v1956, %v225
  %v1983 = vmul.f32 %v1959, %v225
  %v1984 = vmul.f32 %v1962, %v225
  %v1985 = vmul.f32 %v1965, %v225
  %v1986 = vmul.f32 %v1968, %v225
  %v1987 = vmul.f32 %v1971, %v225
  %v1988 = vmul.f32 %v1974, %v225
  %v1989 = vmul.f32 %v1977, %v225
  %v1990 = vadd.f32 %v1978, 1e-05
  %v1991 = vadd.f32 %v1979, 1e-05
  %v1992 = vadd.f32 %v1980, 1e-05
  %v1993 = vadd.f32 %v1981, 1e-05
  %v1994 = vadd.f32 %v1982, 1e-05
  %v1995 = vadd.f32 %v1983, 1e-05
  %v1996 = vadd.f32 %v1984, 1e-05
  %v1997 = vadd.f32 %v1985, 1e-05
  %v1998 = vadd.f32 %v1986, 1e-05
  %v1999 = vadd.f32 %v1987, 1e-05
  %v2000 = vadd.f32 %v1988, 1e-05
  %v2001 = vadd.f32 %v1989, 1e-05
  %v2002 = vrsqrt.pop %v1990
  %v2003 = vmul.f32 %v2002, %v1990
  %v2004 = vmul.f32 %v2003, %v2002
  %v2005 = vmul.f32 0.5, %v2004
  %v2006 = vsub.f32 1.5, %v2005
  %v2007 = vmul.f32 %v2002, %v2006
  %vm2008 = vweird.f32 %v1990
  %vm2009 = vweird.f32 %v2002
  %vm2010 = vmor %vm2008, %vm2009
  %v2011 = vsel %vm2010, %v2002, %v2007
  %v2012 = vrsqrt.pop %v1991
  %v2013 = vmul.f32 %v2012, %v1991
  %v2014 = vmul.f32 %v2013, %v2012
  %v2015 = vmul.f32 0.5, %v2014
  %v2016 = vsub.f32 1.5, %v2015
  %v2017 = vmul.f32 %v2012, %v2016
  %vm2018 = vweird.f32 %v1991
  %vm2019 = vweird.f32 %v2012
  %vm2020 = vmor %vm2018, %vm2019
  %v2021 = vsel %vm2020, %v2012, %v2017
  %v2022 = vrsqrt.pop %v1992
  %v2023 = vmul.f32 %v2022, %v1992
  %v2024 = vmul.f32 %v2023, %v2022
  %v2025 = vmul.f32 0.5, %v2024
  %v2026 = vsub.f32 1.5, %v2025
  %v2027 = vmul.f32 %v2022, %v2026
  %vm2028 = vweird.f32 %v1992
  %vm2029 = vweird.f32 %v2022
  %vm2030 = vmor %vm2028, %vm2029
  %v2031 = vsel %vm2030, %v2022, %v2027
  %v2032 = vrsqrt.pop %v1993
  %v2033 = vmul.f32 %v2032, %v1993
  %v2034 = vmul.f32 %v2033, %v2032
  %v2035 = vmul.f32 0.5, %v2034
  %v2036 = vsub.f32 1.5, %v2035
  %v2037 = vmul.f32 %v2032, %v2036
  %vm2038 = vweird.f32 %v1993
  %vm2039 = vweird.f32 %v2032
  %vm2040 = vmor %vm2038, %vm2039
  %v2041 = vsel %vm2040, %v2032, %v2037
  %v2042 = vrsqrt.pop %v1994
  %v2043 = vmul.f32 %v2042, %v1994
  %v2044 = vmul.f32 %v2043, %v2042
  %v2045 = vmul.f32 0.5, %v2044
  %v2046 = vsub.f32 1.5, %v2045
  %v2047 = vmul.f32 %v2042, %v2046
  %vm2048 = vweird.f32 %v1994
  %vm2049 = vweird.f32 %v2042
  %vm2050 = vmor %vm2048, %vm2049
  %v2051 = vsel %vm2050, %v2042, %v2047
  %v2052 = vrsqrt.pop %v1995
  %v2053 = vmul.f32 %v2052, %v1995
  %v2054 = vmul.f32 %v2053, %v2052
  %v2055 = vmul.f32 0.5, %v2054
  %v2056 = vsub.f32 1.5, %v2055
  %v2057 = vmul.f32 %v2052, %v2056
  %vm2058 = vweird.f32 %v1995
  %vm2059 = vweird.f32 %v2052
  %vm2060 = vmor %vm2058, %vm2059
  %v2061 = vsel %vm2060, %v2052, %v2057
  %v2062 = vrsqrt.pop %v1996
  %v2063 = vmul.f32 %v2062, %v1996
  %v2064 = vmul.f32 %v2063, %v2062
  %v2065 = vmul.f32 0.5, %v2064
  %v2066 = vsub.f32 1.5, %v2065
  %v2067 = vmul.f32 %v2062, %v2066
  %vm2068 = vweird.f32 %v1996
  %vm2069 = vweird.f32 %v2062
  %vm2070 = vmor %vm2068, %vm2069
  %v2071 = vsel %vm2070, %v2062, %v2067
  %v2072 = vrsqrt.pop %v1997
  %v2073 = vmul.f32 %v2072, %v1997
  %v2074 = vmul.f32 %v2073, %v2072
  %v2075 = vmul.f32 0.5, %v2074
  %v2076 = vsub.f32 1.5, %v2075
  %v2077 = vmul.f32 %v2072, %v2076
  %vm2078 = vweird.f32 %v1997
  %vm2079 = vweird.f32 %v2072
  %vm2080 = vmor %vm2078, %vm2079
  %v2081 = vsel %vm2080, %v2072, %v2077
  %v2082 = vrsqrt.pop %v1998
  %v2083 = vmul.f32 %v2082, %v1998
  %v2084 = vmul.f32 %v2083, %v2082
  %v2085 = vmul.f32 0.5, %v2084
  %v2086 = vsub.f32 1.5, %v2085
  %v2087 = vmul.f32 %v2082, %v2086
  %vm2088 = vweird.f32 %v1998
  %vm2089 = vweird.f32 %v2082
  %vm2090 = vmor %vm2088, %vm2089
  %v2091 = vsel %vm2090, %v2082, %v2087
  %v2092 = vrsqrt.pop %v1999
  %v2093 = vmul.f32 %v2092, %v1999
  %v2094 = vmul.f32 %v2093, %v2092
  %v2095 = vmul.f32 0.5, %v2094
  %v2096 = vsub.f32 1.5, %v2095
  %v2097 = vmul.f32 %v2092, %v2096
  %vm2098 = vweird.f32 %v1999
  %vm2099 = vweird.f32 %v2092
  %vm2100 = vmor %vm2098, %vm2099
  %v2101 = vsel %vm2100, %v2092, %v2097
  %v2102 = vrsqrt.pop %v2000
  %v2103 = vmul.f32 %v2102, %v2000
  %v2104 = vmul.f32 %v2103, %v2102
  %v2105 = vmul.f32 0.5, %v2104
  %v2106 = vsub.f32 1.5, %v2105
  %v2107 = vmul.f32 %v2102, %v2106
  %vm2108 = vweird.f32 %v2000
  %vm2109 = vweird.f32 %v2102
  %vm2110 = vmor %vm2108, %vm2109
  %v2111 = vsel %vm2110, %v2102, %v2107
  %v2112 = vrsqrt.pop %v2001
  %v2113 = vmul.f32 %v2112, %v2001
  %v2114 = vmul.f32 %v2113, %v2112
  %v2115 = vmul.f32 0.5, %v2114
  %v2116 = vsub.f32 1.5, %v2115
  %v2117 = vmul.f32 %v2112, %v2116
  %vm2118 = vweird.f32 %v2001
  %vm2119 = vweird.f32 %v2112
  %vm2120 = vmor %vm2118, %vm2119
  %v2121 = vsel %vm2120, %v2112, %v2117
  %v2122 = vmul.f32 %v1918, %v2011
  %v2123 = vmul.f32 %v1919, %v2021
  %v2124 = vmul.f32 %v1920, %v2031
  %v2125 = vmul.f32 %v1921, %v2041
  %v2126 = vmul.f32 %v1922, %v2051
  %v2127 = vmul.f32 %v1923, %v2061
  %v2128 = vmul.f32 %v1924, %v2071
  %v2129 = vmul.f32 %v1925, %v2081
  %v2130 = vmul.f32 %v1926, %v2091
  %v2131 = vmul.f32 %v1927, %v2101
  %v2132 = vmul.f32 %v1928, %v2111
  %v2133 = vmul.f32 %v1929, %v2121
  %v2134 = vld [vmem:[%s7 + $0x12] sm:$0x1]
  %v2135 = vperm.slane %v2134, 0
  %v2136 = vmul.f32 %v2122, %v2135
  %v2137 = vmul.f32 %v2123, %v2135
  %v2138 = vmul.f32 %v2124, %v2135
  %v2139 = vmul.f32 %v2125, %v2135
  %v2140 = vmul.f32 %v2126, %v2135
  %v2141 = vmul.f32 %v2127, %v2135
  %v2142 = vmul.f32 %v2128, %v2135
  %v2143 = vmul.f32 %v2129, %v2135
  %v2144 = vmul.f32 %v2130, %v2135
  %v2145 = vmul.f32 %v2131, %v2135
  %v2146 = vmul.f32 %v2132, %v2135
  %v2147 = vmul.f32 %v2133, %v2135
  %v2148 = vld [vmem:[%s7 + $0x13] sm:$0x1]
  %v2149 = vperm.slane %v2148, 0
  %v2150 = vadd.f32 %v2136, %v2149
  %v2151 = vadd.f32 %v2137, %v2149
  %v2152 = vadd.f32 %v2138, %v2149
  %v2153 = vadd.f32 %v2139, %v2149
  %v2154 = vadd.f32 %v2140, %v2149
  %v2155 = vadd.f32 %v2141, %v2149
  %v2156 = vadd.f32 %v2142, %v2149
  %v2157 = vadd.f32 %v2143, %v2149
  %v2158 = vadd.f32 %v2144, %v2149
  %v2159 = vadd.f32 %v2145, %v2149
  %v2160 = vadd.f32 %v2146, %v2149
  %v2161 = vadd.f32 %v2147, %v2149
  %v2162 = vld [vmem:[%s6 + $0xac] sm:$0xf]
  %v2163 = vld [vmem:[%s6 + $0xb0] sm:$0xf]
  %v2164 = vld [vmem:[%s6 + $0xb4] sm:$0xf]
  %v2165 = vld [vmem:[%s6 + $0xb8] sm:$0xf]
  %v2166 = vpack.c.bf16 %v1384, %v1383
  %v2167 = vpack.c.bf16 %v1386, %v1385
  %v2168 = vpack.c.bf16 %v1388, %v1387
  %v2169 = vpack.c.bf16 %v1390, %v1389
  %v2170 = vpack.c.bf16 %v1392, %v1391
  %v2175 = vunpack.c.l.b16 %v2162
  %v2176 = vunpack.c.l.b16 %v2163
  %v2177 = vunpack.c.l.b16 %v2164
  %v2178 = vunpack.c.l.b16 %v2165
  %v2179 = vpack.c.b16 %v2176, %v2175
  %v2180 = vpack.c.b16 %v2178, %v2177
  %v2184 = vsel %vm107, %v2166, 0
  %v2187 = vsel %vm107, %v2167, 0
  %v2190 = vsel %vm107, %v2168, 0
  %v2193 = vsel %vm107, %v2169, 0
  %v2196 = vsel %vm107, %v2170, 0
  %2198 = vmatpush.bf16.msra.mxu0 0
  %2199 = vmatpush.bf16.msra.mxu0 0
  %2200 = vmatpush.bf16.msra.mxu0 0
  %2201 = vmatpush.bf16.msra.mxu0 0
  %2202 = vmatpush.bf16.msra.mxu0 0
  %2203 = vmatpush.bf16.msra.mxu0 0
  %2204 = vmatpush.bf16.msra.mxu0 %v2180
  %2205 = vmatpush.bf16.msra.mxu0 %v2179
  %2206 = vmatmul.bf16.gmra.mxu0 %v2184
  %v2207 = vpop.f32.mrf.mxu0
  %v2208 = vadd.f32 0.0, %v2207
  %v2209 = vpop.f32.mrf.mxu0
  %v2210 = vadd.f32 0.0, %v2209
  %2211 = vmatmul.bf16.gmra.mxu0 %v2187
  %v2212 = vpop.f32.mrf.mxu0
  %v2213 = vadd.f32 0.0, %v2212
  %v2214 = vpop.f32.mrf.mxu0
  %v2215 = vadd.f32 0.0, %v2214
  %2216 = vmatmul.bf16.gmra.mxu0 %v2190
  %v2217 = vpop.f32.mrf.mxu0
  %v2218 = vadd.f32 0.0, %v2217
  %v2219 = vpop.f32.mrf.mxu0
  %v2220 = vadd.f32 0.0, %v2219
  %2221 = vmatmul.bf16.gmra.mxu0 %v2193
  %v2222 = vpop.f32.mrf.mxu0
  %v2223 = vadd.f32 0.0, %v2222
  %v2224 = vpop.f32.mrf.mxu0
  %v2225 = vadd.f32 0.0, %v2224
  %2226 = vmatmul.bf16.gmra.mxu0 %v2196
  %v2227 = vpop.f32.mrf.mxu0
  %v2228 = vadd.f32 0.0, %v2227
  %v2229 = vpop.f32.mrf.mxu0
  %v2230 = vadd.f32 0.0, %v2229
  %2231 = vdwg.mxu0
  %v2242 = vunpack.c.l.b16 %v1405
  %v2243 = vunpack.c.l.b16 %v1406
  %v2244 = vunpack.c.l.b16 %v1407
  %v2245 = vunpack.c.l.b16 %v1408
  %v2246 = vunpack.c.l.b16 %v1409
  %v2247 = vunpack.c.l.b16 %v1410
  %v2248 = vunpack.c.l.b16 %v1411
  %v2249 = vunpack.c.l.b16 %v1412
  %v2250 = vunpack.c.l.b16 %v1413
  %v2251 = vunpack.c.l.b16 %v1414
  %v2252 = vpack.c.b16 %v2243, %v2242
  %v2253 = vpack.c.b16 %v2245, %v2244
  %v2254 = vpack.c.b16 %v2247, %v2246
  %v2255 = vpack.c.b16 %v2249, %v2248
  %v2256 = vpack.c.b16 %v2251, %v2250
  %2263 = vrot.lane.b32.xlu0 %v1497, 64
  %v2264 = vpop.permute.xlu0 %2263
  %2265 = vrot.lane.b32.xlu0 %v1498, 64
  %v2266 = vpop.permute.xlu0 %2265
  %2267 = vrot.lane.b32.xlu0 %v1499, 64
  %v2268 = vpop.permute.xlu0 %2267
  %2269 = vrot.lane.b32.xlu0 %v1500, 64
  %v2270 = vpop.permute.xlu0 %2269
  %2271 = vrot.lane.b32.xlu0 %v1501, 64
  %v2272 = vpop.permute.xlu0 %2271
  %2273 = vrot.lane.b32.xlu0 %v1502, 64
  %v2274 = vpop.permute.xlu0 %2273
  %v2282 = vsel %vm1612, %v2252, 0
  %v2285 = vsel %vm1612, %v2253, 0
  %v2288 = vsel %vm1612, %v2254, 0
  %v2291 = vsel %vm1612, %v2255, 0
  %v2294 = vsel %vm1612, %v2256, 0
  %2296 = vmatpush.bf16.msra.mxu0 0
  %2297 = vmatpush.bf16.msra.mxu0 0
  %2298 = vmatpush.bf16.msra.mxu0 %v2274
  %2299 = vmatpush.bf16.msra.mxu0 %v2272
  %2300 = vmatpush.bf16.msra.mxu0 %v2270
  %2301 = vmatpush.bf16.msra.mxu0 %v2268
  %2302 = vmatpush.bf16.msra.mxu0 %v2266
  %2303 = vmatpush.bf16.msra.mxu0 %v2264
  %2304 = vmatmul.bf16.gmra.mxu0 %v2282
  %v2305 = vpop.f32.mrf.mxu0
  %v2306 = vadd.f32 %v2208, %v2305
  %v2307 = vpop.f32.mrf.mxu0
  %v2308 = vadd.f32 %v2210, %v2307
  %2309 = vmatmul.bf16.gmra.mxu0 %v2285
  %v2310 = vpop.f32.mrf.mxu0
  %v2311 = vadd.f32 %v2213, %v2310
  %v2312 = vpop.f32.mrf.mxu0
  %v2313 = vadd.f32 %v2215, %v2312
  %2314 = vmatmul.bf16.gmra.mxu0 %v2288
  %v2315 = vpop.f32.mrf.mxu0
  %v2316 = vadd.f32 %v2218, %v2315
  %v2317 = vpop.f32.mrf.mxu0
  %v2318 = vadd.f32 %v2220, %v2317
  %2319 = vmatmul.bf16.gmra.mxu0 %v2291
  %v2320 = vpop.f32.mrf.mxu0
  %v2321 = vadd.f32 %v2223, %v2320
  %v2322 = vpop.f32.mrf.mxu0
  %v2323 = vadd.f32 %v2225, %v2322
  %2324 = vmatmul.bf16.gmra.mxu0 %v2294
  %v2325 = vpop.f32.mrf.mxu0
  %v2326 = vadd.f32 %v2228, %v2325
  %v2327 = vpop.f32.mrf.mxu0
  %v2328 = vadd.f32 %v2230, %v2327
  %2329 = vdwg.mxu0
  %v2330 = vld [vmem:[%s7 + $0x14] sm:$0x1]
  %v2331 = vperm.slane %v2330, 0
  %v2332 = vadd.f32 %v2306, %v2331
  %v2333 = vadd.f32 %v2308, %v2331
  %v2334 = vadd.f32 %v2311, %v2331
  %v2335 = vadd.f32 %v2313, %v2331
  %v2336 = vadd.f32 %v2316, %v2331
  %v2337 = vadd.f32 %v2318, %v2331
  %v2338 = vadd.f32 %v2321, %v2331
  %v2339 = vadd.f32 %v2323, %v2331
  %v2340 = vadd.f32 %v2326, %v2331
  %v2341 = vadd.f32 %v2328, %v2331
  %v2342 = vmax.f32 %v2332, 0.0
  %v2343 = vmax.f32 %v2333, 0.0
  %v2344 = vmax.f32 %v2334, 0.0
  %v2345 = vmax.f32 %v2335, 0.0
  %v2346 = vmax.f32 %v2336, 0.0
  %v2347 = vmax.f32 %v2337, 0.0
  %v2348 = vmax.f32 %v2338, 0.0
  %v2349 = vmax.f32 %v2339, 0.0
  %v2350 = vmax.f32 %v2340, 0.0
  %v2351 = vmax.f32 %v2341, 0.0
  %v2352 = vld [vmem:[%s6 + $0xbc] sm:$0xf]
  %v2353 = vld [vmem:[%s6 + $0xc0] sm:$0xf]
  %v2354 = vld [vmem:[%s6 + $0xc4] sm:$0xf]
  %v2355 = vld [vmem:[%s6 + $0xc8] sm:$0xf]
  %v2356 = vpack.c.bf16 %v2343, %v2342
  %v2357 = vpack.c.bf16 %v2345, %v2344
  %v2358 = vpack.c.bf16 %v2347, %v2346
  %v2359 = vpack.c.bf16 %v2349, %v2348
  %v2360 = vpack.c.bf16 %v2351, %v2350
  %v2361 = vld [vmem:[%s7 + $0x15] sm:$0x1]
  %v2362 = vperm.slane %v2361, 0
  %v2367 = vunpack.c.l.b16 %v2352
  %v2368 = vunpack.c.l.b16 %v2353
  %v2369 = vunpack.c.l.b16 %v2354
  %v2370 = vunpack.c.l.b16 %v2355
  %v2371 = vpack.c.b16 %v2368, %v2367
  %v2372 = vpack.c.b16 %v2370, %v2369
  %v2376 = vsel %vm107, %v2356, 0
  %v2379 = vsel %vm107, %v2357, 0
  %v2382 = vsel %vm107, %v2358, 0
  %v2385 = vsel %vm107, %v2359, 0
  %v2388 = vsel %vm107, %v2360, 0
  %2390 = vmatpush.bf16.msra.mxu0 0
  %2391 = vmatpush.bf16.msra.mxu0 0
  %2392 = vmatpush.bf16.msra.mxu0 0
  %2393 = vmatpush.bf16.msra.mxu0 0
  %2394 = vmatpush.bf16.msra.mxu0 0
  %2395 = vmatpush.bf16.msra.mxu0 0
  %2396 = vmatpush.bf16.msra.mxu0 %v2372
  %2397 = vmatpush.bf16.msra.mxu0 %v2371
  %2398 = vmatmul.bf16.gmra.mxu0 %v2376
  %v2399 = vpop.f32.mrf.mxu0
  %v2400 = vadd.f32 %v2362, %v2399
  %v2401 = vpop.f32.mrf.mxu0
  %v2402 = vadd.f32 %v2362, %v2401
  %2403 = vmatmul.bf16.gmra.mxu0 %v2379
  %v2404 = vpop.f32.mrf.mxu0
  %v2405 = vadd.f32 %v2362, %v2404
  %v2406 = vpop.f32.mrf.mxu0
  %v2407 = vadd.f32 %v2362, %v2406
  %2408 = vmatmul.bf16.gmra.mxu0 %v2382
  %v2409 = vpop.f32.mrf.mxu0
  %v2410 = vadd.f32 %v2362, %v2409
  %v2411 = vpop.f32.mrf.mxu0
  %v2412 = vadd.f32 %v2362, %v2411
  %2413 = vmatmul.bf16.gmra.mxu0 %v2385
  %v2414 = vpop.f32.mrf.mxu0
  %v2415 = vadd.f32 %v2362, %v2414
  %v2416 = vpop.f32.mrf.mxu0
  %v2417 = vadd.f32 %v2362, %v2416
  %2418 = vmatmul.bf16.gmra.mxu0 %v2388
  %v2419 = vpop.f32.mrf.mxu0
  %v2420 = vadd.f32 %v2362, %v2419
  %v2421 = vpop.f32.mrf.mxu0
  %v2422 = vadd.f32 %v2362, %v2421
  %2423 = vdwg.mxu0
  %v2424 = vmax.f32 %v2400, 0.0
  %v2425 = vmax.f32 %v2402, 0.0
  %v2426 = vmax.f32 %v2405, 0.0
  %v2427 = vmax.f32 %v2407, 0.0
  %v2428 = vmax.f32 %v2410, 0.0
  %v2429 = vmax.f32 %v2412, 0.0
  %v2430 = vmax.f32 %v2415, 0.0
  %v2431 = vmax.f32 %v2417, 0.0
  %v2432 = vmax.f32 %v2420, 0.0
  %v2433 = vmax.f32 %v2422, 0.0
  %v2434 = vld [vmem:[%s6 + $0xcc] sm:$0xf]
  %v2435 = vld [vmem:[%s6 + $0xd0] sm:$0xf]
  %v2436 = vld [vmem:[%s6 + $0xd4] sm:$0xf]
  %v2437 = vld [vmem:[%s6 + $0xd8] sm:$0xf]
  %v2438 = vpack.c.bf16 %v2425, %v2424
  %v2439 = vpack.c.bf16 %v2427, %v2426
  %v2440 = vpack.c.bf16 %v2429, %v2428
  %v2441 = vpack.c.bf16 %v2431, %v2430
  %v2442 = vpack.c.bf16 %v2433, %v2432
  %v2443 = vld [vmem:[%s7 + $0x16] sm:$0x1]
  %v2444 = vperm.slane %v2443, 0
  %v2449 = vunpack.c.l.b16 %v2434
  %v2450 = vunpack.c.l.b16 %v2435
  %v2451 = vunpack.c.l.b16 %v2436
  %v2452 = vunpack.c.l.b16 %v2437
  %v2453 = vpack.c.b16 %v2450, %v2449
  %v2454 = vpack.c.b16 %v2452, %v2451
  %v2458 = vsel %vm107, %v2438, 0
  %v2461 = vsel %vm107, %v2439, 0
  %v2464 = vsel %vm107, %v2440, 0
  %v2467 = vsel %vm107, %v2441, 0
  %v2470 = vsel %vm107, %v2442, 0
  %2472 = vmatpush.bf16.msra.mxu0 0
  %2473 = vmatpush.bf16.msra.mxu0 0
  %2474 = vmatpush.bf16.msra.mxu0 0
  %2475 = vmatpush.bf16.msra.mxu0 0
  %2476 = vmatpush.bf16.msra.mxu0 0
  %2477 = vmatpush.bf16.msra.mxu0 0
  %2478 = vmatpush.bf16.msra.mxu0 %v2454
  %2479 = vmatpush.bf16.msra.mxu0 %v2453
  %2480 = vmatmul.bf16.gmra.mxu0 %v2458
  %v2481 = vpop.f32.mrf.mxu0
  %v2482 = vadd.f32 %v2444, %v2481
  %v2483 = vpop.f32.mrf.mxu0
  %v2484 = vadd.f32 %v2444, %v2483
  %2485 = vmatmul.bf16.gmra.mxu0 %v2461
  %v2486 = vpop.f32.mrf.mxu0
  %v2487 = vadd.f32 %v2444, %v2486
  %v2488 = vpop.f32.mrf.mxu0
  %v2489 = vadd.f32 %v2444, %v2488
  %2490 = vmatmul.bf16.gmra.mxu0 %v2464
  %v2491 = vpop.f32.mrf.mxu0
  %v2492 = vadd.f32 %v2444, %v2491
  %v2493 = vpop.f32.mrf.mxu0
  %v2494 = vadd.f32 %v2444, %v2493
  %2495 = vmatmul.bf16.gmra.mxu0 %v2467
  %v2496 = vpop.f32.mrf.mxu0
  %v2497 = vadd.f32 %v2444, %v2496
  %v2498 = vpop.f32.mrf.mxu0
  %v2499 = vadd.f32 %v2444, %v2498
  %2500 = vmatmul.bf16.gmra.mxu0 %v2470
  %v2501 = vpop.f32.mrf.mxu0
  %v2502 = vadd.f32 %v2444, %v2501
  %v2503 = vpop.f32.mrf.mxu0
  %v2504 = vadd.f32 %v2444, %v2503
  %2505 = vdwg.mxu0
  %v2506 = vsel %vm107, %v2482, 0.0
  %2507 = vadd.xlane.f32.xlu0 %v2506
  %v2508 = vpop.xlane.xlu0 %2507
  %v2509 = vsel %vm107, %v2484, 0.0
  %2510 = vadd.xlane.f32.xlu0 %v2509
  %v2511 = vpop.xlane.xlu0 %2510
  %v2512 = vsel %vm107, %v2487, 0.0
  %2513 = vadd.xlane.f32.xlu0 %v2512
  %v2514 = vpop.xlane.xlu0 %2513
  %v2515 = vsel %vm107, %v2489, 0.0
  %2516 = vadd.xlane.f32.xlu0 %v2515
  %v2517 = vpop.xlane.xlu0 %2516
  %v2518 = vsel %vm107, %v2492, 0.0
  %2519 = vadd.xlane.f32.xlu0 %v2518
  %v2520 = vpop.xlane.xlu0 %2519
  %v2521 = vsel %vm107, %v2494, 0.0
  %2522 = vadd.xlane.f32.xlu0 %v2521
  %v2523 = vpop.xlane.xlu0 %2522
  %v2524 = vsel %vm107, %v2497, 0.0
  %2525 = vadd.xlane.f32.xlu0 %v2524
  %v2526 = vpop.xlane.xlu0 %2525
  %v2527 = vsel %vm107, %v2499, 0.0
  %2528 = vadd.xlane.f32.xlu0 %v2527
  %v2529 = vpop.xlane.xlu0 %2528
  %v2530 = vsel %vm107, %v2502, 0.0
  %2531 = vadd.xlane.f32.xlu0 %v2530
  %v2532 = vpop.xlane.xlu0 %2531
  %v2533 = vsel %vm107, %v2504, 0.0
  %2534 = vadd.xlane.f32.xlu0 %v2533
  %v2535 = vpop.xlane.xlu0 %2534
  %v2536 = vmul.f32 %v2508, %v225
  %v2537 = vmul.f32 %v2511, %v225
  %v2538 = vmul.f32 %v2514, %v225
  %v2539 = vmul.f32 %v2517, %v225
  %v2540 = vmul.f32 %v2520, %v225
  %v2541 = vmul.f32 %v2523, %v225
  %v2542 = vmul.f32 %v2526, %v225
  %v2543 = vmul.f32 %v2529, %v225
  %v2544 = vmul.f32 %v2532, %v225
  %v2545 = vmul.f32 %v2535, %v225
  %v2546 = vsub.f32 %v2482, %v2536
  %v2547 = vsub.f32 %v2484, %v2537
  %v2548 = vsub.f32 %v2487, %v2538
  %v2549 = vsub.f32 %v2489, %v2539
  %v2550 = vsub.f32 %v2492, %v2540
  %v2551 = vsub.f32 %v2494, %v2541
  %v2552 = vsub.f32 %v2497, %v2542
  %v2553 = vsub.f32 %v2499, %v2543
  %v2554 = vsub.f32 %v2502, %v2544
  %v2555 = vsub.f32 %v2504, %v2545
  %v2556 = vmul.f32 %v2546, %v2546
  %v2557 = vmul.f32 %v2547, %v2547
  %v2558 = vmul.f32 %v2548, %v2548
  %v2559 = vmul.f32 %v2549, %v2549
  %v2560 = vmul.f32 %v2550, %v2550
  %v2561 = vmul.f32 %v2551, %v2551
  %v2562 = vmul.f32 %v2552, %v2552
  %v2563 = vmul.f32 %v2553, %v2553
  %v2564 = vmul.f32 %v2554, %v2554
  %v2565 = vmul.f32 %v2555, %v2555
  %v2566 = vsel %vm107, %v2556, 0.0
  %2567 = vadd.xlane.f32.xlu0 %v2566
  %v2568 = vpop.xlane.xlu0 %2567
  %v2569 = vsel %vm107, %v2557, 0.0
  %2570 = vadd.xlane.f32.xlu0 %v2569
  %v2571 = vpop.xlane.xlu0 %2570
  %v2572 = vsel %vm107, %v2558, 0.0
  %2573 = vadd.xlane.f32.xlu0 %v2572
  %v2574 = vpop.xlane.xlu0 %2573
  %v2575 = vsel %vm107, %v2559, 0.0
  %2576 = vadd.xlane.f32.xlu0 %v2575
  %v2577 = vpop.xlane.xlu0 %2576
  %v2578 = vsel %vm107, %v2560, 0.0
  %2579 = vadd.xlane.f32.xlu0 %v2578
  %v2580 = vpop.xlane.xlu0 %2579
  %v2581 = vsel %vm107, %v2561, 0.0
  %2582 = vadd.xlane.f32.xlu0 %v2581
  %v2583 = vpop.xlane.xlu0 %2582
  %v2584 = vsel %vm107, %v2562, 0.0
  %2585 = vadd.xlane.f32.xlu0 %v2584
  %v2586 = vpop.xlane.xlu0 %2585
  %v2587 = vsel %vm107, %v2563, 0.0
  %2588 = vadd.xlane.f32.xlu0 %v2587
  %v2589 = vpop.xlane.xlu0 %2588
  %v2590 = vsel %vm107, %v2564, 0.0
  %2591 = vadd.xlane.f32.xlu0 %v2590
  %v2592 = vpop.xlane.xlu0 %2591
  %v2593 = vsel %vm107, %v2565, 0.0
  %2594 = vadd.xlane.f32.xlu0 %v2593
  %v2595 = vpop.xlane.xlu0 %2594
  %v2596 = vmul.f32 %v2568, %v225
  %v2597 = vmul.f32 %v2571, %v225
  %v2598 = vmul.f32 %v2574, %v225
  %v2599 = vmul.f32 %v2577, %v225
  %v2600 = vmul.f32 %v2580, %v225
  %v2601 = vmul.f32 %v2583, %v225
  %v2602 = vmul.f32 %v2586, %v225
  %v2603 = vmul.f32 %v2589, %v225
  %v2604 = vmul.f32 %v2592, %v225
  %v2605 = vmul.f32 %v2595, %v225
  %v2606 = vadd.f32 %v2596, 1e-05
  %v2607 = vadd.f32 %v2597, 1e-05
  %v2608 = vadd.f32 %v2598, 1e-05
  %v2609 = vadd.f32 %v2599, 1e-05
  %v2610 = vadd.f32 %v2600, 1e-05
  %v2611 = vadd.f32 %v2601, 1e-05
  %v2612 = vadd.f32 %v2602, 1e-05
  %v2613 = vadd.f32 %v2603, 1e-05
  %v2614 = vadd.f32 %v2604, 1e-05
  %v2615 = vadd.f32 %v2605, 1e-05
  %v2616 = vrsqrt.pop %v2606
  %v2617 = vmul.f32 %v2616, %v2606
  %v2618 = vmul.f32 %v2617, %v2616
  %v2619 = vmul.f32 0.5, %v2618
  %v2620 = vsub.f32 1.5, %v2619
  %v2621 = vmul.f32 %v2616, %v2620
  %vm2622 = vweird.f32 %v2606
  %vm2623 = vweird.f32 %v2616
  %vm2624 = vmor %vm2622, %vm2623
  %v2625 = vsel %vm2624, %v2616, %v2621
  %v2626 = vrsqrt.pop %v2607
  %v2627 = vmul.f32 %v2626, %v2607
  %v2628 = vmul.f32 %v2627, %v2626
  %v2629 = vmul.f32 0.5, %v2628
  %v2630 = vsub.f32 1.5, %v2629
  %v2631 = vmul.f32 %v2626, %v2630
  %vm2632 = vweird.f32 %v2607
  %vm2633 = vweird.f32 %v2626
  %vm2634 = vmor %vm2632, %vm2633
  %v2635 = vsel %vm2634, %v2626, %v2631
  %v2636 = vrsqrt.pop %v2608
  %v2637 = vmul.f32 %v2636, %v2608
  %v2638 = vmul.f32 %v2637, %v2636
  %v2639 = vmul.f32 0.5, %v2638
  %v2640 = vsub.f32 1.5, %v2639
  %v2641 = vmul.f32 %v2636, %v2640
  %vm2642 = vweird.f32 %v2608
  %vm2643 = vweird.f32 %v2636
  %vm2644 = vmor %vm2642, %vm2643
  %v2645 = vsel %vm2644, %v2636, %v2641
  %v2646 = vrsqrt.pop %v2609
  %v2647 = vmul.f32 %v2646, %v2609
  %v2648 = vmul.f32 %v2647, %v2646
  %v2649 = vmul.f32 0.5, %v2648
  %v2650 = vsub.f32 1.5, %v2649
  %v2651 = vmul.f32 %v2646, %v2650
  %vm2652 = vweird.f32 %v2609
  %vm2653 = vweird.f32 %v2646
  %vm2654 = vmor %vm2652, %vm2653
  %v2655 = vsel %vm2654, %v2646, %v2651
  %v2656 = vrsqrt.pop %v2610
  %v2657 = vmul.f32 %v2656, %v2610
  %v2658 = vmul.f32 %v2657, %v2656
  %v2659 = vmul.f32 0.5, %v2658
  %v2660 = vsub.f32 1.5, %v2659
  %v2661 = vmul.f32 %v2656, %v2660
  %vm2662 = vweird.f32 %v2610
  %vm2663 = vweird.f32 %v2656
  %vm2664 = vmor %vm2662, %vm2663
  %v2665 = vsel %vm2664, %v2656, %v2661
  %v2666 = vrsqrt.pop %v2611
  %v2667 = vmul.f32 %v2666, %v2611
  %v2668 = vmul.f32 %v2667, %v2666
  %v2669 = vmul.f32 0.5, %v2668
  %v2670 = vsub.f32 1.5, %v2669
  %v2671 = vmul.f32 %v2666, %v2670
  %vm2672 = vweird.f32 %v2611
  %vm2673 = vweird.f32 %v2666
  %vm2674 = vmor %vm2672, %vm2673
  %v2675 = vsel %vm2674, %v2666, %v2671
  %v2676 = vrsqrt.pop %v2612
  %v2677 = vmul.f32 %v2676, %v2612
  %v2678 = vmul.f32 %v2677, %v2676
  %v2679 = vmul.f32 0.5, %v2678
  %v2680 = vsub.f32 1.5, %v2679
  %v2681 = vmul.f32 %v2676, %v2680
  %vm2682 = vweird.f32 %v2612
  %vm2683 = vweird.f32 %v2676
  %vm2684 = vmor %vm2682, %vm2683
  %v2685 = vsel %vm2684, %v2676, %v2681
  %v2686 = vrsqrt.pop %v2613
  %v2687 = vmul.f32 %v2686, %v2613
  %v2688 = vmul.f32 %v2687, %v2686
  %v2689 = vmul.f32 0.5, %v2688
  %v2690 = vsub.f32 1.5, %v2689
  %v2691 = vmul.f32 %v2686, %v2690
  %vm2692 = vweird.f32 %v2613
  %vm2693 = vweird.f32 %v2686
  %vm2694 = vmor %vm2692, %vm2693
  %v2695 = vsel %vm2694, %v2686, %v2691
  %v2696 = vrsqrt.pop %v2614
  %v2697 = vmul.f32 %v2696, %v2614
  %v2698 = vmul.f32 %v2697, %v2696
  %v2699 = vmul.f32 0.5, %v2698
  %v2700 = vsub.f32 1.5, %v2699
  %v2701 = vmul.f32 %v2696, %v2700
  %vm2702 = vweird.f32 %v2614
  %vm2703 = vweird.f32 %v2696
  %vm2704 = vmor %vm2702, %vm2703
  %v2705 = vsel %vm2704, %v2696, %v2701
  %v2706 = vrsqrt.pop %v2615
  %v2707 = vmul.f32 %v2706, %v2615
  %v2708 = vmul.f32 %v2707, %v2706
  %v2709 = vmul.f32 0.5, %v2708
  %v2710 = vsub.f32 1.5, %v2709
  %v2711 = vmul.f32 %v2706, %v2710
  %vm2712 = vweird.f32 %v2615
  %vm2713 = vweird.f32 %v2706
  %vm2714 = vmor %vm2712, %vm2713
  %v2715 = vsel %vm2714, %v2706, %v2711
  %v2716 = vmul.f32 %v2546, %v2625
  %v2717 = vmul.f32 %v2547, %v2635
  %v2718 = vmul.f32 %v2548, %v2645
  %v2719 = vmul.f32 %v2549, %v2655
  %v2720 = vmul.f32 %v2550, %v2665
  %v2721 = vmul.f32 %v2551, %v2675
  %v2722 = vmul.f32 %v2552, %v2685
  %v2723 = vmul.f32 %v2553, %v2695
  %v2724 = vmul.f32 %v2554, %v2705
  %v2725 = vmul.f32 %v2555, %v2715
  %v2726 = vld [vmem:[%s7 + $0x17] sm:$0x1]
  %v2727 = vperm.slane %v2726, 0
  %v2728 = vmul.f32 %v2716, %v2727
  %v2729 = vmul.f32 %v2717, %v2727
  %v2730 = vmul.f32 %v2718, %v2727
  %v2731 = vmul.f32 %v2719, %v2727
  %v2732 = vmul.f32 %v2720, %v2727
  %v2733 = vmul.f32 %v2721, %v2727
  %v2734 = vmul.f32 %v2722, %v2727
  %v2735 = vmul.f32 %v2723, %v2727
  %v2736 = vmul.f32 %v2724, %v2727
  %v2737 = vmul.f32 %v2725, %v2727
  %v2738 = vld [vmem:[%s7 + $0x18] sm:$0x1]
  %v2739 = vperm.slane %v2738, 0
  %v2740 = vadd.f32 %v2728, %v2739
  %v2741 = vadd.f32 %v2729, %v2739
  %v2742 = vadd.f32 %v2730, %v2739
  %v2743 = vadd.f32 %v2731, %v2739
  %v2744 = vadd.f32 %v2732, %v2739
  %v2745 = vadd.f32 %v2733, %v2739
  %v2746 = vadd.f32 %v2734, %v2739
  %v2747 = vadd.f32 %v2735, %v2739
  %v2748 = vadd.f32 %v2736, %v2739
  %v2749 = vadd.f32 %v2737, %v2739
  %v2750 = vld [vmem:[%s6 + $0xec] sm:$0xf]
  %v2751 = vld [vmem:[%s6 + $0xf0] sm:$0xf]
  %v2752 = vld [vmem:[%s6 + $0xf4] sm:$0xf]
  %v2753 = vld [vmem:[%s6 + $0xf8] sm:$0xf]
  %v2754 = vpack.c.bf16 %v2151, %v2150
  %v2755 = vpack.c.bf16 %v2153, %v2152
  %v2756 = vpack.c.bf16 %v2155, %v2154
  %v2757 = vpack.c.bf16 %v2157, %v2156
  %v2758 = vpack.c.bf16 %v2159, %v2158
  %v2759 = vpack.c.bf16 %v2161, %v2160
  %v2764 = vunpack.c.l.b16 %v2750
  %v2765 = vunpack.c.l.b16 %v2751
  %v2766 = vunpack.c.l.b16 %v2752
  %v2767 = vunpack.c.l.b16 %v2753
  %v2768 = vpack.c.b16 %v2765, %v2764
  %v2769 = vpack.c.b16 %v2767, %v2766
  %v2773 = vsel %vm107, %v2754, 0
  %v2776 = vsel %vm107, %v2755, 0
  %v2779 = vsel %vm107, %v2756, 0
  %v2782 = vsel %vm107, %v2757, 0
  %v2785 = vsel %vm107, %v2758, 0
  %v2788 = vsel %vm107, %v2759, 0
  %2790 = vmatpush.bf16.msra.mxu0 0
  %2791 = vmatpush.bf16.msra.mxu0 0
  %2792 = vmatpush.bf16.msra.mxu0 0
  %2793 = vmatpush.bf16.msra.mxu0 0
  %2794 = vmatpush.bf16.msra.mxu0 0
  %2795 = vmatpush.bf16.msra.mxu0 0
  %2796 = vmatpush.bf16.msra.mxu0 %v2769
  %2797 = vmatpush.bf16.msra.mxu0 %v2768
  %2798 = vmatmul.bf16.gmra.mxu0 %v2773
  %v2799 = vpop.f32.mrf.mxu0
  %v2800 = vadd.f32 0.0, %v2799
  %v2801 = vpop.f32.mrf.mxu0
  %v2802 = vadd.f32 0.0, %v2801
  %2803 = vmatmul.bf16.gmra.mxu0 %v2776
  %v2804 = vpop.f32.mrf.mxu0
  %v2805 = vadd.f32 0.0, %v2804
  %v2806 = vpop.f32.mrf.mxu0
  %v2807 = vadd.f32 0.0, %v2806
  %2808 = vmatmul.bf16.gmra.mxu0 %v2779
  %v2809 = vpop.f32.mrf.mxu0
  %v2810 = vadd.f32 0.0, %v2809
  %v2811 = vpop.f32.mrf.mxu0
  %v2812 = vadd.f32 0.0, %v2811
  %2813 = vmatmul.bf16.gmra.mxu0 %v2782
  %v2814 = vpop.f32.mrf.mxu0
  %v2815 = vadd.f32 0.0, %v2814
  %v2816 = vpop.f32.mrf.mxu0
  %v2817 = vadd.f32 0.0, %v2816
  %2818 = vmatmul.bf16.gmra.mxu0 %v2785
  %v2819 = vpop.f32.mrf.mxu0
  %v2820 = vadd.f32 0.0, %v2819
  %v2821 = vpop.f32.mrf.mxu0
  %v2822 = vadd.f32 0.0, %v2821
  %2823 = vmatmul.bf16.gmra.mxu0 %v2788
  %v2824 = vpop.f32.mrf.mxu0
  %v2825 = vadd.f32 0.0, %v2824
  %v2826 = vpop.f32.mrf.mxu0
  %v2827 = vadd.f32 0.0, %v2826
  %2828 = vdwg.mxu0
  %v2829 = vld [vmem:[%s6 + $0xfc] sm:$0xf]
  %v2830 = vld [vmem:[%s6 + $0x100] sm:$0xf]
  %v2831 = vld [vmem:[%s6 + $0x104] sm:$0xf]
  %v2832 = vld [vmem:[%s6 + $0x108] sm:$0xf]
  %v2833 = vpack.c.bf16 %v2741, %v2740
  %v2834 = vpack.c.bf16 %v2743, %v2742
  %v2835 = vpack.c.bf16 %v2745, %v2744
  %v2836 = vpack.c.bf16 %v2747, %v2746
  %v2837 = vpack.c.bf16 %v2749, %v2748
  %v2842 = vunpack.c.l.b16 %v2829
  %v2843 = vunpack.c.l.b16 %v2830
  %v2844 = vunpack.c.l.b16 %v2831
  %v2845 = vunpack.c.l.b16 %v2832
  %v2846 = vpack.c.b16 %v2843, %v2842
  %v2847 = vpack.c.b16 %v2845, %v2844
  %v2851 = vsel %vm107, %v2833, 0
  %v2854 = vsel %vm107, %v2834, 0
  %v2857 = vsel %vm107, %v2835, 0
  %v2860 = vsel %vm107, %v2836, 0
  %v2863 = vsel %vm107, %v2837, 0
  %2865 = vmatpush.bf16.msra.mxu0 0
  %2866 = vmatpush.bf16.msra.mxu0 0
  %2867 = vmatpush.bf16.msra.mxu0 0
  %2868 = vmatpush.bf16.msra.mxu0 0
  %2869 = vmatpush.bf16.msra.mxu0 0
  %2870 = vmatpush.bf16.msra.mxu0 0
  %2871 = vmatpush.bf16.msra.mxu0 %v2847
  %2872 = vmatpush.bf16.msra.mxu0 %v2846
  %2873 = vmatmul.bf16.gmra.mxu0 %v2851
  %v2874 = vpop.f32.mrf.mxu0
  %v2875 = vadd.f32 0.0, %v2874
  %v2876 = vpop.f32.mrf.mxu0
  %v2877 = vadd.f32 0.0, %v2876
  %2878 = vmatmul.bf16.gmra.mxu0 %v2854
  %v2879 = vpop.f32.mrf.mxu0
  %v2880 = vadd.f32 0.0, %v2879
  %v2881 = vpop.f32.mrf.mxu0
  %v2882 = vadd.f32 0.0, %v2881
  %2883 = vmatmul.bf16.gmra.mxu0 %v2857
  %v2884 = vpop.f32.mrf.mxu0
  %v2885 = vadd.f32 0.0, %v2884
  %v2886 = vpop.f32.mrf.mxu0
  %v2887 = vadd.f32 0.0, %v2886
  %2888 = vmatmul.bf16.gmra.mxu0 %v2860
  %v2889 = vpop.f32.mrf.mxu0
  %v2890 = vadd.f32 0.0, %v2889
  %v2891 = vpop.f32.mrf.mxu0
  %v2892 = vadd.f32 0.0, %v2891
  %2893 = vmatmul.bf16.gmra.mxu0 %v2863
  %v2894 = vpop.f32.mrf.mxu0
  %v2895 = vadd.f32 0.0, %v2894
  %v2896 = vpop.f32.mrf.mxu0
  %v2897 = vadd.f32 0.0, %v2896
  %2898 = vdwg.mxu0
  %v2899 = vld [vmem:[%s6 + $0xdc] sm:$0xf]
  %v2900 = vld [vmem:[%s6 + $0xe0] sm:$0xf]
  %v2901 = vld [vmem:[%s6 + $0xe4] sm:$0xf]
  %v2902 = vld [vmem:[%s6 + $0xe8] sm:$0xf]
  %v2903 = vld [vmem:[%s7 + $0x19] sm:$0x1]
  %v2904 = vperm.slane %v2903, 0
  %v2909 = vunpack.c.l.b16 %v2899
  %v2910 = vunpack.c.l.b16 %v2900
  %v2911 = vunpack.c.l.b16 %v2901
  %v2912 = vunpack.c.l.b16 %v2902
  %v2913 = vpack.c.b16 %v2910, %v2909
  %v2914 = vpack.c.b16 %v2912, %v2911
  %2917 = vmatpush.bf16.msra.mxu0 0
  %2918 = vmatpush.bf16.msra.mxu0 0
  %2919 = vmatpush.bf16.msra.mxu0 0
  %2920 = vmatpush.bf16.msra.mxu0 0
  %2921 = vmatpush.bf16.msra.mxu0 0
  %2922 = vmatpush.bf16.msra.mxu0 0
  %2923 = vmatpush.bf16.msra.mxu0 %v2914
  %2924 = vmatpush.bf16.msra.mxu0 %v2913
  %2925 = vmatmul.bf16.gmra.mxu0 %v1441
  %v2926 = vpop.f32.mrf.mxu0
  %v2927 = vadd.f32 %v2904, %v2926
  %v2928 = vpop.f32.mrf.mxu0
  %v2929 = vadd.f32 %v2904, %v2928
  %2930 = vmatmul.bf16.gmra.mxu0 %v1444
  %v2931 = vpop.f32.mrf.mxu0
  %v2932 = vadd.f32 %v2904, %v2931
  %v2933 = vpop.f32.mrf.mxu0
  %v2934 = vadd.f32 %v2904, %v2933
  %2935 = vmatmul.bf16.gmra.mxu0 %v1447
  %v2936 = vpop.f32.mrf.mxu0
  %v2937 = vadd.f32 %v2904, %v2936
  %v2938 = vpop.f32.mrf.mxu0
  %v2939 = vadd.f32 %v2904, %v2938
  %2940 = vdwg.mxu0
  %v2941 = vpack.c.bf16 %v2802, %v2800
  %v2942 = vpack.c.bf16 %v2807, %v2805
  %v2943 = vpack.c.bf16 %v2812, %v2810
  %v2944 = vpack.c.bf16 %v2817, %v2815
  %v2945 = vpack.c.bf16 %v2822, %v2820
  %v2946 = vpack.c.bf16 %v2827, %v2825
  %v2947 = vpack.c.bf16 %v2877, %v2875
  %v2948 = vpack.c.bf16 %v2882, %v2880
  %v2949 = vpack.c.bf16 %v2887, %v2885
  %v2950 = vpack.c.bf16 %v2892, %v2890
  %v2951 = vpack.c.bf16 %v2897, %v2895
  %v2958 = vunpack.c.l.b16 %v1415
  %v2959 = vunpack.c.h.b16 %v1415
  %v2960 = vunpack.c.l.b16 %v1416
  %v2961 = vunpack.c.h.b16 %v1416
  %v2962 = vunpack.c.l.b16 %v1417
  %v2963 = vunpack.c.h.b16 %v1417
  %v2964 = vunpack.c.l.b16 %v1418
  %v2965 = vunpack.c.h.b16 %v1418
  %v2966 = vunpack.c.l.b16 %v1419
  %v2967 = vunpack.c.h.b16 %v1419
  %v2968 = vunpack.c.l.b16 %v1420
  %v2969 = vunpack.c.h.b16 %v1420
  %v2970 = vpack.c.b16 %v2960, %v2958
  %v2971 = vpack.c.b16 %v2961, %v2959
  %v2972 = vpack.c.b16 %v2964, %v2962
  %v2973 = vpack.c.b16 %v2965, %v2963
  %v2974 = vpack.c.b16 %v2968, %v2966
  %v2975 = vpack.c.b16 %v2969, %v2967
  %vm2979 = vcmask 392192
  %v2981 = vsel %vm2979, %v2971, 0
  %v2984 = vsel %vm2979, %v2973, 0
  %v2987 = vsel %vm2979, %v2975, 0
  %2989 = vmatpush.bf16.msra.mxu0 %v2948
  %2990 = vmatpush.bf16.msra.mxu0 %v2947
  %2991 = vmatpush.bf16.msra.mxu0 %v2946
  %2992 = vmatpush.bf16.msra.mxu0 %v2945
  %2993 = vmatpush.bf16.msra.mxu0 %v2944
  %2994 = vmatpush.bf16.msra.mxu0 %v2943
  %2995 = vmatpush.bf16.msra.mxu0 %v2942
  %2996 = vmatpush.bf16.msra.mxu0 %v2941
  %2997 = vmatmul.bf16.gmra.mxu0 %v2970
  %v2998 = vpop.f32.mrf.mxu0
  %v2999 = vadd.f32 0.0, %v2998
  %v3000 = vpop.f32.mrf.mxu0
  %v3001 = vadd.f32 0.0, %v3000
  %3002 = vmatmul.bf16.gmra.mxu0 %v2972
  %v3003 = vpop.f32.mrf.mxu0
  %v3004 = vadd.f32 0.0, %v3003
  %v3005 = vpop.f32.mrf.mxu0
  %v3006 = vadd.f32 0.0, %v3005
  %3007 = vmatmul.bf16.gmra.mxu0 %v2974
  %v3008 = vpop.f32.mrf.mxu0
  %v3009 = vadd.f32 0.0, %v3008
  %v3010 = vpop.f32.mrf.mxu0
  %v3011 = vadd.f32 0.0, %v3010
  %3012 = vdwg.mxu0
  %3013 = vmatpush.bf16.msra.mxu0 0
  %3014 = vmatpush.bf16.msra.mxu0 0
  %3015 = vmatpush.bf16.msra.mxu0 0
  %3016 = vmatpush.bf16.msra.mxu0 0
  %3017 = vmatpush.bf16.msra.mxu0 0
  %3018 = vmatpush.bf16.msra.mxu0 %v2951
  %3019 = vmatpush.bf16.msra.mxu0 %v2950
  %3020 = vmatpush.bf16.msra.mxu0 %v2949
  %3021 = vmatmul.bf16.gmra.mxu0 %v2981
  %v3022 = vpop.f32.mrf.mxu0
  %v3023 = vadd.f32 %v2999, %v3022
  %v3024 = vpop.f32.mrf.mxu0
  %v3025 = vadd.f32 %v3001, %v3024
  %3026 = vmatmul.bf16.gmra.mxu0 %v2984
  %v3027 = vpop.f32.mrf.mxu0
  %v3028 = vadd.f32 %v3004, %v3027
  %v3029 = vpop.f32.mrf.mxu0
  %v3030 = vadd.f32 %v3006, %v3029
  %3031 = vmatmul.bf16.gmra.mxu0 %v2987
  %v3032 = vpop.f32.mrf.mxu0
  %v3033 = vadd.f32 %v3009, %v3032
  %v3034 = vpop.f32.mrf.mxu0
  %v3035 = vadd.f32 %v3011, %v3034
  %3036 = vdwg.mxu0
  %v3037 = vadd.f32 %v2927, %v3023
  %v3038 = vadd.f32 %v2929, %v3025
  %v3039 = vadd.f32 %v2932, %v3028
  %v3040 = vadd.f32 %v2934, %v3030
  %v3041 = vadd.f32 %v2937, %v3033
  %v3042 = vadd.f32 %v2939, %v3035
  %v3043 = vmax.f32 %v3037, 0.0
  %v3044 = vmax.f32 %v3038, 0.0
  %v3045 = vmax.f32 %v3039, 0.0
  %v3046 = vmax.f32 %v3040, 0.0
  %v3047 = vmax.f32 %v3041, 0.0
  %v3048 = vmax.f32 %v3042, 0.0
  %v3049 = vld [vmem:[%s6 + $0x10c] sm:$0xf]
  %v3050 = vld [vmem:[%s6 + $0x110] sm:$0xf]
  %v3051 = vld [vmem:[%s6 + $0x114] sm:$0xf]
  %v3052 = vld [vmem:[%s6 + $0x118] sm:$0xf]
  %v3053 = vpack.c.bf16 %v3044, %v3043
  %v3054 = vpack.c.bf16 %v3046, %v3045
  %v3055 = vpack.c.bf16 %v3048, %v3047
  %v3056 = vld [vmem:[%s7 + $0x1a] sm:$0x1]
  %v3057 = vperm.slane %v3056, 0
  %v3062 = vunpack.c.l.b16 %v3049
  %v3063 = vunpack.c.l.b16 %v3050
  %v3064 = vunpack.c.l.b16 %v3051
  %v3065 = vunpack.c.l.b16 %v3052
  %v3066 = vpack.c.b16 %v3063, %v3062
  %v3067 = vpack.c.b16 %v3065, %v3064
  %v3071 = vsel %vm107, %v3053, 0
  %v3074 = vsel %vm107, %v3054, 0
  %v3077 = vsel %vm107, %v3055, 0
  %3079 = vmatpush.bf16.msra.mxu0 0
  %3080 = vmatpush.bf16.msra.mxu0 0
  %3081 = vmatpush.bf16.msra.mxu0 0
  %3082 = vmatpush.bf16.msra.mxu0 0
  %3083 = vmatpush.bf16.msra.mxu0 0
  %3084 = vmatpush.bf16.msra.mxu0 0
  %3085 = vmatpush.bf16.msra.mxu0 %v3067
  %3086 = vmatpush.bf16.msra.mxu0 %v3066
  %3087 = vmatmul.bf16.gmra.mxu0 %v3071
  %v3088 = vpop.f32.mrf.mxu0
  %v3089 = vadd.f32 %v3057, %v3088
  %v3090 = vpop.f32.mrf.mxu0
  %v3091 = vadd.f32 %v3057, %v3090
  %3092 = vmatmul.bf16.gmra.mxu0 %v3074
  %v3093 = vpop.f32.mrf.mxu0
  %v3094 = vadd.f32 %v3057, %v3093
  %v3095 = vpop.f32.mrf.mxu0
  %v3096 = vadd.f32 %v3057, %v3095
  %3097 = vmatmul.bf16.gmra.mxu0 %v3077
  %v3098 = vpop.f32.mrf.mxu0
  %v3099 = vadd.f32 %v3057, %v3098
  %v3100 = vpop.f32.mrf.mxu0
  %v3101 = vadd.f32 %v3057, %v3100
  %3102 = vdwg.mxu0
  %v3103 = vmax.f32 %v3089, 0.0
  %v3104 = vmax.f32 %v3091, 0.0
  %v3105 = vmax.f32 %v3094, 0.0
  %v3106 = vmax.f32 %v3096, 0.0
  %v3107 = vmax.f32 %v3099, 0.0
  %v3108 = vmax.f32 %v3101, 0.0
  %v3109 = vld [vmem:[%s6 + $0x11c] sm:$0xf]
  %v3110 = vld [vmem:[%s6 + $0x120] sm:$0xf]
  %v3111 = vld [vmem:[%s6 + $0x124] sm:$0xf]
  %v3112 = vld [vmem:[%s6 + $0x128] sm:$0xf]
  %v3113 = vpack.c.bf16 %v3104, %v3103
  %v3114 = vpack.c.bf16 %v3106, %v3105
  %v3115 = vpack.c.bf16 %v3108, %v3107
  %v3116 = vld [vmem:[%s7 + $0x1b] sm:$0x1]
  %v3117 = vperm.slane %v3116, 0
  %v3122 = vunpack.c.l.b16 %v3109
  %v3123 = vunpack.c.l.b16 %v3110
  %v3124 = vunpack.c.l.b16 %v3111
  %v3125 = vunpack.c.l.b16 %v3112
  %v3126 = vpack.c.b16 %v3123, %v3122
  %v3127 = vpack.c.b16 %v3125, %v3124
  %v3131 = vsel %vm107, %v3113, 0
  %v3134 = vsel %vm107, %v3114, 0
  %v3137 = vsel %vm107, %v3115, 0
  %3139 = vmatpush.bf16.msra.mxu0 0
  %3140 = vmatpush.bf16.msra.mxu0 0
  %3141 = vmatpush.bf16.msra.mxu0 0
  %3142 = vmatpush.bf16.msra.mxu0 0
  %3143 = vmatpush.bf16.msra.mxu0 0
  %3144 = vmatpush.bf16.msra.mxu0 0
  %3145 = vmatpush.bf16.msra.mxu0 %v3127
  %3146 = vmatpush.bf16.msra.mxu0 %v3126
  %3147 = vmatmul.bf16.gmra.mxu0 %v3131
  %v3148 = vpop.f32.mrf.mxu0
  %v3149 = vadd.f32 %v3117, %v3148
  %v3150 = vpop.f32.mrf.mxu0
  %v3151 = vadd.f32 %v3117, %v3150
  %3152 = vmatmul.bf16.gmra.mxu0 %v3134
  %v3153 = vpop.f32.mrf.mxu0
  %v3154 = vadd.f32 %v3117, %v3153
  %v3155 = vpop.f32.mrf.mxu0
  %v3156 = vadd.f32 %v3117, %v3155
  %3157 = vmatmul.bf16.gmra.mxu0 %v3137
  %v3158 = vpop.f32.mrf.mxu0
  %v3159 = vadd.f32 %v3117, %v3158
  %v3160 = vpop.f32.mrf.mxu0
  %v3161 = vadd.f32 %v3117, %v3160
  %3162 = vdwg.mxu0
  %v3163 = vsel %vm107, %v3149, 0.0
  %3164 = vadd.xlane.f32.xlu0 %v3163
  %v3165 = vpop.xlane.xlu0 %3164
  %v3166 = vsel %vm107, %v3151, 0.0
  %3167 = vadd.xlane.f32.xlu0 %v3166
  %v3168 = vpop.xlane.xlu0 %3167
  %v3169 = vsel %vm107, %v3154, 0.0
  %3170 = vadd.xlane.f32.xlu0 %v3169
  %v3171 = vpop.xlane.xlu0 %3170
  %v3172 = vsel %vm107, %v3156, 0.0
  %3173 = vadd.xlane.f32.xlu0 %v3172
  %v3174 = vpop.xlane.xlu0 %3173
  %v3175 = vsel %vm107, %v3159, 0.0
  %3176 = vadd.xlane.f32.xlu0 %v3175
  %v3177 = vpop.xlane.xlu0 %3176
  %v3178 = vsel %vm107, %v3161, 0.0
  %3179 = vadd.xlane.f32.xlu0 %v3178
  %v3180 = vpop.xlane.xlu0 %3179
  %v3181 = vmul.f32 %v3165, %v225
  %v3182 = vmul.f32 %v3168, %v225
  %v3183 = vmul.f32 %v3171, %v225
  %v3184 = vmul.f32 %v3174, %v225
  %v3185 = vmul.f32 %v3177, %v225
  %v3186 = vmul.f32 %v3180, %v225
  %v3187 = vsub.f32 %v3149, %v3181
  %v3188 = vsub.f32 %v3151, %v3182
  %v3189 = vsub.f32 %v3154, %v3183
  %v3190 = vsub.f32 %v3156, %v3184
  %v3191 = vsub.f32 %v3159, %v3185
  %v3192 = vsub.f32 %v3161, %v3186
  %v3193 = vmul.f32 %v3187, %v3187
  %v3194 = vmul.f32 %v3188, %v3188
  %v3195 = vmul.f32 %v3189, %v3189
  %v3196 = vmul.f32 %v3190, %v3190
  %v3197 = vmul.f32 %v3191, %v3191
  %v3198 = vmul.f32 %v3192, %v3192
  %v3199 = vsel %vm107, %v3193, 0.0
  %3200 = vadd.xlane.f32.xlu0 %v3199
  %v3201 = vpop.xlane.xlu0 %3200
  %v3202 = vsel %vm107, %v3194, 0.0
  %3203 = vadd.xlane.f32.xlu0 %v3202
  %v3204 = vpop.xlane.xlu0 %3203
  %v3205 = vsel %vm107, %v3195, 0.0
  %3206 = vadd.xlane.f32.xlu0 %v3205
  %v3207 = vpop.xlane.xlu0 %3206
  %v3208 = vsel %vm107, %v3196, 0.0
  %3209 = vadd.xlane.f32.xlu0 %v3208
  %v3210 = vpop.xlane.xlu0 %3209
  %v3211 = vsel %vm107, %v3197, 0.0
  %3212 = vadd.xlane.f32.xlu0 %v3211
  %v3213 = vpop.xlane.xlu0 %3212
  %v3214 = vsel %vm107, %v3198, 0.0
  %3215 = vadd.xlane.f32.xlu0 %v3214
  %v3216 = vpop.xlane.xlu0 %3215
  %v3217 = vmul.f32 %v3201, %v225
  %v3218 = vmul.f32 %v3204, %v225
  %v3219 = vmul.f32 %v3207, %v225
  %v3220 = vmul.f32 %v3210, %v225
  %v3221 = vmul.f32 %v3213, %v225
  %v3222 = vmul.f32 %v3216, %v225
  %v3223 = vadd.f32 %v3217, 1e-05
  %v3224 = vadd.f32 %v3218, 1e-05
  %v3225 = vadd.f32 %v3219, 1e-05
  %v3226 = vadd.f32 %v3220, 1e-05
  %v3227 = vadd.f32 %v3221, 1e-05
  %v3228 = vadd.f32 %v3222, 1e-05
  %v3229 = vrsqrt.pop %v3223
  %v3230 = vmul.f32 %v3229, %v3223
  %v3231 = vmul.f32 %v3230, %v3229
  %v3232 = vmul.f32 0.5, %v3231
  %v3233 = vsub.f32 1.5, %v3232
  %v3234 = vmul.f32 %v3229, %v3233
  %vm3235 = vweird.f32 %v3223
  %vm3236 = vweird.f32 %v3229
  %vm3237 = vmor %vm3235, %vm3236
  %v3238 = vsel %vm3237, %v3229, %v3234
  %v3239 = vrsqrt.pop %v3224
  %v3240 = vmul.f32 %v3239, %v3224
  %v3241 = vmul.f32 %v3240, %v3239
  %v3242 = vmul.f32 0.5, %v3241
  %v3243 = vsub.f32 1.5, %v3242
  %v3244 = vmul.f32 %v3239, %v3243
  %vm3245 = vweird.f32 %v3224
  %vm3246 = vweird.f32 %v3239
  %vm3247 = vmor %vm3245, %vm3246
  %v3248 = vsel %vm3247, %v3239, %v3244
  %v3249 = vrsqrt.pop %v3225
  %v3250 = vmul.f32 %v3249, %v3225
  %v3251 = vmul.f32 %v3250, %v3249
  %v3252 = vmul.f32 0.5, %v3251
  %v3253 = vsub.f32 1.5, %v3252
  %v3254 = vmul.f32 %v3249, %v3253
  %vm3255 = vweird.f32 %v3225
  %vm3256 = vweird.f32 %v3249
  %vm3257 = vmor %vm3255, %vm3256
  %v3258 = vsel %vm3257, %v3249, %v3254
  %v3259 = vrsqrt.pop %v3226
  %v3260 = vmul.f32 %v3259, %v3226
  %v3261 = vmul.f32 %v3260, %v3259
  %v3262 = vmul.f32 0.5, %v3261
  %v3263 = vsub.f32 1.5, %v3262
  %v3264 = vmul.f32 %v3259, %v3263
  %vm3265 = vweird.f32 %v3226
  %vm3266 = vweird.f32 %v3259
  %vm3267 = vmor %vm3265, %vm3266
  %v3268 = vsel %vm3267, %v3259, %v3264
  %v3269 = vrsqrt.pop %v3227
  %v3270 = vmul.f32 %v3269, %v3227
  %v3271 = vmul.f32 %v3270, %v3269
  %v3272 = vmul.f32 0.5, %v3271
  %v3273 = vsub.f32 1.5, %v3272
  %v3274 = vmul.f32 %v3269, %v3273
  %vm3275 = vweird.f32 %v3227
  %vm3276 = vweird.f32 %v3269
  %vm3277 = vmor %vm3275, %vm3276
  %v3278 = vsel %vm3277, %v3269, %v3274
  %v3279 = vrsqrt.pop %v3228
  %v3280 = vmul.f32 %v3279, %v3228
  %v3281 = vmul.f32 %v3280, %v3279
  %v3282 = vmul.f32 0.5, %v3281
  %v3283 = vsub.f32 1.5, %v3282
  %v3284 = vmul.f32 %v3279, %v3283
  %vm3285 = vweird.f32 %v3228
  %vm3286 = vweird.f32 %v3279
  %vm3287 = vmor %vm3285, %vm3286
  %v3288 = vsel %vm3287, %v3279, %v3284
  %v3289 = vmul.f32 %v3187, %v3238
  %v3290 = vmul.f32 %v3188, %v3248
  %v3291 = vmul.f32 %v3189, %v3258
  %v3292 = vmul.f32 %v3190, %v3268
  %v3293 = vmul.f32 %v3191, %v3278
  %v3294 = vmul.f32 %v3192, %v3288
  %v3295 = vld [vmem:[%s7 + $0x1c] sm:$0x1]
  %v3296 = vperm.slane %v3295, 0
  %v3297 = vmul.f32 %v3289, %v3296
  %v3298 = vmul.f32 %v3290, %v3296
  %v3299 = vmul.f32 %v3291, %v3296
  %v3300 = vmul.f32 %v3292, %v3296
  %v3301 = vmul.f32 %v3293, %v3296
  %v3302 = vmul.f32 %v3294, %v3296
  %v3303 = vld [vmem:[%s7 + $0x1d] sm:$0x1]
  %v3304 = vperm.slane %v3303, 0
  %v3305 = vadd.f32 %v3297, %v3304
  %v3306 = vadd.f32 %v3298, %v3304
  %v3307 = vadd.f32 %v3299, %v3304
  %v3308 = vadd.f32 %v3300, %v3304
  %v3309 = vadd.f32 %v3301, %v3304
  %v3310 = vadd.f32 %v3302, %v3304
  %v3311 = vadd.f32 %v2150, %v903
  %v3312 = vadd.f32 %v2151, %v904
  %v3313 = vadd.f32 %v2152, %v905
  %v3314 = vadd.f32 %v2153, %v906
  %v3315 = vadd.f32 %v2154, %v907
  %v3316 = vadd.f32 %v2155, %v908
  %v3317 = vadd.f32 %v2156, %v909
  %v3318 = vadd.f32 %v2157, %v910
  %v3319 = vadd.f32 %v2158, %v911
  %v3320 = vadd.f32 %v2159, %v912
  %v3321 = vadd.f32 %v2160, %v913
  %v3322 = vadd.f32 %v2161, %v914
  %v3323 = vadd.f32 %v2740, %v1383
  %v3324 = vadd.f32 %v2741, %v1384
  %v3325 = vadd.f32 %v2742, %v1385
  %v3326 = vadd.f32 %v2743, %v1386
  %v3327 = vadd.f32 %v2744, %v1387
  %v3328 = vadd.f32 %v2745, %v1388
  %v3329 = vadd.f32 %v2746, %v1389
  %v3330 = vadd.f32 %v2747, %v1390
  %v3331 = vadd.f32 %v2748, %v1391
  %v3332 = vadd.f32 %v2749, %v1392
  %v3333 = vadd.f32 %v3305, %v350
  %v3334 = vadd.f32 %v3306, %v351
  %v3335 = vadd.f32 %v3307, %v352
  %v3336 = vadd.f32 %v3308, %v353
  %v3337 = vadd.f32 %v3309, %v354
  %v3338 = vadd.f32 %v3310, %v355
  %v3339 = vld [vmem:[%s6 + $0x12c] sm:$0xf]
  %v3340 = vld [vmem:[%s6 + $0x130] sm:$0xf]
  %v3341 = vld [vmem:[%s6 + $0x134] sm:$0xf]
  %v3342 = vld [vmem:[%s6 + $0x138] sm:$0xf]
  %v3343 = vpack.c.bf16 %v3334, %v3333
  %v3344 = vpack.c.bf16 %v3336, %v3335
  %v3345 = vpack.c.bf16 %v3338, %v3337
  %v3350 = vunpack.c.l.b16 %v3339
  %v3351 = vunpack.c.l.b16 %v3340
  %v3352 = vunpack.c.l.b16 %v3341
  %v3353 = vunpack.c.l.b16 %v3342
  %v3354 = vpack.c.b16 %v3351, %v3350
  %v3355 = vpack.c.b16 %v3353, %v3352
  %v3359 = vsel %vm107, %v3343, 0
  %v3362 = vsel %vm107, %v3344, 0
  %v3365 = vsel %vm107, %v3345, 0
  %3367 = vmatpush.bf16.msra.mxu0 0
  %3368 = vmatpush.bf16.msra.mxu0 0
  %3369 = vmatpush.bf16.msra.mxu0 0
  %3370 = vmatpush.bf16.msra.mxu0 0
  %3371 = vmatpush.bf16.msra.mxu0 0
  %3372 = vmatpush.bf16.msra.mxu0 0
  %3373 = vmatpush.bf16.msra.mxu0 %v3355
  %3374 = vmatpush.bf16.msra.mxu0 %v3354
  %3375 = vmatmul.bf16.gmra.mxu0 %v3359
  %v3376 = vpop.f32.mrf.mxu0
  %v3377 = vadd.f32 0.0, %v3376
  %v3378 = vpop.f32.mrf.mxu0
  %v3379 = vadd.f32 0.0, %v3378
  %3380 = vmatmul.bf16.gmra.mxu0 %v3362
  %v3381 = vpop.f32.mrf.mxu0
  %v3382 = vadd.f32 0.0, %v3381
  %v3383 = vpop.f32.mrf.mxu0
  %v3384 = vadd.f32 0.0, %v3383
  %3385 = vmatmul.bf16.gmra.mxu0 %v3365
  %v3386 = vpop.f32.mrf.mxu0
  %v3387 = vadd.f32 0.0, %v3386
  %v3388 = vpop.f32.mrf.mxu0
  %v3389 = vadd.f32 0.0, %v3388
  %3390 = vdwg.mxu0
  %3397 = vrot.lane.b32.xlu0 %v3377, 96
  %v3398 = vpop.permute.xlu0 %3397
  %3399 = vrot.lane.b32.xlu0 %v3379, 96
  %v3400 = vpop.permute.xlu0 %3399
  %3401 = vrot.lane.b32.xlu0 %v3382, 96
  %v3402 = vpop.permute.xlu0 %3401
  %3403 = vrot.lane.b32.xlu0 %v3384, 96
  %v3404 = vpop.permute.xlu0 %3403
  %3405 = vrot.lane.b32.xlu0 %v3387, 96
  %v3406 = vpop.permute.xlu0 %3405
  %3407 = vrot.lane.b32.xlu0 %v3389, 96
  %v3408 = vpop.permute.xlu0 %3407
  %v3415 = vpack.c.bf16 %v3379, %v3377
  %v3416 = vpack.c.bf16 %v3384, %v3382
  %v3417 = vpack.c.bf16 %v3389, %v3387
  %v3418 = vpack.c.bf16 %v3400, %v3398
  %v3419 = vpack.c.bf16 %v3404, %v3402
  %v3420 = vpack.c.bf16 %v3408, %v3406
  %v3421 = vld [vmem:[%s6 + $0x13c] sm:$0xf]
  %v3422 = vld [vmem:[%s6 + $0x140] sm:$0xf]
  %v3423 = vld [vmem:[%s6 + $0x144] sm:$0xf]
  %v3424 = vld [vmem:[%s6 + $0x148] sm:$0xf]
  %v3425 = vpack.c.bf16 %v3312, %v3311
  %v3426 = vpack.c.bf16 %v3314, %v3313
  %v3427 = vpack.c.bf16 %v3316, %v3315
  %v3428 = vpack.c.bf16 %v3318, %v3317
  %v3429 = vpack.c.bf16 %v3320, %v3319
  %v3430 = vpack.c.bf16 %v3322, %v3321
  %v3435 = vunpack.c.l.b16 %v3421
  %v3436 = vunpack.c.l.b16 %v3422
  %v3437 = vunpack.c.l.b16 %v3423
  %v3438 = vunpack.c.l.b16 %v3424
  %v3439 = vpack.c.b16 %v3436, %v3435
  %v3440 = vpack.c.b16 %v3438, %v3437
  %v3444 = vsel %vm107, %v3425, 0
  %v3447 = vsel %vm107, %v3426, 0
  %v3450 = vsel %vm107, %v3427, 0
  %v3453 = vsel %vm107, %v3428, 0
  %v3456 = vsel %vm107, %v3429, 0
  %v3459 = vsel %vm107, %v3430, 0
  %3461 = vmatpush.bf16.msra.mxu0 0
  %3462 = vmatpush.bf16.msra.mxu0 0
  %3463 = vmatpush.bf16.msra.mxu0 0
  %3464 = vmatpush.bf16.msra.mxu0 0
  %3465 = vmatpush.bf16.msra.mxu0 0
  %3466 = vmatpush.bf16.msra.mxu0 0
  %3467 = vmatpush.bf16.msra.mxu0 %v3440
  %3468 = vmatpush.bf16.msra.mxu0 %v3439
  %3469 = vmatmul.bf16.gmra.mxu0 %v3444
  %v3470 = vpop.f32.mrf.mxu0
  %v3471 = vadd.f32 0.0, %v3470
  %v3472 = vpop.f32.mrf.mxu0
  %v3473 = vadd.f32 0.0, %v3472
  %3474 = vmatmul.bf16.gmra.mxu0 %v3447
  %v3475 = vpop.f32.mrf.mxu0
  %v3476 = vadd.f32 0.0, %v3475
  %v3477 = vpop.f32.mrf.mxu0
  %v3478 = vadd.f32 0.0, %v3477
  %3479 = vmatmul.bf16.gmra.mxu0 %v3450
  %v3480 = vpop.f32.mrf.mxu0
  %v3481 = vadd.f32 0.0, %v3480
  %v3482 = vpop.f32.mrf.mxu0
  %v3483 = vadd.f32 0.0, %v3482
  %3484 = vmatmul.bf16.gmra.mxu0 %v3453
  %v3485 = vpop.f32.mrf.mxu0
  %v3486 = vadd.f32 0.0, %v3485
  %v3487 = vpop.f32.mrf.mxu0
  %v3488 = vadd.f32 0.0, %v3487
  %3489 = vmatmul.bf16.gmra.mxu0 %v3456
  %v3490 = vpop.f32.mrf.mxu0
  %v3491 = vadd.f32 0.0, %v3490
  %v3492 = vpop.f32.mrf.mxu0
  %v3493 = vadd.f32 0.0, %v3492
  %3494 = vmatmul.bf16.gmra.mxu0 %v3459
  %v3495 = vpop.f32.mrf.mxu0
  %v3496 = vadd.f32 0.0, %v3495
  %v3497 = vpop.f32.mrf.mxu0
  %v3498 = vadd.f32 0.0, %v3497
  %3499 = vdwg.mxu0
  %3500 = vmatpush.bf16.msra.mxu0 0
  %3501 = vmatpush.bf16.msra.mxu0 0
  %3502 = vmatpush.bf16.msra.mxu0 %v3420
  %3503 = vmatpush.bf16.msra.mxu0 %v3419
  %3504 = vmatpush.bf16.msra.mxu0 %v3418
  %3505 = vmatpush.bf16.msra.mxu0 %v3417
  %3506 = vmatpush.bf16.msra.mxu0 %v3416
  %3507 = vmatpush.bf16.msra.mxu0 %v3415
  %3508 = vmatmul.bf16.gmra.mxu0 %v1614
  %v3509 = vpop.f32.mrf.mxu0
  %v3510 = vadd.f32 %v3471, %v3509
  %v3511 = vpop.f32.mrf.mxu0
  %v3512 = vadd.f32 %v3473, %v3511
  %3513 = vmatmul.bf16.gmra.mxu0 %v1617
  %v3514 = vpop.f32.mrf.mxu0
  %v3515 = vadd.f32 %v3476, %v3514
  %v3516 = vpop.f32.mrf.mxu0
  %v3517 = vadd.f32 %v3478, %v3516
  %3518 = vmatmul.bf16.gmra.mxu0 %v1620
  %v3519 = vpop.f32.mrf.mxu0
  %v3520 = vadd.f32 %v3481, %v3519
  %v3521 = vpop.f32.mrf.mxu0
  %v3522 = vadd.f32 %v3483, %v3521
  %3523 = vmatmul.bf16.gmra.mxu0 %v1623
  %v3524 = vpop.f32.mrf.mxu0
  %v3525 = vadd.f32 %v3486, %v3524
  %v3526 = vpop.f32.mrf.mxu0
  %v3527 = vadd.f32 %v3488, %v3526
  %3528 = vmatmul.bf16.gmra.mxu0 %v1626
  %v3529 = vpop.f32.mrf.mxu0
  %v3530 = vadd.f32 %v3491, %v3529
  %v3531 = vpop.f32.mrf.mxu0
  %v3532 = vadd.f32 %v3493, %v3531
  %3533 = vmatmul.bf16.gmra.mxu0 %v1629
  %v3534 = vpop.f32.mrf.mxu0
  %v3535 = vadd.f32 %v3496, %v3534
  %v3536 = vpop.f32.mrf.mxu0
  %v3537 = vadd.f32 %v3498, %v3536
  %3538 = vdwg.mxu0
  %v3539 = vld [vmem:[%s7 + $0x1e] sm:$0x1]
  %v3540 = vperm.slane %v3539, 0
  %v3541 = vadd.f32 %v3510, %v3540
  %v3542 = vadd.f32 %v3512, %v3540
  %v3543 = vadd.f32 %v3515, %v3540
  %v3544 = vadd.f32 %v3517, %v3540
  %v3545 = vadd.f32 %v3520, %v3540
  %v3546 = vadd.f32 %v3522, %v3540
  %v3547 = vadd.f32 %v3525, %v3540
  %v3548 = vadd.f32 %v3527, %v3540
  %v3549 = vadd.f32 %v3530, %v3540
  %v3550 = vadd.f32 %v3532, %v3540
  %v3551 = vadd.f32 %v3535, %v3540
  %v3552 = vadd.f32 %v3537, %v3540
  %v3553 = vmax.f32 %v3541, 0.0
  %v3554 = vmax.f32 %v3542, 0.0
  %v3555 = vmax.f32 %v3543, 0.0
  %v3556 = vmax.f32 %v3544, 0.0
  %v3557 = vmax.f32 %v3545, 0.0
  %v3558 = vmax.f32 %v3546, 0.0
  %v3559 = vmax.f32 %v3547, 0.0
  %v3560 = vmax.f32 %v3548, 0.0
  %v3561 = vmax.f32 %v3549, 0.0
  %v3562 = vmax.f32 %v3550, 0.0
  %v3563 = vmax.f32 %v3551, 0.0
  %v3564 = vmax.f32 %v3552, 0.0
  %v3565 = vld [vmem:[%s6 + $0x14c] sm:$0xf]
  %v3566 = vld [vmem:[%s6 + $0x150] sm:$0xf]
  %v3567 = vld [vmem:[%s6 + $0x154] sm:$0xf]
  %v3568 = vld [vmem:[%s6 + $0x158] sm:$0xf]
  %v3569 = vpack.c.bf16 %v3554, %v3553
  %v3570 = vpack.c.bf16 %v3556, %v3555
  %v3571 = vpack.c.bf16 %v3558, %v3557
  %v3572 = vpack.c.bf16 %v3560, %v3559
  %v3573 = vpack.c.bf16 %v3562, %v3561
  %v3574 = vpack.c.bf16 %v3564, %v3563
  %v3575 = vld [vmem:[%s7 + $0x1f] sm:$0x1]
  %v3576 = vperm.slane %v3575, 0
  %v3581 = vunpack.c.l.b16 %v3565
  %v3582 = vunpack.c.l.b16 %v3566
  %v3583 = vunpack.c.l.b16 %v3567
  %v3584 = vunpack.c.l.b16 %v3568
  %v3585 = vpack.c.b16 %v3582, %v3581
  %v3586 = vpack.c.b16 %v3584, %v3583
  %v3590 = vsel %vm107, %v3569, 0
  %v3593 = vsel %vm107, %v3570, 0
  %v3596 = vsel %vm107, %v3571, 0
  %v3599 = vsel %vm107, %v3572, 0
  %v3602 = vsel %vm107, %v3573, 0
  %v3605 = vsel %vm107, %v3574, 0
  %3607 = vmatpush.bf16.msra.mxu0 0
  %3608 = vmatpush.bf16.msra.mxu0 0
  %3609 = vmatpush.bf16.msra.mxu0 0
  %3610 = vmatpush.bf16.msra.mxu0 0
  %3611 = vmatpush.bf16.msra.mxu0 0
  %3612 = vmatpush.bf16.msra.mxu0 0
  %3613 = vmatpush.bf16.msra.mxu0 %v3586
  %3614 = vmatpush.bf16.msra.mxu0 %v3585
  %3615 = vmatmul.bf16.gmra.mxu0 %v3590
  %v3616 = vpop.f32.mrf.mxu0
  %v3617 = vadd.f32 %v3576, %v3616
  %v3618 = vpop.f32.mrf.mxu0
  %v3619 = vadd.f32 %v3576, %v3618
  %3620 = vmatmul.bf16.gmra.mxu0 %v3593
  %v3621 = vpop.f32.mrf.mxu0
  %v3622 = vadd.f32 %v3576, %v3621
  %v3623 = vpop.f32.mrf.mxu0
  %v3624 = vadd.f32 %v3576, %v3623
  %3625 = vmatmul.bf16.gmra.mxu0 %v3596
  %v3626 = vpop.f32.mrf.mxu0
  %v3627 = vadd.f32 %v3576, %v3626
  %v3628 = vpop.f32.mrf.mxu0
  %v3629 = vadd.f32 %v3576, %v3628
  %3630 = vmatmul.bf16.gmra.mxu0 %v3599
  %v3631 = vpop.f32.mrf.mxu0
  %v3632 = vadd.f32 %v3576, %v3631
  %v3633 = vpop.f32.mrf.mxu0
  %v3634 = vadd.f32 %v3576, %v3633
  %3635 = vmatmul.bf16.gmra.mxu0 %v3602
  %v3636 = vpop.f32.mrf.mxu0
  %v3637 = vadd.f32 %v3576, %v3636
  %v3638 = vpop.f32.mrf.mxu0
  %v3639 = vadd.f32 %v3576, %v3638
  %3640 = vmatmul.bf16.gmra.mxu0 %v3605
  %v3641 = vpop.f32.mrf.mxu0
  %v3642 = vadd.f32 %v3576, %v3641
  %v3643 = vpop.f32.mrf.mxu0
  %v3644 = vadd.f32 %v3576, %v3643
  %3645 = vdwg.mxu0
  %v3646 = vmax.f32 %v3617, 0.0
  %v3647 = vmax.f32 %v3619, 0.0
  %v3648 = vmax.f32 %v3622, 0.0
  %v3649 = vmax.f32 %v3624, 0.0
  %v3650 = vmax.f32 %v3627, 0.0
  %v3651 = vmax.f32 %v3629, 0.0
  %v3652 = vmax.f32 %v3632, 0.0
  %v3653 = vmax.f32 %v3634, 0.0
  %v3654 = vmax.f32 %v3637, 0.0
  %v3655 = vmax.f32 %v3639, 0.0
  %v3656 = vmax.f32 %v3642, 0.0
  %v3657 = vmax.f32 %v3644, 0.0
  %v3658 = vld [vmem:[%s6 + $0x15c] sm:$0xf]
  %v3659 = vld [vmem:[%s6 + $0x160] sm:$0xf]
  %v3660 = vld [vmem:[%s6 + $0x164] sm:$0xf]
  %v3661 = vld [vmem:[%s6 + $0x168] sm:$0xf]
  %v3662 = vpack.c.bf16 %v3647, %v3646
  %v3663 = vpack.c.bf16 %v3649, %v3648
  %v3664 = vpack.c.bf16 %v3651, %v3650
  %v3665 = vpack.c.bf16 %v3653, %v3652
  %v3666 = vpack.c.bf16 %v3655, %v3654
  %v3667 = vpack.c.bf16 %v3657, %v3656
  %v3668 = vld [vmem:[%s7 + $0x20] sm:$0x1]
  %v3669 = vperm.slane %v3668, 0
  %v3674 = vunpack.c.l.b16 %v3658
  %v3675 = vunpack.c.l.b16 %v3659
  %v3676 = vunpack.c.l.b16 %v3660
  %v3677 = vunpack.c.l.b16 %v3661
  %v3678 = vpack.c.b16 %v3675, %v3674
  %v3679 = vpack.c.b16 %v3677, %v3676
  %v3683 = vsel %vm107, %v3662, 0
  %v3686 = vsel %vm107, %v3663, 0
  %v3689 = vsel %vm107, %v3664, 0
  %v3692 = vsel %vm107, %v3665, 0
  %v3695 = vsel %vm107, %v3666, 0
  %v3698 = vsel %vm107, %v3667, 0
  %3700 = vmatpush.bf16.msra.mxu0 0
  %3701 = vmatpush.bf16.msra.mxu0 0
  %3702 = vmatpush.bf16.msra.mxu0 0
  %3703 = vmatpush.bf16.msra.mxu0 0
  %3704 = vmatpush.bf16.msra.mxu0 0
  %3705 = vmatpush.bf16.msra.mxu0 0
  %3706 = vmatpush.bf16.msra.mxu0 %v3679
  %3707 = vmatpush.bf16.msra.mxu0 %v3678
  %3708 = vmatmul.bf16.gmra.mxu0 %v3683
  %v3709 = vpop.f32.mrf.mxu0
  %v3710 = vadd.f32 %v3669, %v3709
  %v3711 = vpop.f32.mrf.mxu0
  %v3712 = vadd.f32 %v3669, %v3711
  %3713 = vmatmul.bf16.gmra.mxu0 %v3686
  %v3714 = vpop.f32.mrf.mxu0
  %v3715 = vadd.f32 %v3669, %v3714
  %v3716 = vpop.f32.mrf.mxu0
  %v3717 = vadd.f32 %v3669, %v3716
  %3718 = vmatmul.bf16.gmra.mxu0 %v3689
  %v3719 = vpop.f32.mrf.mxu0
  %v3720 = vadd.f32 %v3669, %v3719
  %v3721 = vpop.f32.mrf.mxu0
  %v3722 = vadd.f32 %v3669, %v3721
  %3723 = vmatmul.bf16.gmra.mxu0 %v3692
  %v3724 = vpop.f32.mrf.mxu0
  %v3725 = vadd.f32 %v3669, %v3724
  %v3726 = vpop.f32.mrf.mxu0
  %v3727 = vadd.f32 %v3669, %v3726
  %3728 = vmatmul.bf16.gmra.mxu0 %v3695
  %v3729 = vpop.f32.mrf.mxu0
  %v3730 = vadd.f32 %v3669, %v3729
  %v3731 = vpop.f32.mrf.mxu0
  %v3732 = vadd.f32 %v3669, %v3731
  %3733 = vmatmul.bf16.gmra.mxu0 %v3698
  %v3734 = vpop.f32.mrf.mxu0
  %v3735 = vadd.f32 %v3669, %v3734
  %v3736 = vpop.f32.mrf.mxu0
  %v3737 = vadd.f32 %v3669, %v3736
  %3738 = vdwg.mxu0
  %v3739 = vsel %vm107, %v3710, 0.0
  %3740 = vadd.xlane.f32.xlu0 %v3739
  %v3741 = vpop.xlane.xlu0 %3740
  %v3742 = vsel %vm107, %v3712, 0.0
  %3743 = vadd.xlane.f32.xlu0 %v3742
  %v3744 = vpop.xlane.xlu0 %3743
  %v3745 = vsel %vm107, %v3715, 0.0
  %3746 = vadd.xlane.f32.xlu0 %v3745
  %v3747 = vpop.xlane.xlu0 %3746
  %v3748 = vsel %vm107, %v3717, 0.0
  %3749 = vadd.xlane.f32.xlu0 %v3748
  %v3750 = vpop.xlane.xlu0 %3749
  %v3751 = vsel %vm107, %v3720, 0.0
  %3752 = vadd.xlane.f32.xlu0 %v3751
  %v3753 = vpop.xlane.xlu0 %3752
  %v3754 = vsel %vm107, %v3722, 0.0
  %3755 = vadd.xlane.f32.xlu0 %v3754
  %v3756 = vpop.xlane.xlu0 %3755
  %v3757 = vsel %vm107, %v3725, 0.0
  %3758 = vadd.xlane.f32.xlu0 %v3757
  %v3759 = vpop.xlane.xlu0 %3758
  %v3760 = vsel %vm107, %v3727, 0.0
  %3761 = vadd.xlane.f32.xlu0 %v3760
  %v3762 = vpop.xlane.xlu0 %3761
  %v3763 = vsel %vm107, %v3730, 0.0
  %3764 = vadd.xlane.f32.xlu0 %v3763
  %v3765 = vpop.xlane.xlu0 %3764
  %v3766 = vsel %vm107, %v3732, 0.0
  %3767 = vadd.xlane.f32.xlu0 %v3766
  %v3768 = vpop.xlane.xlu0 %3767
  %v3769 = vsel %vm107, %v3735, 0.0
  %3770 = vadd.xlane.f32.xlu0 %v3769
  %v3771 = vpop.xlane.xlu0 %3770
  %v3772 = vsel %vm107, %v3737, 0.0
  %3773 = vadd.xlane.f32.xlu0 %v3772
  %v3774 = vpop.xlane.xlu0 %3773
  %v3775 = vmul.f32 %v3741, %v225
  %v3776 = vmul.f32 %v3744, %v225
  %v3777 = vmul.f32 %v3747, %v225
  %v3778 = vmul.f32 %v3750, %v225
  %v3779 = vmul.f32 %v3753, %v225
  %v3780 = vmul.f32 %v3756, %v225
  %v3781 = vmul.f32 %v3759, %v225
  %v3782 = vmul.f32 %v3762, %v225
  %v3783 = vmul.f32 %v3765, %v225
  %v3784 = vmul.f32 %v3768, %v225
  %v3785 = vmul.f32 %v3771, %v225
  %v3786 = vmul.f32 %v3774, %v225
  %v3787 = vsub.f32 %v3710, %v3775
  %v3788 = vsub.f32 %v3712, %v3776
  %v3789 = vsub.f32 %v3715, %v3777
  %v3790 = vsub.f32 %v3717, %v3778
  %v3791 = vsub.f32 %v3720, %v3779
  %v3792 = vsub.f32 %v3722, %v3780
  %v3793 = vsub.f32 %v3725, %v3781
  %v3794 = vsub.f32 %v3727, %v3782
  %v3795 = vsub.f32 %v3730, %v3783
  %v3796 = vsub.f32 %v3732, %v3784
  %v3797 = vsub.f32 %v3735, %v3785
  %v3798 = vsub.f32 %v3737, %v3786
  %v3799 = vmul.f32 %v3787, %v3787
  %v3800 = vmul.f32 %v3788, %v3788
  %v3801 = vmul.f32 %v3789, %v3789
  %v3802 = vmul.f32 %v3790, %v3790
  %v3803 = vmul.f32 %v3791, %v3791
  %v3804 = vmul.f32 %v3792, %v3792
  %v3805 = vmul.f32 %v3793, %v3793
  %v3806 = vmul.f32 %v3794, %v3794
  %v3807 = vmul.f32 %v3795, %v3795
  %v3808 = vmul.f32 %v3796, %v3796
  %v3809 = vmul.f32 %v3797, %v3797
  %v3810 = vmul.f32 %v3798, %v3798
  %v3811 = vsel %vm107, %v3799, 0.0
  %3812 = vadd.xlane.f32.xlu0 %v3811
  %v3813 = vpop.xlane.xlu0 %3812
  %v3814 = vsel %vm107, %v3800, 0.0
  %3815 = vadd.xlane.f32.xlu0 %v3814
  %v3816 = vpop.xlane.xlu0 %3815
  %v3817 = vsel %vm107, %v3801, 0.0
  %3818 = vadd.xlane.f32.xlu0 %v3817
  %v3819 = vpop.xlane.xlu0 %3818
  %v3820 = vsel %vm107, %v3802, 0.0
  %3821 = vadd.xlane.f32.xlu0 %v3820
  %v3822 = vpop.xlane.xlu0 %3821
  %v3823 = vsel %vm107, %v3803, 0.0
  %3824 = vadd.xlane.f32.xlu0 %v3823
  %v3825 = vpop.xlane.xlu0 %3824
  %v3826 = vsel %vm107, %v3804, 0.0
  %3827 = vadd.xlane.f32.xlu0 %v3826
  %v3828 = vpop.xlane.xlu0 %3827
  %v3829 = vsel %vm107, %v3805, 0.0
  %3830 = vadd.xlane.f32.xlu0 %v3829
  %v3831 = vpop.xlane.xlu0 %3830
  %v3832 = vsel %vm107, %v3806, 0.0
  %3833 = vadd.xlane.f32.xlu0 %v3832
  %v3834 = vpop.xlane.xlu0 %3833
  %v3835 = vsel %vm107, %v3807, 0.0
  %3836 = vadd.xlane.f32.xlu0 %v3835
  %v3837 = vpop.xlane.xlu0 %3836
  %v3838 = vsel %vm107, %v3808, 0.0
  %3839 = vadd.xlane.f32.xlu0 %v3838
  %v3840 = vpop.xlane.xlu0 %3839
  %v3841 = vsel %vm107, %v3809, 0.0
  %3842 = vadd.xlane.f32.xlu0 %v3841
  %v3843 = vpop.xlane.xlu0 %3842
  %v3844 = vsel %vm107, %v3810, 0.0
  %3845 = vadd.xlane.f32.xlu0 %v3844
  %v3846 = vpop.xlane.xlu0 %3845
  %v3847 = vmul.f32 %v3813, %v225
  %v3848 = vmul.f32 %v3816, %v225
  %v3849 = vmul.f32 %v3819, %v225
  %v3850 = vmul.f32 %v3822, %v225
  %v3851 = vmul.f32 %v3825, %v225
  %v3852 = vmul.f32 %v3828, %v225
  %v3853 = vmul.f32 %v3831, %v225
  %v3854 = vmul.f32 %v3834, %v225
  %v3855 = vmul.f32 %v3837, %v225
  %v3856 = vmul.f32 %v3840, %v225
  %v3857 = vmul.f32 %v3843, %v225
  %v3858 = vmul.f32 %v3846, %v225
  %v3859 = vadd.f32 %v3847, 1e-05
  %v3860 = vadd.f32 %v3848, 1e-05
  %v3861 = vadd.f32 %v3849, 1e-05
  %v3862 = vadd.f32 %v3850, 1e-05
  %v3863 = vadd.f32 %v3851, 1e-05
  %v3864 = vadd.f32 %v3852, 1e-05
  %v3865 = vadd.f32 %v3853, 1e-05
  %v3866 = vadd.f32 %v3854, 1e-05
  %v3867 = vadd.f32 %v3855, 1e-05
  %v3868 = vadd.f32 %v3856, 1e-05
  %v3869 = vadd.f32 %v3857, 1e-05
  %v3870 = vadd.f32 %v3858, 1e-05
  %v3871 = vrsqrt.pop %v3859
  %v3872 = vmul.f32 %v3871, %v3859
  %v3873 = vmul.f32 %v3872, %v3871
  %v3874 = vmul.f32 0.5, %v3873
  %v3875 = vsub.f32 1.5, %v3874
  %v3876 = vmul.f32 %v3871, %v3875
  %vm3877 = vweird.f32 %v3859
  %vm3878 = vweird.f32 %v3871
  %vm3879 = vmor %vm3877, %vm3878
  %v3880 = vsel %vm3879, %v3871, %v3876
  %v3881 = vrsqrt.pop %v3860
  %v3882 = vmul.f32 %v3881, %v3860
  %v3883 = vmul.f32 %v3882, %v3881
  %v3884 = vmul.f32 0.5, %v3883
  %v3885 = vsub.f32 1.5, %v3884
  %v3886 = vmul.f32 %v3881, %v3885
  %vm3887 = vweird.f32 %v3860
  %vm3888 = vweird.f32 %v3881
  %vm3889 = vmor %vm3887, %vm3888
  %v3890 = vsel %vm3889, %v3881, %v3886
  %v3891 = vrsqrt.pop %v3861
  %v3892 = vmul.f32 %v3891, %v3861
  %v3893 = vmul.f32 %v3892, %v3891
  %v3894 = vmul.f32 0.5, %v3893
  %v3895 = vsub.f32 1.5, %v3894
  %v3896 = vmul.f32 %v3891, %v3895
  %vm3897 = vweird.f32 %v3861
  %vm3898 = vweird.f32 %v3891
  %vm3899 = vmor %vm3897, %vm3898
  %v3900 = vsel %vm3899, %v3891, %v3896
  %v3901 = vrsqrt.pop %v3862
  %v3902 = vmul.f32 %v3901, %v3862
  %v3903 = vmul.f32 %v3902, %v3901
  %v3904 = vmul.f32 0.5, %v3903
  %v3905 = vsub.f32 1.5, %v3904
  %v3906 = vmul.f32 %v3901, %v3905
  %vm3907 = vweird.f32 %v3862
  %vm3908 = vweird.f32 %v3901
  %vm3909 = vmor %vm3907, %vm3908
  %v3910 = vsel %vm3909, %v3901, %v3906
  %v3911 = vrsqrt.pop %v3863
  %v3912 = vmul.f32 %v3911, %v3863
  %v3913 = vmul.f32 %v3912, %v3911
  %v3914 = vmul.f32 0.5, %v3913
  %v3915 = vsub.f32 1.5, %v3914
  %v3916 = vmul.f32 %v3911, %v3915
  %vm3917 = vweird.f32 %v3863
  %vm3918 = vweird.f32 %v3911
  %vm3919 = vmor %vm3917, %vm3918
  %v3920 = vsel %vm3919, %v3911, %v3916
  %v3921 = vrsqrt.pop %v3864
  %v3922 = vmul.f32 %v3921, %v3864
  %v3923 = vmul.f32 %v3922, %v3921
  %v3924 = vmul.f32 0.5, %v3923
  %v3925 = vsub.f32 1.5, %v3924
  %v3926 = vmul.f32 %v3921, %v3925
  %vm3927 = vweird.f32 %v3864
  %vm3928 = vweird.f32 %v3921
  %vm3929 = vmor %vm3927, %vm3928
  %v3930 = vsel %vm3929, %v3921, %v3926
  %v3931 = vrsqrt.pop %v3865
  %v3932 = vmul.f32 %v3931, %v3865
  %v3933 = vmul.f32 %v3932, %v3931
  %v3934 = vmul.f32 0.5, %v3933
  %v3935 = vsub.f32 1.5, %v3934
  %v3936 = vmul.f32 %v3931, %v3935
  %vm3937 = vweird.f32 %v3865
  %vm3938 = vweird.f32 %v3931
  %vm3939 = vmor %vm3937, %vm3938
  %v3940 = vsel %vm3939, %v3931, %v3936
  %v3941 = vrsqrt.pop %v3866
  %v3942 = vmul.f32 %v3941, %v3866
  %v3943 = vmul.f32 %v3942, %v3941
  %v3944 = vmul.f32 0.5, %v3943
  %v3945 = vsub.f32 1.5, %v3944
  %v3946 = vmul.f32 %v3941, %v3945
  %vm3947 = vweird.f32 %v3866
  %vm3948 = vweird.f32 %v3941
  %vm3949 = vmor %vm3947, %vm3948
  %v3950 = vsel %vm3949, %v3941, %v3946
  %v3951 = vrsqrt.pop %v3867
  %v3952 = vmul.f32 %v3951, %v3867
  %v3953 = vmul.f32 %v3952, %v3951
  %v3954 = vmul.f32 0.5, %v3953
  %v3955 = vsub.f32 1.5, %v3954
  %v3956 = vmul.f32 %v3951, %v3955
  %vm3957 = vweird.f32 %v3867
  %vm3958 = vweird.f32 %v3951
  %vm3959 = vmor %vm3957, %vm3958
  %v3960 = vsel %vm3959, %v3951, %v3956
  %v3961 = vrsqrt.pop %v3868
  %v3962 = vmul.f32 %v3961, %v3868
  %v3963 = vmul.f32 %v3962, %v3961
  %v3964 = vmul.f32 0.5, %v3963
  %v3965 = vsub.f32 1.5, %v3964
  %v3966 = vmul.f32 %v3961, %v3965
  %vm3967 = vweird.f32 %v3868
  %vm3968 = vweird.f32 %v3961
  %vm3969 = vmor %vm3967, %vm3968
  %v3970 = vsel %vm3969, %v3961, %v3966
  %v3971 = vrsqrt.pop %v3869
  %v3972 = vmul.f32 %v3971, %v3869
  %v3973 = vmul.f32 %v3972, %v3971
  %v3974 = vmul.f32 0.5, %v3973
  %v3975 = vsub.f32 1.5, %v3974
  %v3976 = vmul.f32 %v3971, %v3975
  %vm3977 = vweird.f32 %v3869
  %vm3978 = vweird.f32 %v3971
  %vm3979 = vmor %vm3977, %vm3978
  %v3980 = vsel %vm3979, %v3971, %v3976
  %v3981 = vrsqrt.pop %v3870
  %v3982 = vmul.f32 %v3981, %v3870
  %v3983 = vmul.f32 %v3982, %v3981
  %v3984 = vmul.f32 0.5, %v3983
  %v3985 = vsub.f32 1.5, %v3984
  %v3986 = vmul.f32 %v3981, %v3985
  %vm3987 = vweird.f32 %v3870
  %vm3988 = vweird.f32 %v3981
  %vm3989 = vmor %vm3987, %vm3988
  %v3990 = vsel %vm3989, %v3981, %v3986
  %v3991 = vmul.f32 %v3787, %v3880
  %v3992 = vmul.f32 %v3788, %v3890
  %v3993 = vmul.f32 %v3789, %v3900
  %v3994 = vmul.f32 %v3790, %v3910
  %v3995 = vmul.f32 %v3791, %v3920
  %v3996 = vmul.f32 %v3792, %v3930
  %v3997 = vmul.f32 %v3793, %v3940
  %v3998 = vmul.f32 %v3794, %v3950
  %v3999 = vmul.f32 %v3795, %v3960
  %v4000 = vmul.f32 %v3796, %v3970
  %v4001 = vmul.f32 %v3797, %v3980
  %v4002 = vmul.f32 %v3798, %v3990
  %v4003 = vld [vmem:[%s7 + $0x21] sm:$0x1]
  %v4004 = vperm.slane %v4003, 0
  %v4005 = vmul.f32 %v3991, %v4004
  %v4006 = vmul.f32 %v3992, %v4004
  %v4007 = vmul.f32 %v3993, %v4004
  %v4008 = vmul.f32 %v3994, %v4004
  %v4009 = vmul.f32 %v3995, %v4004
  %v4010 = vmul.f32 %v3996, %v4004
  %v4011 = vmul.f32 %v3997, %v4004
  %v4012 = vmul.f32 %v3998, %v4004
  %v4013 = vmul.f32 %v3999, %v4004
  %v4014 = vmul.f32 %v4000, %v4004
  %v4015 = vmul.f32 %v4001, %v4004
  %v4016 = vmul.f32 %v4002, %v4004
  %v4017 = vld [vmem:[%s7 + $0x22] sm:$0x1]
  %v4018 = vperm.slane %v4017, 0
  %v4019 = vadd.f32 %v4005, %v4018
  %v4020 = vadd.f32 %v4006, %v4018
  %v4021 = vadd.f32 %v4007, %v4018
  %v4022 = vadd.f32 %v4008, %v4018
  %v4023 = vadd.f32 %v4009, %v4018
  %v4024 = vadd.f32 %v4010, %v4018
  %v4025 = vadd.f32 %v4011, %v4018
  %v4026 = vadd.f32 %v4012, %v4018
  %v4027 = vadd.f32 %v4013, %v4018
  %v4028 = vadd.f32 %v4014, %v4018
  %v4029 = vadd.f32 %v4015, %v4018
  %v4030 = vadd.f32 %v4016, %v4018
  %v4031 = vld [vmem:[%s6 + $0x16c] sm:$0xf]
  %v4032 = vld [vmem:[%s6 + $0x170] sm:$0xf]
  %v4033 = vld [vmem:[%s6 + $0x174] sm:$0xf]
  %v4034 = vld [vmem:[%s6 + $0x178] sm:$0xf]
  %v4035 = vpack.c.bf16 %v3324, %v3323
  %v4036 = vpack.c.bf16 %v3326, %v3325
  %v4037 = vpack.c.bf16 %v3328, %v3327
  %v4038 = vpack.c.bf16 %v3330, %v3329
  %v4039 = vpack.c.bf16 %v3332, %v3331
  %v4044 = vunpack.c.l.b16 %v4031
  %v4045 = vunpack.c.l.b16 %v4032
  %v4046 = vunpack.c.l.b16 %v4033
  %v4047 = vunpack.c.l.b16 %v4034
  %v4048 = vpack.c.b16 %v4045, %v4044
  %v4049 = vpack.c.b16 %v4047, %v4046
  %v4053 = vsel %vm107, %v4035, 0
  %v4056 = vsel %vm107, %v4036, 0
  %v4059 = vsel %vm107, %v4037, 0
  %v4062 = vsel %vm107, %v4038, 0
  %v4065 = vsel %vm107, %v4039, 0
  %4067 = vmatpush.bf16.msra.mxu0 0
  %4068 = vmatpush.bf16.msra.mxu0 0
  %4069 = vmatpush.bf16.msra.mxu0 0
  %4070 = vmatpush.bf16.msra.mxu0 0
  %4071 = vmatpush.bf16.msra.mxu0 0
  %4072 = vmatpush.bf16.msra.mxu0 0
  %4073 = vmatpush.bf16.msra.mxu0 %v4049
  %4074 = vmatpush.bf16.msra.mxu0 %v4048
  %4075 = vmatmul.bf16.gmra.mxu0 %v4053
  %v4076 = vpop.f32.mrf.mxu0
  %v4077 = vadd.f32 0.0, %v4076
  %v4078 = vpop.f32.mrf.mxu0
  %v4079 = vadd.f32 0.0, %v4078
  %4080 = vmatmul.bf16.gmra.mxu0 %v4056
  %v4081 = vpop.f32.mrf.mxu0
  %v4082 = vadd.f32 0.0, %v4081
  %v4083 = vpop.f32.mrf.mxu0
  %v4084 = vadd.f32 0.0, %v4083
  %4085 = vmatmul.bf16.gmra.mxu0 %v4059
  %v4086 = vpop.f32.mrf.mxu0
  %v4087 = vadd.f32 0.0, %v4086
  %v4088 = vpop.f32.mrf.mxu0
  %v4089 = vadd.f32 0.0, %v4088
  %4090 = vmatmul.bf16.gmra.mxu0 %v4062
  %v4091 = vpop.f32.mrf.mxu0
  %v4092 = vadd.f32 0.0, %v4091
  %v4093 = vpop.f32.mrf.mxu0
  %v4094 = vadd.f32 0.0, %v4093
  %4095 = vmatmul.bf16.gmra.mxu0 %v4065
  %v4096 = vpop.f32.mrf.mxu0
  %v4097 = vadd.f32 0.0, %v4096
  %v4098 = vpop.f32.mrf.mxu0
  %v4099 = vadd.f32 0.0, %v4098
  %4100 = vdwg.mxu0
  %4107 = vrot.lane.b32.xlu0 %v3415, 64
  %v4108 = vpop.permute.xlu0 %4107
  %4109 = vrot.lane.b32.xlu0 %v3416, 64
  %v4110 = vpop.permute.xlu0 %4109
  %4111 = vrot.lane.b32.xlu0 %v3417, 64
  %v4112 = vpop.permute.xlu0 %4111
  %4113 = vrot.lane.b32.xlu0 %v3418, 64
  %v4114 = vpop.permute.xlu0 %4113
  %4115 = vrot.lane.b32.xlu0 %v3419, 64
  %v4116 = vpop.permute.xlu0 %4115
  %4117 = vrot.lane.b32.xlu0 %v3420, 64
  %v4118 = vpop.permute.xlu0 %4117
  %4125 = vmatpush.bf16.msra.mxu0 0
  %4126 = vmatpush.bf16.msra.mxu0 0
  %4127 = vmatpush.bf16.msra.mxu0 %v4118
  %4128 = vmatpush.bf16.msra.mxu0 %v4116
  %4129 = vmatpush.bf16.msra.mxu0 %v4114
  %4130 = vmatpush.bf16.msra.mxu0 %v4112
  %4131 = vmatpush.bf16.msra.mxu0 %v4110
  %4132 = vmatpush.bf16.msra.mxu0 %v4108
  %4133 = vmatmul.bf16.gmra.mxu0 %v2282
  %v4134 = vpop.f32.mrf.mxu0
  %v4135 = vadd.f32 %v4077, %v4134
  %v4136 = vpop.f32.mrf.mxu0
  %v4137 = vadd.f32 %v4079, %v4136
  %4138 = vmatmul.bf16.gmra.mxu0 %v2285
  %v4139 = vpop.f32.mrf.mxu0
  %v4140 = vadd.f32 %v4082, %v4139
  %v4141 = vpop.f32.mrf.mxu0
  %v4142 = vadd.f32 %v4084, %v4141
  %4143 = vmatmul.bf16.gmra.mxu0 %v2288
  %v4144 = vpop.f32.mrf.mxu0
  %v4145 = vadd.f32 %v4087, %v4144
  %v4146 = vpop.f32.mrf.mxu0
  %v4147 = vadd.f32 %v4089, %v4146
  %4148 = vmatmul.bf16.gmra.mxu0 %v2291
  %v4149 = vpop.f32.mrf.mxu0
  %v4150 = vadd.f32 %v4092, %v4149
  %v4151 = vpop.f32.mrf.mxu0
  %v4152 = vadd.f32 %v4094, %v4151
  %4153 = vmatmul.bf16.gmra.mxu0 %v2294
  %v4154 = vpop.f32.mrf.mxu0
  %v4155 = vadd.f32 %v4097, %v4154
  %v4156 = vpop.f32.mrf.mxu0
  %v4157 = vadd.f32 %v4099, %v4156
  %4158 = vdwg.mxu0
  %v4159 = vld [vmem:[%s7 + $0x23] sm:$0x1]
  %v4160 = vperm.slane %v4159, 0
  %v4161 = vadd.f32 %v4135, %v4160
  %v4162 = vadd.f32 %v4137, %v4160
  %v4163 = vadd.f32 %v4140, %v4160
  %v4164 = vadd.f32 %v4142, %v4160
  %v4165 = vadd.f32 %v4145, %v4160
  %v4166 = vadd.f32 %v4147, %v4160
  %v4167 = vadd.f32 %v4150, %v4160
  %v4168 = vadd.f32 %v4152, %v4160
  %v4169 = vadd.f32 %v4155, %v4160
  %v4170 = vadd.f32 %v4157, %v4160
  %v4171 = vmax.f32 %v4161, 0.0
  %v4172 = vmax.f32 %v4162, 0.0
  %v4173 = vmax.f32 %v4163, 0.0
  %v4174 = vmax.f32 %v4164, 0.0
  %v4175 = vmax.f32 %v4165, 0.0
  %v4176 = vmax.f32 %v4166, 0.0
  %v4177 = vmax.f32 %v4167, 0.0
  %v4178 = vmax.f32 %v4168, 0.0
  %v4179 = vmax.f32 %v4169, 0.0
  %v4180 = vmax.f32 %v4170, 0.0
  %v4181 = vld [vmem:[%s6 + $0x17c] sm:$0xf]
  %v4182 = vld [vmem:[%s6 + $0x180] sm:$0xf]
  %v4183 = vld [vmem:[%s6 + $0x184] sm:$0xf]
  %v4184 = vld [vmem:[%s6 + $0x188] sm:$0xf]
  %v4185 = vpack.c.bf16 %v4172, %v4171
  %v4186 = vpack.c.bf16 %v4174, %v4173
  %v4187 = vpack.c.bf16 %v4176, %v4175
  %v4188 = vpack.c.bf16 %v4178, %v4177
  %v4189 = vpack.c.bf16 %v4180, %v4179
  %v4190 = vld [vmem:[%s7 + $0x24] sm:$0x1]
  %v4191 = vperm.slane %v4190, 0
  %v4196 = vunpack.c.l.b16 %v4181
  %v4197 = vunpack.c.l.b16 %v4182
  %v4198 = vunpack.c.l.b16 %v4183
  %v4199 = vunpack.c.l.b16 %v4184
  %v4200 = vpack.c.b16 %v4197, %v4196
  %v4201 = vpack.c.b16 %v4199, %v4198
  %v4205 = vsel %vm107, %v4185, 0
  %v4208 = vsel %vm107, %v4186, 0
  %v4211 = vsel %vm107, %v4187, 0
  %v4214 = vsel %vm107, %v4188, 0
  %v4217 = vsel %vm107, %v4189, 0
  %4219 = vmatpush.bf16.msra.mxu0 0
  %4220 = vmatpush.bf16.msra.mxu0 0
  %4221 = vmatpush.bf16.msra.mxu0 0
  %4222 = vmatpush.bf16.msra.mxu0 0
  %4223 = vmatpush.bf16.msra.mxu0 0
  %4224 = vmatpush.bf16.msra.mxu0 0
  %4225 = vmatpush.bf16.msra.mxu0 %v4201
  %4226 = vmatpush.bf16.msra.mxu0 %v4200
  %4227 = vmatmul.bf16.gmra.mxu0 %v4205
  %v4228 = vpop.f32.mrf.mxu0
  %v4229 = vadd.f32 %v4191, %v4228
  %v4230 = vpop.f32.mrf.mxu0
  %v4231 = vadd.f32 %v4191, %v4230
  %4232 = vmatmul.bf16.gmra.mxu0 %v4208
  %v4233 = vpop.f32.mrf.mxu0
  %v4234 = vadd.f32 %v4191, %v4233
  %v4235 = vpop.f32.mrf.mxu0
  %v4236 = vadd.f32 %v4191, %v4235
  %4237 = vmatmul.bf16.gmra.mxu0 %v4211
  %v4238 = vpop.f32.mrf.mxu0
  %v4239 = vadd.f32 %v4191, %v4238
  %v4240 = vpop.f32.mrf.mxu0
  %v4241 = vadd.f32 %v4191, %v4240
  %4242 = vmatmul.bf16.gmra.mxu0 %v4214
  %v4243 = vpop.f32.mrf.mxu0
  %v4244 = vadd.f32 %v4191, %v4243
  %v4245 = vpop.f32.mrf.mxu0
  %v4246 = vadd.f32 %v4191, %v4245
  %4247 = vmatmul.bf16.gmra.mxu0 %v4217
  %v4248 = vpop.f32.mrf.mxu0
  %v4249 = vadd.f32 %v4191, %v4248
  %v4250 = vpop.f32.mrf.mxu0
  %v4251 = vadd.f32 %v4191, %v4250
  %4252 = vdwg.mxu0
  %v4253 = vmax.f32 %v4229, 0.0
  %v4254 = vmax.f32 %v4231, 0.0
  %v4255 = vmax.f32 %v4234, 0.0
  %v4256 = vmax.f32 %v4236, 0.0
  %v4257 = vmax.f32 %v4239, 0.0
  %v4258 = vmax.f32 %v4241, 0.0
  %v4259 = vmax.f32 %v4244, 0.0
  %v4260 = vmax.f32 %v4246, 0.0
  %v4261 = vmax.f32 %v4249, 0.0
  %v4262 = vmax.f32 %v4251, 0.0
  %v4263 = vld [vmem:[%s6 + $0x18c] sm:$0xf]
  %v4264 = vld [vmem:[%s6 + $0x190] sm:$0xf]
  %v4265 = vld [vmem:[%s6 + $0x194] sm:$0xf]
  %v4266 = vld [vmem:[%s6 + $0x198] sm:$0xf]
  %v4267 = vpack.c.bf16 %v4254, %v4253
  %v4268 = vpack.c.bf16 %v4256, %v4255
  %v4269 = vpack.c.bf16 %v4258, %v4257
  %v4270 = vpack.c.bf16 %v4260, %v4259
  %v4271 = vpack.c.bf16 %v4262, %v4261
  %v4272 = vld [vmem:[%s7 + $0x25] sm:$0x1]
  %v4273 = vperm.slane %v4272, 0
  %v4278 = vunpack.c.l.b16 %v4263
  %v4279 = vunpack.c.l.b16 %v4264
  %v4280 = vunpack.c.l.b16 %v4265
  %v4281 = vunpack.c.l.b16 %v4266
  %v4282 = vpack.c.b16 %v4279, %v4278
  %v4283 = vpack.c.b16 %v4281, %v4280
  %v4287 = vsel %vm107, %v4267, 0
  %v4290 = vsel %vm107, %v4268, 0
  %v4293 = vsel %vm107, %v4269, 0
  %v4296 = vsel %vm107, %v4270, 0
  %v4299 = vsel %vm107, %v4271, 0
  %4301 = vmatpush.bf16.msra.mxu0 0
  %4302 = vmatpush.bf16.msra.mxu0 0
  %4303 = vmatpush.bf16.msra.mxu0 0
  %4304 = vmatpush.bf16.msra.mxu0 0
  %4305 = vmatpush.bf16.msra.mxu0 0
  %4306 = vmatpush.bf16.msra.mxu0 0
  %4307 = vmatpush.bf16.msra.mxu0 %v4283
  %4308 = vmatpush.bf16.msra.mxu0 %v4282
  %4309 = vmatmul.bf16.gmra.mxu0 %v4287
  %v4310 = vpop.f32.mrf.mxu0
  %v4311 = vadd.f32 %v4273, %v4310
  %v4312 = vpop.f32.mrf.mxu0
  %v4313 = vadd.f32 %v4273, %v4312
  %4314 = vmatmul.bf16.gmra.mxu0 %v4290
  %v4315 = vpop.f32.mrf.mxu0
  %v4316 = vadd.f32 %v4273, %v4315
  %v4317 = vpop.f32.mrf.mxu0
  %v4318 = vadd.f32 %v4273, %v4317
  %4319 = vmatmul.bf16.gmra.mxu0 %v4293
  %v4320 = vpop.f32.mrf.mxu0
  %v4321 = vadd.f32 %v4273, %v4320
  %v4322 = vpop.f32.mrf.mxu0
  %v4323 = vadd.f32 %v4273, %v4322
  %4324 = vmatmul.bf16.gmra.mxu0 %v4296
  %v4325 = vpop.f32.mrf.mxu0
  %v4326 = vadd.f32 %v4273, %v4325
  %v4327 = vpop.f32.mrf.mxu0
  %v4328 = vadd.f32 %v4273, %v4327
  %4329 = vmatmul.bf16.gmra.mxu0 %v4299
  %v4330 = vpop.f32.mrf.mxu0
  %v4331 = vadd.f32 %v4273, %v4330
  %v4332 = vpop.f32.mrf.mxu0
  %v4333 = vadd.f32 %v4273, %v4332
  %4334 = vdwg.mxu0
  %v4335 = vsel %vm107, %v4311, 0.0
  %4336 = vadd.xlane.f32.xlu0 %v4335
  %v4337 = vpop.xlane.xlu0 %4336
  %v4338 = vsel %vm107, %v4313, 0.0
  %4339 = vadd.xlane.f32.xlu0 %v4338
  %v4340 = vpop.xlane.xlu0 %4339
  %v4341 = vsel %vm107, %v4316, 0.0
  %4342 = vadd.xlane.f32.xlu0 %v4341
  %v4343 = vpop.xlane.xlu0 %4342
  %v4344 = vsel %vm107, %v4318, 0.0
  %4345 = vadd.xlane.f32.xlu0 %v4344
  %v4346 = vpop.xlane.xlu0 %4345
  %v4347 = vsel %vm107, %v4321, 0.0
  %4348 = vadd.xlane.f32.xlu0 %v4347
  %v4349 = vpop.xlane.xlu0 %4348
  %v4350 = vsel %vm107, %v4323, 0.0
  %4351 = vadd.xlane.f32.xlu0 %v4350
  %v4352 = vpop.xlane.xlu0 %4351
  %v4353 = vsel %vm107, %v4326, 0.0
  %4354 = vadd.xlane.f32.xlu0 %v4353
  %v4355 = vpop.xlane.xlu0 %4354
  %v4356 = vsel %vm107, %v4328, 0.0
  %4357 = vadd.xlane.f32.xlu0 %v4356
  %v4358 = vpop.xlane.xlu0 %4357
  %v4359 = vsel %vm107, %v4331, 0.0
  %4360 = vadd.xlane.f32.xlu0 %v4359
  %v4361 = vpop.xlane.xlu0 %4360
  %v4362 = vsel %vm107, %v4333, 0.0
  %4363 = vadd.xlane.f32.xlu0 %v4362
  %v4364 = vpop.xlane.xlu0 %4363
  %v4365 = vmul.f32 %v4337, %v225
  %v4366 = vmul.f32 %v4340, %v225
  %v4367 = vmul.f32 %v4343, %v225
  %v4368 = vmul.f32 %v4346, %v225
  %v4369 = vmul.f32 %v4349, %v225
  %v4370 = vmul.f32 %v4352, %v225
  %v4371 = vmul.f32 %v4355, %v225
  %v4372 = vmul.f32 %v4358, %v225
  %v4373 = vmul.f32 %v4361, %v225
  %v4374 = vmul.f32 %v4364, %v225
  %v4375 = vsub.f32 %v4311, %v4365
  %v4376 = vsub.f32 %v4313, %v4366
  %v4377 = vsub.f32 %v4316, %v4367
  %v4378 = vsub.f32 %v4318, %v4368
  %v4379 = vsub.f32 %v4321, %v4369
  %v4380 = vsub.f32 %v4323, %v4370
  %v4381 = vsub.f32 %v4326, %v4371
  %v4382 = vsub.f32 %v4328, %v4372
  %v4383 = vsub.f32 %v4331, %v4373
  %v4384 = vsub.f32 %v4333, %v4374
  %v4385 = vmul.f32 %v4375, %v4375
  %v4386 = vmul.f32 %v4376, %v4376
  %v4387 = vmul.f32 %v4377, %v4377
  %v4388 = vmul.f32 %v4378, %v4378
  %v4389 = vmul.f32 %v4379, %v4379
  %v4390 = vmul.f32 %v4380, %v4380
  %v4391 = vmul.f32 %v4381, %v4381
  %v4392 = vmul.f32 %v4382, %v4382
  %v4393 = vmul.f32 %v4383, %v4383
  %v4394 = vmul.f32 %v4384, %v4384
  %v4395 = vsel %vm107, %v4385, 0.0
  %4396 = vadd.xlane.f32.xlu0 %v4395
  %v4397 = vpop.xlane.xlu0 %4396
  %v4398 = vsel %vm107, %v4386, 0.0
  %4399 = vadd.xlane.f32.xlu0 %v4398
  %v4400 = vpop.xlane.xlu0 %4399
  %v4401 = vsel %vm107, %v4387, 0.0
  %4402 = vadd.xlane.f32.xlu0 %v4401
  %v4403 = vpop.xlane.xlu0 %4402
  %v4404 = vsel %vm107, %v4388, 0.0
  %4405 = vadd.xlane.f32.xlu0 %v4404
  %v4406 = vpop.xlane.xlu0 %4405
  %v4407 = vsel %vm107, %v4389, 0.0
  %4408 = vadd.xlane.f32.xlu0 %v4407
  %v4409 = vpop.xlane.xlu0 %4408
  %v4410 = vsel %vm107, %v4390, 0.0
  %4411 = vadd.xlane.f32.xlu0 %v4410
  %v4412 = vpop.xlane.xlu0 %4411
  %v4413 = vsel %vm107, %v4391, 0.0
  %4414 = vadd.xlane.f32.xlu0 %v4413
  %v4415 = vpop.xlane.xlu0 %4414
  %v4416 = vsel %vm107, %v4392, 0.0
  %4417 = vadd.xlane.f32.xlu0 %v4416
  %v4418 = vpop.xlane.xlu0 %4417
  %v4419 = vsel %vm107, %v4393, 0.0
  %4420 = vadd.xlane.f32.xlu0 %v4419
  %v4421 = vpop.xlane.xlu0 %4420
  %v4422 = vsel %vm107, %v4394, 0.0
  %4423 = vadd.xlane.f32.xlu0 %v4422
  %v4424 = vpop.xlane.xlu0 %4423
  %v4425 = vmul.f32 %v4397, %v225
  %v4426 = vmul.f32 %v4400, %v225
  %v4427 = vmul.f32 %v4403, %v225
  %v4428 = vmul.f32 %v4406, %v225
  %v4429 = vmul.f32 %v4409, %v225
  %v4430 = vmul.f32 %v4412, %v225
  %v4431 = vmul.f32 %v4415, %v225
  %v4432 = vmul.f32 %v4418, %v225
  %v4433 = vmul.f32 %v4421, %v225
  %v4434 = vmul.f32 %v4424, %v225
  %v4435 = vadd.f32 %v4425, 1e-05
  %v4436 = vadd.f32 %v4426, 1e-05
  %v4437 = vadd.f32 %v4427, 1e-05
  %v4438 = vadd.f32 %v4428, 1e-05
  %v4439 = vadd.f32 %v4429, 1e-05
  %v4440 = vadd.f32 %v4430, 1e-05
  %v4441 = vadd.f32 %v4431, 1e-05
  %v4442 = vadd.f32 %v4432, 1e-05
  %v4443 = vadd.f32 %v4433, 1e-05
  %v4444 = vadd.f32 %v4434, 1e-05
  %v4445 = vrsqrt.pop %v4435
  %v4446 = vmul.f32 %v4445, %v4435
  %v4447 = vmul.f32 %v4446, %v4445
  %v4448 = vmul.f32 0.5, %v4447
  %v4449 = vsub.f32 1.5, %v4448
  %v4450 = vmul.f32 %v4445, %v4449
  %vm4451 = vweird.f32 %v4435
  %vm4452 = vweird.f32 %v4445
  %vm4453 = vmor %vm4451, %vm4452
  %v4454 = vsel %vm4453, %v4445, %v4450
  %v4455 = vrsqrt.pop %v4436
  %v4456 = vmul.f32 %v4455, %v4436
  %v4457 = vmul.f32 %v4456, %v4455
  %v4458 = vmul.f32 0.5, %v4457
  %v4459 = vsub.f32 1.5, %v4458
  %v4460 = vmul.f32 %v4455, %v4459
  %vm4461 = vweird.f32 %v4436
  %vm4462 = vweird.f32 %v4455
  %vm4463 = vmor %vm4461, %vm4462
  %v4464 = vsel %vm4463, %v4455, %v4460
  %v4465 = vrsqrt.pop %v4437
  %v4466 = vmul.f32 %v4465, %v4437
  %v4467 = vmul.f32 %v4466, %v4465
  %v4468 = vmul.f32 0.5, %v4467
  %v4469 = vsub.f32 1.5, %v4468
  %v4470 = vmul.f32 %v4465, %v4469
  %vm4471 = vweird.f32 %v4437
  %vm4472 = vweird.f32 %v4465
  %vm4473 = vmor %vm4471, %vm4472
  %v4474 = vsel %vm4473, %v4465, %v4470
  %v4475 = vrsqrt.pop %v4438
  %v4476 = vmul.f32 %v4475, %v4438
  %v4477 = vmul.f32 %v4476, %v4475
  %v4478 = vmul.f32 0.5, %v4477
  %v4479 = vsub.f32 1.5, %v4478
  %v4480 = vmul.f32 %v4475, %v4479
  %vm4481 = vweird.f32 %v4438
  %vm4482 = vweird.f32 %v4475
  %vm4483 = vmor %vm4481, %vm4482
  %v4484 = vsel %vm4483, %v4475, %v4480
  %v4485 = vrsqrt.pop %v4439
  %v4486 = vmul.f32 %v4485, %v4439
  %v4487 = vmul.f32 %v4486, %v4485
  %v4488 = vmul.f32 0.5, %v4487
  %v4489 = vsub.f32 1.5, %v4488
  %v4490 = vmul.f32 %v4485, %v4489
  %vm4491 = vweird.f32 %v4439
  %vm4492 = vweird.f32 %v4485
  %vm4493 = vmor %vm4491, %vm4492
  %v4494 = vsel %vm4493, %v4485, %v4490
  %v4495 = vrsqrt.pop %v4440
  %v4496 = vmul.f32 %v4495, %v4440
  %v4497 = vmul.f32 %v4496, %v4495
  %v4498 = vmul.f32 0.5, %v4497
  %v4499 = vsub.f32 1.5, %v4498
  %v4500 = vmul.f32 %v4495, %v4499
  %vm4501 = vweird.f32 %v4440
  %vm4502 = vweird.f32 %v4495
  %vm4503 = vmor %vm4501, %vm4502
  %v4504 = vsel %vm4503, %v4495, %v4500
  %v4505 = vrsqrt.pop %v4441
  %v4506 = vmul.f32 %v4505, %v4441
  %v4507 = vmul.f32 %v4506, %v4505
  %v4508 = vmul.f32 0.5, %v4507
  %v4509 = vsub.f32 1.5, %v4508
  %v4510 = vmul.f32 %v4505, %v4509
  %vm4511 = vweird.f32 %v4441
  %vm4512 = vweird.f32 %v4505
  %vm4513 = vmor %vm4511, %vm4512
  %v4514 = vsel %vm4513, %v4505, %v4510
  %v4515 = vrsqrt.pop %v4442
  %v4516 = vmul.f32 %v4515, %v4442
  %v4517 = vmul.f32 %v4516, %v4515
  %v4518 = vmul.f32 0.5, %v4517
  %v4519 = vsub.f32 1.5, %v4518
  %v4520 = vmul.f32 %v4515, %v4519
  %vm4521 = vweird.f32 %v4442
  %vm4522 = vweird.f32 %v4515
  %vm4523 = vmor %vm4521, %vm4522
  %v4524 = vsel %vm4523, %v4515, %v4520
  %v4525 = vrsqrt.pop %v4443
  %v4526 = vmul.f32 %v4525, %v4443
  %v4527 = vmul.f32 %v4526, %v4525
  %v4528 = vmul.f32 0.5, %v4527
  %v4529 = vsub.f32 1.5, %v4528
  %v4530 = vmul.f32 %v4525, %v4529
  %vm4531 = vweird.f32 %v4443
  %vm4532 = vweird.f32 %v4525
  %vm4533 = vmor %vm4531, %vm4532
  %v4534 = vsel %vm4533, %v4525, %v4530
  %v4535 = vrsqrt.pop %v4444
  %v4536 = vmul.f32 %v4535, %v4444
  %v4537 = vmul.f32 %v4536, %v4535
  %v4538 = vmul.f32 0.5, %v4537
  %v4539 = vsub.f32 1.5, %v4538
  %v4540 = vmul.f32 %v4535, %v4539
  %vm4541 = vweird.f32 %v4444
  %vm4542 = vweird.f32 %v4535
  %vm4543 = vmor %vm4541, %vm4542
  %v4544 = vsel %vm4543, %v4535, %v4540
  %v4545 = vmul.f32 %v4375, %v4454
  %v4546 = vmul.f32 %v4376, %v4464
  %v4547 = vmul.f32 %v4377, %v4474
  %v4548 = vmul.f32 %v4378, %v4484
  %v4549 = vmul.f32 %v4379, %v4494
  %v4550 = vmul.f32 %v4380, %v4504
  %v4551 = vmul.f32 %v4381, %v4514
  %v4552 = vmul.f32 %v4382, %v4524
  %v4553 = vmul.f32 %v4383, %v4534
  %v4554 = vmul.f32 %v4384, %v4544
  %v4555 = vld [vmem:[%s7 + $0x26] sm:$0x1]
  %v4556 = vperm.slane %v4555, 0
  %v4557 = vmul.f32 %v4545, %v4556
  %v4558 = vmul.f32 %v4546, %v4556
  %v4559 = vmul.f32 %v4547, %v4556
  %v4560 = vmul.f32 %v4548, %v4556
  %v4561 = vmul.f32 %v4549, %v4556
  %v4562 = vmul.f32 %v4550, %v4556
  %v4563 = vmul.f32 %v4551, %v4556
  %v4564 = vmul.f32 %v4552, %v4556
  %v4565 = vmul.f32 %v4553, %v4556
  %v4566 = vmul.f32 %v4554, %v4556
  %v4567 = vld [vmem:[%s7 + $0x27] sm:$0x1]
  %v4568 = vperm.slane %v4567, 0
  %v4569 = vadd.f32 %v4557, %v4568
  %v4570 = vadd.f32 %v4558, %v4568
  %v4571 = vadd.f32 %v4559, %v4568
  %v4572 = vadd.f32 %v4560, %v4568
  %v4573 = vadd.f32 %v4561, %v4568
  %v4574 = vadd.f32 %v4562, %v4568
  %v4575 = vadd.f32 %v4563, %v4568
  %v4576 = vadd.f32 %v4564, %v4568
  %v4577 = vadd.f32 %v4565, %v4568
  %v4578 = vadd.f32 %v4566, %v4568
  %v4579 = vld [vmem:[%s6 + $0x1ac] sm:$0xf]
  %v4580 = vld [vmem:[%s6 + $0x1b0] sm:$0xf]
  %v4581 = vld [vmem:[%s6 + $0x1b4] sm:$0xf]
  %v4582 = vld [vmem:[%s6 + $0x1b8] sm:$0xf]
  %v4583 = vpack.c.bf16 %v4020, %v4019
  %v4584 = vpack.c.bf16 %v4022, %v4021
  %v4585 = vpack.c.bf16 %v4024, %v4023
  %v4586 = vpack.c.bf16 %v4026, %v4025
  %v4587 = vpack.c.bf16 %v4028, %v4027
  %v4588 = vpack.c.bf16 %v4030, %v4029
  %v4593 = vunpack.c.l.b16 %v4579
  %v4594 = vunpack.c.l.b16 %v4580
  %v4595 = vunpack.c.l.b16 %v4581
  %v4596 = vunpack.c.l.b16 %v4582
  %v4597 = vpack.c.b16 %v4594, %v4593
  %v4598 = vpack.c.b16 %v4596, %v4595
  %v4602 = vsel %vm107, %v4583, 0
  %v4605 = vsel %vm107, %v4584, 0
  %v4608 = vsel %vm107, %v4585, 0
  %v4611 = vsel %vm107, %v4586, 0
  %v4614 = vsel %vm107, %v4587, 0
  %v4617 = vsel %vm107, %v4588, 0
  %4619 = vmatpush.bf16.msra.mxu0 0
  %4620 = vmatpush.bf16.msra.mxu0 0
  %4621 = vmatpush.bf16.msra.mxu0 0
  %4622 = vmatpush.bf16.msra.mxu0 0
  %4623 = vmatpush.bf16.msra.mxu0 0
  %4624 = vmatpush.bf16.msra.mxu0 0
  %4625 = vmatpush.bf16.msra.mxu0 %v4598
  %4626 = vmatpush.bf16.msra.mxu0 %v4597
  %4627 = vmatmul.bf16.gmra.mxu0 %v4602
  %v4628 = vpop.f32.mrf.mxu0
  %v4629 = vadd.f32 0.0, %v4628
  %v4630 = vpop.f32.mrf.mxu0
  %v4631 = vadd.f32 0.0, %v4630
  %4632 = vmatmul.bf16.gmra.mxu0 %v4605
  %v4633 = vpop.f32.mrf.mxu0
  %v4634 = vadd.f32 0.0, %v4633
  %v4635 = vpop.f32.mrf.mxu0
  %v4636 = vadd.f32 0.0, %v4635
  %4637 = vmatmul.bf16.gmra.mxu0 %v4608
  %v4638 = vpop.f32.mrf.mxu0
  %v4639 = vadd.f32 0.0, %v4638
  %v4640 = vpop.f32.mrf.mxu0
  %v4641 = vadd.f32 0.0, %v4640
  %4642 = vmatmul.bf16.gmra.mxu0 %v4611
  %v4643 = vpop.f32.mrf.mxu0
  %v4644 = vadd.f32 0.0, %v4643
  %v4645 = vpop.f32.mrf.mxu0
  %v4646 = vadd.f32 0.0, %v4645
  %4647 = vmatmul.bf16.gmra.mxu0 %v4614
  %v4648 = vpop.f32.mrf.mxu0
  %v4649 = vadd.f32 0.0, %v4648
  %v4650 = vpop.f32.mrf.mxu0
  %v4651 = vadd.f32 0.0, %v4650
  %4652 = vmatmul.bf16.gmra.mxu0 %v4617
  %v4653 = vpop.f32.mrf.mxu0
  %v4654 = vadd.f32 0.0, %v4653
  %v4655 = vpop.f32.mrf.mxu0
  %v4656 = vadd.f32 0.0, %v4655
  %4657 = vdwg.mxu0
  %v4658 = vld [vmem:[%s6 + $0x1bc] sm:$0xf]
  %v4659 = vld [vmem:[%s6 + $0x1c0] sm:$0xf]
  %v4660 = vld [vmem:[%s6 + $0x1c4] sm:$0xf]
  %v4661 = vld [vmem:[%s6 + $0x1c8] sm:$0xf]
  %v4662 = vpack.c.bf16 %v4570, %v4569
  %v4663 = vpack.c.bf16 %v4572, %v4571
  %v4664 = vpack.c.bf16 %v4574, %v4573
  %v4665 = vpack.c.bf16 %v4576, %v4575
  %v4666 = vpack.c.bf16 %v4578, %v4577
  %v4671 = vunpack.c.l.b16 %v4658
  %v4672 = vunpack.c.l.b16 %v4659
  %v4673 = vunpack.c.l.b16 %v4660
  %v4674 = vunpack.c.l.b16 %v4661
  %v4675 = vpack.c.b16 %v4672, %v4671
  %v4676 = vpack.c.b16 %v4674, %v4673
  %v4680 = vsel %vm107, %v4662, 0
  %v4683 = vsel %vm107, %v4663, 0
  %v4686 = vsel %vm107, %v4664, 0
  %v4689 = vsel %vm107, %v4665, 0
  %v4692 = vsel %vm107, %v4666, 0
  %4694 = vmatpush.bf16.msra.mxu0 0
  %4695 = vmatpush.bf16.msra.mxu0 0
  %4696 = vmatpush.bf16.msra.mxu0 0
  %4697 = vmatpush.bf16.msra.mxu0 0
  %4698 = vmatpush.bf16.msra.mxu0 0
  %4699 = vmatpush.bf16.msra.mxu0 0
  %4700 = vmatpush.bf16.msra.mxu0 %v4676
  %4701 = vmatpush.bf16.msra.mxu0 %v4675
  %4702 = vmatmul.bf16.gmra.mxu0 %v4680
  %v4703 = vpop.f32.mrf.mxu0
  %v4704 = vadd.f32 0.0, %v4703
  %v4705 = vpop.f32.mrf.mxu0
  %v4706 = vadd.f32 0.0, %v4705
  %4707 = vmatmul.bf16.gmra.mxu0 %v4683
  %v4708 = vpop.f32.mrf.mxu0
  %v4709 = vadd.f32 0.0, %v4708
  %v4710 = vpop.f32.mrf.mxu0
  %v4711 = vadd.f32 0.0, %v4710
  %4712 = vmatmul.bf16.gmra.mxu0 %v4686
  %v4713 = vpop.f32.mrf.mxu0
  %v4714 = vadd.f32 0.0, %v4713
  %v4715 = vpop.f32.mrf.mxu0
  %v4716 = vadd.f32 0.0, %v4715
  %4717 = vmatmul.bf16.gmra.mxu0 %v4689
  %v4718 = vpop.f32.mrf.mxu0
  %v4719 = vadd.f32 0.0, %v4718
  %v4720 = vpop.f32.mrf.mxu0
  %v4721 = vadd.f32 0.0, %v4720
  %4722 = vmatmul.bf16.gmra.mxu0 %v4692
  %v4723 = vpop.f32.mrf.mxu0
  %v4724 = vadd.f32 0.0, %v4723
  %v4725 = vpop.f32.mrf.mxu0
  %v4726 = vadd.f32 0.0, %v4725
  %4727 = vdwg.mxu0
  %v4728 = vld [vmem:[%s6 + $0x19c] sm:$0xf]
  %v4729 = vld [vmem:[%s6 + $0x1a0] sm:$0xf]
  %v4730 = vld [vmem:[%s6 + $0x1a4] sm:$0xf]
  %v4731 = vld [vmem:[%s6 + $0x1a8] sm:$0xf]
  %v4732 = vld [vmem:[%s7 + $0x28] sm:$0x1]
  %v4733 = vperm.slane %v4732, 0
  %v4738 = vunpack.c.l.b16 %v4728
  %v4739 = vunpack.c.l.b16 %v4729
  %v4740 = vunpack.c.l.b16 %v4730
  %v4741 = vunpack.c.l.b16 %v4731
  %v4742 = vpack.c.b16 %v4739, %v4738
  %v4743 = vpack.c.b16 %v4741, %v4740
  %4746 = vmatpush.bf16.msra.mxu0 0
  %4747 = vmatpush.bf16.msra.mxu0 0
  %4748 = vmatpush.bf16.msra.mxu0 0
  %4749 = vmatpush.bf16.msra.mxu0 0
  %4750 = vmatpush.bf16.msra.mxu0 0
  %4751 = vmatpush.bf16.msra.mxu0 0
  %4752 = vmatpush.bf16.msra.mxu0 %v4743
  %4753 = vmatpush.bf16.msra.mxu0 %v4742
  %4754 = vmatmul.bf16.gmra.mxu0 %v3359
  %v4755 = vpop.f32.mrf.mxu0
  %v4756 = vadd.f32 %v4733, %v4755
  %v4757 = vpop.f32.mrf.mxu0
  %v4758 = vadd.f32 %v4733, %v4757
  %4759 = vmatmul.bf16.gmra.mxu0 %v3362
  %v4760 = vpop.f32.mrf.mxu0
  %v4761 = vadd.f32 %v4733, %v4760
  %v4762 = vpop.f32.mrf.mxu0
  %v4763 = vadd.f32 %v4733, %v4762
  %4764 = vmatmul.bf16.gmra.mxu0 %v3365
  %v4765 = vpop.f32.mrf.mxu0
  %v4766 = vadd.f32 %v4733, %v4765
  %v4767 = vpop.f32.mrf.mxu0
  %v4768 = vadd.f32 %v4733, %v4767
  %4769 = vdwg.mxu0
  %v4770 = vpack.c.bf16 %v4631, %v4629
  %v4771 = vpack.c.bf16 %v4636, %v4634
  %v4772 = vpack.c.bf16 %v4641, %v4639
  %v4773 = vpack.c.bf16 %v4646, %v4644
  %v4774 = vpack.c.bf16 %v4651, %v4649
  %v4775 = vpack.c.bf16 %v4656, %v4654
  %v4776 = vpack.c.bf16 %v4706, %v4704
  %v4777 = vpack.c.bf16 %v4711, %v4709
  %v4778 = vpack.c.bf16 %v4716, %v4714
  %v4779 = vpack.c.bf16 %v4721, %v4719
  %v4780 = vpack.c.bf16 %v4726, %v4724
  %4781 = vmatpush.bf16.msra.mxu0 %v4777
  %4782 = vmatpush.bf16.msra.mxu0 %v4776
  %4783 = vmatpush.bf16.msra.mxu0 %v4775
  %4784 = vmatpush.bf16.msra.mxu0 %v4774
  %4785 = vmatpush.bf16.msra.mxu0 %v4773
  %4786 = vmatpush.bf16.msra.mxu0 %v4772
  %4787 = vmatpush.bf16.msra.mxu0 %v4771
  %4788 = vmatpush.bf16.msra.mxu0 %v4770
  %4789 = vmatmul.bf16.gmra.mxu0 %v2970
  %v4790 = vpop.f32.mrf.mxu0
  %v4791 = vadd.f32 0.0, %v4790
  %v4792 = vpop.f32.mrf.mxu0
  %v4793 = vadd.f32 0.0, %v4792
  %4794 = vmatmul.bf16.gmra.mxu0 %v2972
  %v4795 = vpop.f32.mrf.mxu0
  %v4796 = vadd.f32 0.0, %v4795
  %v4797 = vpop.f32.mrf.mxu0
  %v4798 = vadd.f32 0.0, %v4797
  %4799 = vmatmul.bf16.gmra.mxu0 %v2974
  %v4800 = vpop.f32.mrf.mxu0
  %v4801 = vadd.f32 0.0, %v4800
  %v4802 = vpop.f32.mrf.mxu0
  %v4803 = vadd.f32 0.0, %v4802
  %4804 = vdwg.mxu0
  %4805 = vmatpush.bf16.msra.mxu0 0
  %4806 = vmatpush.bf16.msra.mxu0 0
  %4807 = vmatpush.bf16.msra.mxu0 0
  %4808 = vmatpush.bf16.msra.mxu0 0
  %4809 = vmatpush.bf16.msra.mxu0 0
  %4810 = vmatpush.bf16.msra.mxu0 %v4780
  %4811 = vmatpush.bf16.msra.mxu0 %v4779
  %4812 = vmatpush.bf16.msra.mxu0 %v4778
  %4813 = vmatmul.bf16.gmra.mxu0 %v2981
  %v4814 = vpop.f32.mrf.mxu0
  %v4815 = vadd.f32 %v4791, %v4814
  %v4816 = vpop.f32.mrf.mxu0
  %v4817 = vadd.f32 %v4793, %v4816
  %4818 = vmatmul.bf16.gmra.mxu0 %v2984
  %v4819 = vpop.f32.mrf.mxu0
  %v4820 = vadd.f32 %v4796, %v4819
  %v4821 = vpop.f32.mrf.mxu0
  %v4822 = vadd.f32 %v4798, %v4821
  %4823 = vmatmul.bf16.gmra.mxu0 %v2987
  %v4824 = vpop.f32.mrf.mxu0
  %v4825 = vadd.f32 %v4801, %v4824
  %v4826 = vpop.f32.mrf.mxu0
  %v4827 = vadd.f32 %v4803, %v4826
  %4828 = vdwg.mxu0
  %v4829 = vadd.f32 %v4756, %v4815
  %v4830 = vadd.f32 %v4758, %v4817
  %v4831 = vadd.f32 %v4761, %v4820
  %v4832 = vadd.f32 %v4763, %v4822
  %v4833 = vadd.f32 %v4766, %v4825
  %v4834 = vadd.f32 %v4768, %v4827
  %v4835 = vmax.f32 %v4829, 0.0
  %v4836 = vmax.f32 %v4830, 0.0
  %v4837 = vmax.f32 %v4831, 0.0
  %v4838 = vmax.f32 %v4832, 0.0
  %v4839 = vmax.f32 %v4833, 0.0
  %v4840 = vmax.f32 %v4834, 0.0
  %v4841 = vld [vmem:[%s6 + $0x1cc] sm:$0xf]
  %v4842 = vld [vmem:[%s6 + $0x1d0] sm:$0xf]
  %v4843 = vld [vmem:[%s6 + $0x1d4] sm:$0xf]
  %v4844 = vld [vmem:[%s6 + $0x1d8] sm:$0xf]
  %v4845 = vpack.c.bf16 %v4836, %v4835
  %v4846 = vpack.c.bf16 %v4838, %v4837
  %v4847 = vpack.c.bf16 %v4840, %v4839
  %v4848 = vld [vmem:[%s7 + $0x29] sm:$0x1]
  %v4849 = vperm.slane %v4848, 0
  %v4854 = vunpack.c.l.b16 %v4841
  %v4855 = vunpack.c.l.b16 %v4842
  %v4856 = vunpack.c.l.b16 %v4843
  %v4857 = vunpack.c.l.b16 %v4844
  %v4858 = vpack.c.b16 %v4855, %v4854
  %v4859 = vpack.c.b16 %v4857, %v4856
  %v4863 = vsel %vm107, %v4845, 0
  %v4866 = vsel %vm107, %v4846, 0
  %v4869 = vsel %vm107, %v4847, 0
  %4871 = vmatpush.bf16.msra.mxu0 0
  %4872 = vmatpush.bf16.msra.mxu0 0
  %4873 = vmatpush.bf16.msra.mxu0 0
  %4874 = vmatpush.bf16.msra.mxu0 0
  %4875 = vmatpush.bf16.msra.mxu0 0
  %4876 = vmatpush.bf16.msra.mxu0 0
  %4877 = vmatpush.bf16.msra.mxu0 %v4859
  %4878 = vmatpush.bf16.msra.mxu0 %v4858
  %4879 = vmatmul.bf16.gmra.mxu0 %v4863
  %v4880 = vpop.f32.mrf.mxu0
  %v4881 = vadd.f32 %v4849, %v4880
  %v4882 = vpop.f32.mrf.mxu0
  %v4883 = vadd.f32 %v4849, %v4882
  %4884 = vmatmul.bf16.gmra.mxu0 %v4866
  %v4885 = vpop.f32.mrf.mxu0
  %v4886 = vadd.f32 %v4849, %v4885
  %v4887 = vpop.f32.mrf.mxu0
  %v4888 = vadd.f32 %v4849, %v4887
  %4889 = vmatmul.bf16.gmra.mxu0 %v4869
  %v4890 = vpop.f32.mrf.mxu0
  %v4891 = vadd.f32 %v4849, %v4890
  %v4892 = vpop.f32.mrf.mxu0
  %v4893 = vadd.f32 %v4849, %v4892
  %4894 = vdwg.mxu0
  %v4895 = vmax.f32 %v4881, 0.0
  %v4896 = vmax.f32 %v4883, 0.0
  %v4897 = vmax.f32 %v4886, 0.0
  %v4898 = vmax.f32 %v4888, 0.0
  %v4899 = vmax.f32 %v4891, 0.0
  %v4900 = vmax.f32 %v4893, 0.0
  %v4901 = vld [vmem:[%s6 + $0x1dc] sm:$0xf]
  %v4902 = vld [vmem:[%s6 + $0x1e0] sm:$0xf]
  %v4903 = vld [vmem:[%s6 + $0x1e4] sm:$0xf]
  %v4904 = vld [vmem:[%s6 + $0x1e8] sm:$0xf]
  %v4905 = vpack.c.bf16 %v4896, %v4895
  %v4906 = vpack.c.bf16 %v4898, %v4897
  %v4907 = vpack.c.bf16 %v4900, %v4899
  %v4908 = vld [vmem:[%s7 + $0x2a] sm:$0x1]
  %v4909 = vperm.slane %v4908, 0
  %v4914 = vunpack.c.l.b16 %v4901
  %v4915 = vunpack.c.l.b16 %v4902
  %v4916 = vunpack.c.l.b16 %v4903
  %v4917 = vunpack.c.l.b16 %v4904
  %v4918 = vpack.c.b16 %v4915, %v4914
  %v4919 = vpack.c.b16 %v4917, %v4916
  %v4923 = vsel %vm107, %v4905, 0
  %v4926 = vsel %vm107, %v4906, 0
  %v4929 = vsel %vm107, %v4907, 0
  %4931 = vmatpush.bf16.msra.mxu0 0
  %4932 = vmatpush.bf16.msra.mxu0 0
  %4933 = vmatpush.bf16.msra.mxu0 0
  %4934 = vmatpush.bf16.msra.mxu0 0
  %4935 = vmatpush.bf16.msra.mxu0 0
  %4936 = vmatpush.bf16.msra.mxu0 0
  %4937 = vmatpush.bf16.msra.mxu0 %v4919
  %4938 = vmatpush.bf16.msra.mxu0 %v4918
  %4939 = vmatmul.bf16.gmra.mxu0 %v4923
  %v4940 = vpop.f32.mrf.mxu0
  %v4941 = vadd.f32 %v4909, %v4940
  %v4942 = vpop.f32.mrf.mxu0
  %v4943 = vadd.f32 %v4909, %v4942
  %4944 = vmatmul.bf16.gmra.mxu0 %v4926
  %v4945 = vpop.f32.mrf.mxu0
  %v4946 = vadd.f32 %v4909, %v4945
  %v4947 = vpop.f32.mrf.mxu0
  %v4948 = vadd.f32 %v4909, %v4947
  %4949 = vmatmul.bf16.gmra.mxu0 %v4929
  %v4950 = vpop.f32.mrf.mxu0
  %v4951 = vadd.f32 %v4909, %v4950
  %v4952 = vpop.f32.mrf.mxu0
  %v4953 = vadd.f32 %v4909, %v4952
  %4954 = vdwg.mxu0
  %v4955 = vsel %vm107, %v4941, 0.0
  %4956 = vadd.xlane.f32.xlu0 %v4955
  %v4957 = vpop.xlane.xlu0 %4956
  %v4958 = vsel %vm107, %v4943, 0.0
  %4959 = vadd.xlane.f32.xlu0 %v4958
  %v4960 = vpop.xlane.xlu0 %4959
  %v4961 = vsel %vm107, %v4946, 0.0
  %4962 = vadd.xlane.f32.xlu0 %v4961
  %v4963 = vpop.xlane.xlu0 %4962
  %v4964 = vsel %vm107, %v4948, 0.0
  %4965 = vadd.xlane.f32.xlu0 %v4964
  %v4966 = vpop.xlane.xlu0 %4965
  %v4967 = vsel %vm107, %v4951, 0.0
  %4968 = vadd.xlane.f32.xlu0 %v4967
  %v4969 = vpop.xlane.xlu0 %4968
  %v4970 = vsel %vm107, %v4953, 0.0
  %4971 = vadd.xlane.f32.xlu0 %v4970
  %v4972 = vpop.xlane.xlu0 %4971
  %v4973 = vmul.f32 %v4957, %v225
  %v4974 = vmul.f32 %v4960, %v225
  %v4975 = vmul.f32 %v4963, %v225
  %v4976 = vmul.f32 %v4966, %v225
  %v4977 = vmul.f32 %v4969, %v225
  %v4978 = vmul.f32 %v4972, %v225
  %v4979 = vsub.f32 %v4941, %v4973
  %v4980 = vsub.f32 %v4943, %v4974
  %v4981 = vsub.f32 %v4946, %v4975
  %v4982 = vsub.f32 %v4948, %v4976
  %v4983 = vsub.f32 %v4951, %v4977
  %v4984 = vsub.f32 %v4953, %v4978
  %v4985 = vmul.f32 %v4979, %v4979
  %v4986 = vmul.f32 %v4980, %v4980
  %v4987 = vmul.f32 %v4981, %v4981
  %v4988 = vmul.f32 %v4982, %v4982
  %v4989 = vmul.f32 %v4983, %v4983
  %v4990 = vmul.f32 %v4984, %v4984
  %v4991 = vsel %vm107, %v4985, 0.0
  %4992 = vadd.xlane.f32.xlu0 %v4991
  %v4993 = vpop.xlane.xlu0 %4992
  %v4994 = vsel %vm107, %v4986, 0.0
  %4995 = vadd.xlane.f32.xlu0 %v4994
  %v4996 = vpop.xlane.xlu0 %4995
  %v4997 = vsel %vm107, %v4987, 0.0
  %4998 = vadd.xlane.f32.xlu0 %v4997
  %v4999 = vpop.xlane.xlu0 %4998
  %v5000 = vsel %vm107, %v4988, 0.0
  %5001 = vadd.xlane.f32.xlu0 %v5000
  %v5002 = vpop.xlane.xlu0 %5001
  %v5003 = vsel %vm107, %v4989, 0.0
  %5004 = vadd.xlane.f32.xlu0 %v5003
  %v5005 = vpop.xlane.xlu0 %5004
  %v5006 = vsel %vm107, %v4990, 0.0
  %5007 = vadd.xlane.f32.xlu0 %v5006
  %v5008 = vpop.xlane.xlu0 %5007
  %v5009 = vmul.f32 %v4993, %v225
  %v5010 = vmul.f32 %v4996, %v225
  %v5011 = vmul.f32 %v4999, %v225
  %v5012 = vmul.f32 %v5002, %v225
  %v5013 = vmul.f32 %v5005, %v225
  %v5014 = vmul.f32 %v5008, %v225
  %v5015 = vadd.f32 %v5009, 1e-05
  %v5016 = vadd.f32 %v5010, 1e-05
  %v5017 = vadd.f32 %v5011, 1e-05
  %v5018 = vadd.f32 %v5012, 1e-05
  %v5019 = vadd.f32 %v5013, 1e-05
  %v5020 = vadd.f32 %v5014, 1e-05
  %v5021 = vrsqrt.pop %v5015
  %v5022 = vmul.f32 %v5021, %v5015
  %v5023 = vmul.f32 %v5022, %v5021
  %v5024 = vmul.f32 0.5, %v5023
  %v5025 = vsub.f32 1.5, %v5024
  %v5026 = vmul.f32 %v5021, %v5025
  %vm5027 = vweird.f32 %v5015
  %vm5028 = vweird.f32 %v5021
  %vm5029 = vmor %vm5027, %vm5028
  %v5030 = vsel %vm5029, %v5021, %v5026
  %v5031 = vrsqrt.pop %v5016
  %v5032 = vmul.f32 %v5031, %v5016
  %v5033 = vmul.f32 %v5032, %v5031
  %v5034 = vmul.f32 0.5, %v5033
  %v5035 = vsub.f32 1.5, %v5034
  %v5036 = vmul.f32 %v5031, %v5035
  %vm5037 = vweird.f32 %v5016
  %vm5038 = vweird.f32 %v5031
  %vm5039 = vmor %vm5037, %vm5038
  %v5040 = vsel %vm5039, %v5031, %v5036
  %v5041 = vrsqrt.pop %v5017
  %v5042 = vmul.f32 %v5041, %v5017
  %v5043 = vmul.f32 %v5042, %v5041
  %v5044 = vmul.f32 0.5, %v5043
  %v5045 = vsub.f32 1.5, %v5044
  %v5046 = vmul.f32 %v5041, %v5045
  %vm5047 = vweird.f32 %v5017
  %vm5048 = vweird.f32 %v5041
  %vm5049 = vmor %vm5047, %vm5048
  %v5050 = vsel %vm5049, %v5041, %v5046
  %v5051 = vrsqrt.pop %v5018
  %v5052 = vmul.f32 %v5051, %v5018
  %v5053 = vmul.f32 %v5052, %v5051
  %v5054 = vmul.f32 0.5, %v5053
  %v5055 = vsub.f32 1.5, %v5054
  %v5056 = vmul.f32 %v5051, %v5055
  %vm5057 = vweird.f32 %v5018
  %vm5058 = vweird.f32 %v5051
  %vm5059 = vmor %vm5057, %vm5058
  %v5060 = vsel %vm5059, %v5051, %v5056
  %v5061 = vrsqrt.pop %v5019
  %v5062 = vmul.f32 %v5061, %v5019
  %v5063 = vmul.f32 %v5062, %v5061
  %v5064 = vmul.f32 0.5, %v5063
  %v5065 = vsub.f32 1.5, %v5064
  %v5066 = vmul.f32 %v5061, %v5065
  %vm5067 = vweird.f32 %v5019
  %vm5068 = vweird.f32 %v5061
  %vm5069 = vmor %vm5067, %vm5068
  %v5070 = vsel %vm5069, %v5061, %v5066
  %v5071 = vrsqrt.pop %v5020
  %v5072 = vmul.f32 %v5071, %v5020
  %v5073 = vmul.f32 %v5072, %v5071
  %v5074 = vmul.f32 0.5, %v5073
  %v5075 = vsub.f32 1.5, %v5074
  %v5076 = vmul.f32 %v5071, %v5075
  %vm5077 = vweird.f32 %v5020
  %vm5078 = vweird.f32 %v5071
  %vm5079 = vmor %vm5077, %vm5078
  %v5080 = vsel %vm5079, %v5071, %v5076
  %v5081 = vmul.f32 %v4979, %v5030
  %v5082 = vmul.f32 %v4980, %v5040
  %v5083 = vmul.f32 %v4981, %v5050
  %v5084 = vmul.f32 %v4982, %v5060
  %v5085 = vmul.f32 %v4983, %v5070
  %v5086 = vmul.f32 %v4984, %v5080
  %v5087 = vld [vmem:[%s7 + $0x2b] sm:$0x1]
  %v5088 = vperm.slane %v5087, 0
  %v5089 = vmul.f32 %v5081, %v5088
  %v5090 = vmul.f32 %v5082, %v5088
  %v5091 = vmul.f32 %v5083, %v5088
  %v5092 = vmul.f32 %v5084, %v5088
  %v5093 = vmul.f32 %v5085, %v5088
  %v5094 = vmul.f32 %v5086, %v5088
  %v5095 = vld [vmem:[%s7 + $0x2c] sm:$0x1]
  %v5096 = vperm.slane %v5095, 0
  %v5097 = vadd.f32 %v5089, %v5096
  %v5098 = vadd.f32 %v5090, %v5096
  %v5099 = vadd.f32 %v5091, %v5096
  %v5100 = vadd.f32 %v5092, %v5096
  %v5101 = vadd.f32 %v5093, %v5096
  %v5102 = vadd.f32 %v5094, %v5096
  %v5103 = vadd.f32 %v5097, %v3333
  %v5104 = vadd.f32 %v5098, %v3334
  %v5105 = vadd.f32 %v5099, %v3335
  %v5106 = vadd.f32 %v5100, %v3336
  %v5107 = vadd.f32 %v5101, %v3337
  %v5108 = vadd.f32 %v5102, %v3338
  %v5109 = vld [vmem:[%s6 + $0x1ec] sm:$0xf]
  %v5110 = vld [vmem:[%s6 + $0x1f0] sm:$0xf]
  %v5111 = vld [vmem:[%s6 + $0x1f4] sm:$0xf]
  %v5112 = vld [vmem:[%s6 + $0x1f8] sm:$0xf]
  %v5113 = vpack.c.bf16 %v5104, %v5103
  %v5114 = vpack.c.bf16 %v5106, %v5105
  %v5115 = vpack.c.bf16 %v5108, %v5107
  %v5116 = vld [vmem:[%s7 + $0x2d] sm:$0x1]
  %v5117 = vperm.slane %v5116, 0
  %v5122 = vunpack.c.l.b16 %v5109
  %v5123 = vunpack.c.l.b16 %v5110
  %v5124 = vunpack.c.l.b16 %v5111
  %v5125 = vunpack.c.l.b16 %v5112
  %v5126 = vpack.c.b16 %v5123, %v5122
  %v5127 = vpack.c.b16 %v5125, %v5124
  %v5131 = vsel %vm107, %v5113, 0
  %v5134 = vsel %vm107, %v5114, 0
  %v5137 = vsel %vm107, %v5115, 0
  %5139 = vmatpush.bf16.msra.mxu0 0
  %5140 = vmatpush.bf16.msra.mxu0 0
  %5141 = vmatpush.bf16.msra.mxu0 0
  %5142 = vmatpush.bf16.msra.mxu0 0
  %5143 = vmatpush.bf16.msra.mxu0 0
  %5144 = vmatpush.bf16.msra.mxu0 0
  %5145 = vmatpush.bf16.msra.mxu0 %v5127
  %5146 = vmatpush.bf16.msra.mxu0 %v5126
  %5147 = vmatmul.bf16.gmra.mxu0 %v5131
  %v5148 = vpop.f32.mrf.mxu0
  %v5149 = vadd.f32 %v5117, %v5148
  %v5150 = vpop.f32.mrf.mxu0
  %v5151 = vadd.f32 %v5117, %v5150
  %5152 = vmatmul.bf16.gmra.mxu0 %v5134
  %v5153 = vpop.f32.mrf.mxu0
  %v5154 = vadd.f32 %v5117, %v5153
  %v5155 = vpop.f32.mrf.mxu0
  %v5156 = vadd.f32 %v5117, %v5155
  %5157 = vmatmul.bf16.gmra.mxu0 %v5137
  %v5158 = vpop.f32.mrf.mxu0
  %v5159 = vadd.f32 %v5117, %v5158
  %v5160 = vpop.f32.mrf.mxu0
  %v5161 = vadd.f32 %v5117, %v5160
  %5162 = vdwg.mxu0
  %v5163 = vmax.f32 %v5149, 0.0
  %v5164 = vmax.f32 %v5151, 0.0
  %v5165 = vmax.f32 %v5154, 0.0
  %v5166 = vmax.f32 %v5156, 0.0
  %v5167 = vmax.f32 %v5159, 0.0
  %v5168 = vmax.f32 %v5161, 0.0
  %v5169 = vld [vmem:[%s6 + $0x1fc] sm:$0xf]
  %v5170 = vld [vmem:[%s6 + $0x200] sm:$0xf]
  %v5171 = vld [vmem:[%s6 + $0x204] sm:$0xf]
  %v5172 = vld [vmem:[%s6 + $0x208] sm:$0xf]
  %v5173 = vpack.c.bf16 %v5164, %v5163
  %v5174 = vpack.c.bf16 %v5166, %v5165
  %v5175 = vpack.c.bf16 %v5168, %v5167
  %v5176 = vld [vmem:[%s7 + $0x2e] sm:$0x1]
  %v5177 = vperm.slane %v5176, 0
  %v5182 = vunpack.c.l.b16 %v5169
  %v5183 = vunpack.c.l.b16 %v5170
  %v5184 = vunpack.c.l.b16 %v5171
  %v5185 = vunpack.c.l.b16 %v5172
  %v5186 = vpack.c.b16 %v5183, %v5182
  %v5187 = vpack.c.b16 %v5185, %v5184
  %v5191 = vsel %vm107, %v5173, 0
  %v5194 = vsel %vm107, %v5174, 0
  %v5197 = vsel %vm107, %v5175, 0
  %5199 = vmatpush.bf16.msra.mxu0 0
  %5200 = vmatpush.bf16.msra.mxu0 0
  %5201 = vmatpush.bf16.msra.mxu0 0
  %5202 = vmatpush.bf16.msra.mxu0 0
  %5203 = vmatpush.bf16.msra.mxu0 0
  %5204 = vmatpush.bf16.msra.mxu0 0
  %5205 = vmatpush.bf16.msra.mxu0 %v5187
  %5206 = vmatpush.bf16.msra.mxu0 %v5186
  %5207 = vmatmul.bf16.gmra.mxu0 %v5191
  %v5208 = vpop.f32.mrf.mxu0
  %v5209 = vadd.f32 %v5177, %v5208
  %v5210 = vpop.f32.mrf.mxu0
  %v5211 = vadd.f32 %v5177, %v5210
  %5212 = vmatmul.bf16.gmra.mxu0 %v5194
  %v5213 = vpop.f32.mrf.mxu0
  %v5214 = vadd.f32 %v5177, %v5213
  %v5215 = vpop.f32.mrf.mxu0
  %v5216 = vadd.f32 %v5177, %v5215
  %5217 = vmatmul.bf16.gmra.mxu0 %v5197
  %v5218 = vpop.f32.mrf.mxu0
  %v5219 = vadd.f32 %v5177, %v5218
  %v5220 = vpop.f32.mrf.mxu0
  %v5221 = vadd.f32 %v5177, %v5220
  %5222 = vdwg.mxu0
  %v5223 = vmax.f32 %v5209, 0.0
  %v5224 = vmax.f32 %v5211, 0.0
  %v5225 = vmax.f32 %v5214, 0.0
  %v5226 = vmax.f32 %v5216, 0.0
  %v5227 = vmax.f32 %v5219, 0.0
  %v5228 = vmax.f32 %v5221, 0.0
  %v5229 = vld [vmem:[%s6 + $0x20c] sm:$0xf]
  %v5230 = vld [vmem:[%s6 + $0x210] sm:$0xf]
  %v5231 = vld [vmem:[%s6 + $0x214] sm:$0xf]
  %v5232 = vld [vmem:[%s6 + $0x218] sm:$0xf]
  %v5233 = vpack.c.bf16 %v5224, %v5223
  %v5234 = vpack.c.bf16 %v5226, %v5225
  %v5235 = vpack.c.bf16 %v5228, %v5227
  %v5236 = vld [vmem:[%s7 + $0x2f] sm:$0x1]
  %v5237 = vperm.slane %v5236, 0
  %v5242 = vunpack.c.l.b16 %v5229
  %v5243 = vunpack.c.l.b16 %v5230
  %v5244 = vunpack.c.l.b16 %v5231
  %v5245 = vunpack.c.l.b16 %v5232
  %v5246 = vpack.c.b16 %v5243, %v5242
  %v5247 = vpack.c.b16 %v5245, %v5244
  %v5251 = vsel %vm107, %v5233, 0
  %v5254 = vsel %vm107, %v5234, 0
  %v5257 = vsel %vm107, %v5235, 0
  %5259 = vmatpush.bf16.msra.mxu0 0
  %5260 = vmatpush.bf16.msra.mxu0 0
  %5261 = vmatpush.bf16.msra.mxu0 0
  %5262 = vmatpush.bf16.msra.mxu0 0
  %5263 = vmatpush.bf16.msra.mxu0 0
  %5264 = vmatpush.bf16.msra.mxu0 0
  %5265 = vmatpush.bf16.msra.mxu0 %v5247
  %5266 = vmatpush.bf16.msra.mxu0 %v5246
  %5267 = vmatmul.bf16.gmra.mxu0 %v5251
  %v5268 = vpop.f32.mrf.mxu0
  %v5269 = vadd.f32 %v5237, %v5268
  %v5270 = vpop.f32.mrf.mxu0
  %v5271 = vadd.f32 %v5237, %v5270
  %5272 = vmatmul.bf16.gmra.mxu0 %v5254
  %v5273 = vpop.f32.mrf.mxu0
  %v5274 = vadd.f32 %v5237, %v5273
  %v5275 = vpop.f32.mrf.mxu0
  %v5276 = vadd.f32 %v5237, %v5275
  %5277 = vmatmul.bf16.gmra.mxu0 %v5257
  %v5278 = vpop.f32.mrf.mxu0
  %v5279 = vadd.f32 %v5237, %v5278
  %v5280 = vpop.f32.mrf.mxu0
  %v5281 = vadd.f32 %v5237, %v5280
  %5282 = vdwg.mxu0
  %vm5283 = vcmask 23552
  %5284 = vst.msk [vmem:[%s8] sm:$0xff] %vm5283, %v5269
  %5285 = vst.msk [vmem:[%s8 + $0x8] sm:$0xff] %vm5283, %v5271
  %5286 = vst.msk [vmem:[%s8 + $0x10] sm:$0xff] %vm5283, %v5274
  %5287 = vst.msk [vmem:[%s8 + $0x18] sm:$0xff] %vm5283, %v5276
  %5288 = vst.msk [vmem:[%s8 + $0x20] sm:$0xff] %vm5283, %v5279
  %5289 = vst.msk [vmem:[%s8 + $0x28] sm:$0xff] %vm5283, %v5281
  // Predicated region
  $region34: #{_lambda_.1} parent=0 // pred_check
    _
  $region35: #{_lambda_.1} parent=0 // pred_check_branch
    %5291 = sbr.rel (0) target = $region37
  $region36: #{_lambda_.1} parent=0 // pred_region
    _
  $region37: #{_lambda_.1} parent=0 // pred_fallthru
    _
  // Predicated region
  $region38: #{_lambda_.1} parent=0 // pred_check
    _
  $region39: #{_lambda_.1} parent=0 // pred_check_branch
    %5293 = sbr.rel (0) target = $region41
  $region40: #{_lambda_.1} parent=0 // pred_region
    _
  $region41: #{_lambda_.1} parent=0 // pred_fallthru
    _

</llo_original>
